<compile_context>
chip_gen: v6e
topology: v6e:2x2x1
jax: 0.10.0
libtpu: 0.0.40
codegen_flags: <defaults>
</compile_context>

<pallas_src>
import functools

import jax
import jax.numpy as jnp
from jax.experimental import pallas as pl
from jax.experimental.pallas import tpu as pltpu


def _round_up(x, m):
    return (x + m - 1) // m * m


def _vmem_limit_bytes():
    # Feedback: raise the scoped VMEM limit toward the physical ceiling
    # (128 MiB on v5e/v6e -> ~96 MiB, 64 MiB on v7x -> ~48 MiB).
    try:
        cap = int(pltpu.get_tpu_info().vmem_capacity_bytes)
    except Exception:
        return 32 * 1024 * 1024
    return int(min(100 * 1024 * 1024, cap * 3 // 4))


# ---------------------------------------------------------------------------
# In-kernel helpers (shared by the fused and the single-layer kernels).
# ---------------------------------------------------------------------------
def _fill_col(slab_ref, col_ref, *, cinp, kd, kh, kw, hp, wp, lpad):
    """In-VMEM im2col: col[tap*cinp:(tap+1)*cinp, :] = slab[:, off_tap:off_tap+L]."""
    tap = 0
    for dz in range(kd):
        for dy in range(kh):
            for dx in range(kw):
                off = dz * hp * wp + dy * wp + dx              # static lane offset
                col_ref[pl.ds(tap * cinp, cinp), :] = slab_ref[:, pl.ds(off, lpad)]
                tap += 1


def _norm_act(acc, mask, bias, alpha, *, inv_n, if_norm, if_activation):
    """InstanceNorm3d (affine=False, biased var, eps=1e-5) + PReLU epilogue."""
    if if_norm:
        # Conv bias cancels exactly under the norm, so it is skipped.
        # Centered variance (avoids E[x^2]-mean^2 cancellation); masked stats
        # over valid voxels only, reusing the masked product.
        am = acc * mask
        mean = jnp.sum(am, axis=1, keepdims=True) * inv_n
        d = acc - mean
        var = jnp.sum(d * d * mask, axis=1, keepdims=True) * inv_n
        acc = d * jax.lax.rsqrt(var + 1e-5)
    else:
        acc = acc + bias
    if if_activation:
        acc = jnp.where(acc > 0, acc, alpha * acc)
    return acc


# ---------------------------------------------------------------------------
# Fused two-layer kernel ("same" padding: 2*padding == kSize-1).
# ---------------------------------------------------------------------------
def _conv_block_fused_kernel(x_ref, w1_ref, b1_ref, w2_ref, b2_ref, alpha_ref,
                             mask_ref, o_ref, col_ref, mid_ref, *,
                             cin1p, cmidp, cout, kd, kh, kw, hp, wp, lpad,
                             mid_off, inv_n, norm_flags, act_flags):
    """One sample: (conv -> IN -> PReLU) x2 entirely in VMEM.

    x_ref:     (Cin1p, Ppad1)     bf16  zero-padded layer-1 input slab (flat)
    w1_ref:    (Coutp, kvol*Cin1p) bf16 im2col-ordered layer-1 weights
    w2_ref:    (Coutp, kvol*Cmidp) bf16 im2col-ordered layer-2 weights
    b*_ref:    (Coutp, 1)         f32   conv bias (only used when norm is off)
    alpha_ref: (2,)               f32   PReLU slopes (SMEM)
    mask_ref:  (1, Lpad)          f32   1.0 at valid voxels of the flat grid
    o_ref:     (Cout, Lpad)       f32
    col_ref:   (Kmax, Lpad)       bf16  shared im2col scratch
    mid_ref:   (Cmidp, Ppad2)     bf16  layer-2 padded-input slab (scratch)
    """
    # Zero the mid slab every step (cheap; megacore-safe — no reliance on a
    # particular grid iteration running on this core).
    mid_ref[...] = jnp.zeros_like(mid_ref)

    mask = mask_ref[...]                                      # (1, Lpad) f32
    k1 = kd * kh * kw * cin1p
    k2 = kd * kh * kw * cmidp

    # ---- layer 1: im2col + single K-dense matmul + IN + PReLU ----
    _fill_col(x_ref, col_ref, cinp=cin1p, kd=kd, kh=kh, kw=kw,
              hp=hp, wp=wp, lpad=lpad)
    acc1 = jnp.dot(w1_ref[...], col_ref[pl.ds(0, k1), :],
                   preferred_element_type=jnp.float32)        # (Coutp, Lpad)
    out1 = _norm_act(acc1, mask, b1_ref[...], alpha_ref[0], inv_n=inv_n,
                     if_norm=norm_flags[0], if_activation=act_flags[0])

    # Masked bf16 write straight into layer 2's padded-input slab: valid voxel
    # (d,h,w) lands at flat offset mid_off + d*hp*wp + h*wp + w, every border /
    # wrapped pad position is zero (mask) so no HBM round trip or crop is needed.
    mid_ref[:, pl.ds(mid_off, lpad)] = (out1[:cmidp, :] * mask).astype(mid_ref.dtype)

    # ---- layer 2 ----
    _fill_col(mid_ref, col_ref, cinp=cmidp, kd=kd, kh=kh, kw=kw,
              hp=hp, wp=wp, lpad=lpad)
    acc2 = jnp.dot(w2_ref[...], col_ref[pl.ds(0, k2), :],
                   preferred_element_type=jnp.float32)
    out2 = _norm_act(acc2, mask, b2_ref[...], alpha_ref[1], inv_n=inv_n,
                     if_norm=norm_flags[1], if_activation=act_flags[1])

    o_ref[...] = out2[:cout, :].astype(o_ref.dtype)


# ---------------------------------------------------------------------------
# Single-layer kernel (general padding fallback).
# ---------------------------------------------------------------------------
def _conv_layer_kernel(x_ref, w_ref, b_ref, alpha_ref, mask_ref, o_ref, col_ref, *,
                       cinp, cout, kd, kh, kw, hp, wp, lpad, inv_n,
                       if_norm, if_activation):
    mask = mask_ref[...]
    k = kd * kh * kw * cinp
    _fill_col(x_ref, col_ref, cinp=cinp, kd=kd, kh=kh, kw=kw,
              hp=hp, wp=wp, lpad=lpad)
    acc = jnp.dot(w_ref[...], col_ref[pl.ds(0, k), :],
                  preferred_element_type=jnp.float32)
    out = _norm_act(acc, mask, b_ref[...], alpha_ref[0], inv_n=inv_n,
                    if_norm=if_norm, if_activation=if_activation)
    o_ref[...] = out[:cout, :].astype(o_ref.dtype)


# ---------------------------------------------------------------------------
# Host-side prep helpers.
# ---------------------------------------------------------------------------
def _prep_weight(w, cinp, coutp):
    """(Cout, Cin, kD, kH, kW) -> (Coutp, kvol*Cinp) bf16, tap-major, zero-padded."""
    cout, cin, kd, kh, kw = w.shape
    wt = jnp.transpose(w, (0, 2, 3, 4, 1)).astype(jnp.float32)
    wt = jnp.pad(wt, ((0, coutp - cout), (0, 0), (0, 0), (0, 0), (0, cinp - cin)))
    return wt.reshape(coutp, kd * kh * kw * cinp).astype(jnp.bfloat16)


def _prep_input(x, cinp, p, ppad):
    """NCDHW -> (N, Cinp, Ppad) bf16: channel pad, spatial zero-pad, flatten, tail pad."""
    n, cin, _, _, _ = x.shape
    xp = jnp.pad(x, ((0, 0), (0, cinp - cin), (p, p), (p, p), (p, p)))
    p_in = xp.shape[2] * xp.shape[3] * xp.shape[4]
    xf = xp.reshape(n, cinp, p_in)
    return jnp.pad(xf, ((0, 0), (0, 0), (0, ppad - p_in))).astype(jnp.bfloat16)


def _valid_mask(lpad, l_flat, hp, wp, ho, wo):
    q = jnp.arange(lpad, dtype=jnp.int32)
    h_o = (q % (hp * wp)) // wp
    w_o = q % wp
    return ((q < l_flat) & (h_o < ho) & (w_o < wo)).astype(jnp.float32)[None, :]


# ---------------------------------------------------------------------------
# Wrappers.
# ---------------------------------------------------------------------------
def conv_block_fused(x, params, *, padding, if_norm, if_activation):
    """Both conv layers in one pallas_call ("same" padding: 2*p == k-1)."""
    w1, b1, a1, w2, b2, a2 = params
    N, cin, D, H, W = x.shape
    cout = w1.shape[0]
    kd, kh, kw = w1.shape[2:]
    p = padding
    dp, hp, wp = D + 2 * p, H + 2 * p, W + 2 * p
    do, ho, wo = dp - kd + 1, hp - kh + 1, wp - kw + 1
    assert (do, ho, wo) == (D, H, W)       # "same" conv, both layers share geometry

    cin1p = _round_up(cin, 8)
    cmidp = _round_up(cout, 8)
    coutp = _round_up(cout, 16)            # bf16 sublane tile for the MXU LHS
    kvol = kd * kh * kw
    k1p, k2p = kvol * cin1p, kvol * cmidp

    s_valid = do * ho * wo
    l_flat = do * hp * wp                  # flat (Do, Hp, Wp) output grid
    lpad = _round_up(l_flat, 128)          # lane-dense output tile
    max_off = (kd - 1) * hp * wp + (kh - 1) * wp + (kw - 1)
    p_in = dp * hp * wp
    ppad1 = _round_up(max(p_in, max_off + lpad), 128)
    mid_off = p * hp * wp + p * wp + p     # (p,p,p) corner of layer-2's padded grid
    ppad2 = _round_up(max(p_in, max_off + lpad, mid_off + lpad), 128)

    xf = _prep_input(x, cin1p, p, ppad1)
    w1p = _prep_weight(w1, cin1p, coutp)
    w2p = _prep_weight(w2, cmidp, coutp)
    b1p = jnp.pad(b1.astype(jnp.float32), (0, coutp - cout)).reshape(coutp, 1)
    b2p = jnp.pad(b2.astype(jnp.float32), (0, coutp - cout)).reshape(coutp, 1)
    alphas = jnp.stack([jnp.asarray(a1, jnp.float32).reshape(()),
                        jnp.asarray(a2, jnp.float32).reshape(())])
    mask = _valid_mask(lpad, l_flat, hp, wp, ho, wo)

    kernel = functools.partial(
        _conv_block_fused_kernel,
        cin1p=cin1p, cmidp=cmidp, cout=cout, kd=kd, kh=kh, kw=kw,
        hp=hp, wp=wp, lpad=lpad, mid_off=mid_off, inv_n=1.0 / float(s_valid),
        norm_flags=tuple(if_norm), act_flags=tuple(if_activation))

    cost = pl.CostEstimate(
        flops=int(2 * N * lpad * coutp * (k1p + k2p)),
        transcendentals=0,
        bytes_accessed=int(xf.size * 2 + w1p.size * 2 + w2p.size * 2
                           + mask.size * 4 + N * cout * lpad * 4))

    out = pl.pallas_call(
        kernel,
        out_shape=jax.ShapeDtypeStruct((N, cout, lpad), jnp.float32),
        grid_spec=pltpu.PrefetchScalarGridSpec(
            num_scalar_prefetch=0,
            grid=(N,),
            in_specs=[
                pl.BlockSpec((None, cin1p, ppad1), lambda n: (n, 0, 0)),  # input slab
                pl.BlockSpec((coutp, k1p), lambda n: (0, 0)),             # W1 (im2col)
                pl.BlockSpec((coutp, 1), lambda n: (0, 0)),               # b1
                pl.BlockSpec((coutp, k2p), lambda n: (0, 0)),             # W2 (im2col)
                pl.BlockSpec((coutp, 1), lambda n: (0, 0)),               # b2
                pl.BlockSpec(memory_space=pltpu.MemorySpace.SMEM),        # PReLU alphas
                pl.BlockSpec((1, lpad), lambda n: (0, 0)),                # valid mask
            ],
            out_specs=pl.BlockSpec((None, cout, lpad), lambda n: (n, 0, 0)),
            scratch_shapes=[
                pltpu.VMEM((max(k1p, k2p), lpad), jnp.bfloat16),          # shared im2col
                pltpu.VMEM((cmidp, ppad2), jnp.bfloat16),                 # layer-2 slab
            ]),
        compiler_params=pltpu.CompilerParams(
            dimension_semantics=("parallel",),
            vmem_limit_bytes=_vmem_limit_bytes()),
        cost_estimate=cost,
    )(xf, w1p, b1p, w2p, b2p, alphas, mask)

    # Single crop of the final output only (no inter-layer HBM glue anymore).
    out = out[:, :, :l_flat].reshape(N, cout, do, hp, wp)[:, :, :, :ho, :wo]
    return out


def conv3d_in_prelu(x, w, b, alpha, *, padding, if_norm=True, if_activation=True):
    """One `conv` layer (general padding): Conv3d [+ InstanceNorm3d] [+ PReLU]."""
    N, cin, D, H, W = x.shape
    cout = w.shape[0]
    kd, kh, kw = w.shape[2:]
    p = padding
    dp, hp, wp = D + 2 * p, H + 2 * p, W + 2 * p
    do, ho, wo = dp - kd + 1, hp - kh + 1, wp - kw + 1

    cinp = _round_up(cin, 8)
    coutp = _round_up(cout, 16)
    kvol = kd * kh * kw
    kp = kvol * cinp
    s_valid = do * ho * wo
    l_flat = do * hp * wp
    lpad = _round_up(l_flat, 128)
    max_off = (kd - 1) * hp * wp + (kh - 1) * wp + (kw - 1)
    p_in = dp * hp * wp
    ppad = _round_up(max(p_in, max_off + lpad), 128)

    xf = _prep_input(x, cinp, p, ppad)
    w2d = _prep_weight(w, cinp, coutp)
    bp = jnp.pad(b.astype(jnp.float32), (0, coutp - cout)).reshape(coutp, 1)
    a1d = jnp.asarray(alpha, jnp.float32).reshape(1)
    mask = _valid_mask(lpad, l_flat, hp, wp, ho, wo)

    kernel = functools.partial(
        _conv_layer_kernel, cinp=cinp, cout=cout, kd=kd, kh=kh, kw=kw,
        hp=hp, wp=wp, lpad=lpad, inv_n=1.0 / float(s_valid),
        if_norm=if_norm, if_activation=if_activation)

    out = pl.pallas_call(
        kernel,
        out_shape=jax.ShapeDtypeStruct((N, cout, lpad), jnp.float32),
        grid_spec=pltpu.PrefetchScalarGridSpec(
            num_scalar_prefetch=0,
            grid=(N,),
            in_specs=[
                pl.BlockSpec((None, cinp, ppad), lambda n: (n, 0, 0)),
                pl.BlockSpec((coutp, kp), lambda n: (0, 0)),
                pl.BlockSpec((coutp, 1), lambda n: (0, 0)),
                pl.BlockSpec(memory_space=pltpu.MemorySpace.SMEM),
                pl.BlockSpec((1, lpad), lambda n: (0, 0)),
            ],
            out_specs=pl.BlockSpec((None, cout, lpad), lambda n: (n, 0, 0)),
            scratch_shapes=[pltpu.VMEM((kp, lpad), jnp.bfloat16)]),
        compiler_params=pltpu.CompilerParams(
            dimension_semantics=("parallel",),
            vmem_limit_bytes=_vmem_limit_bytes()),
    )(xf, w2d, bp, a1d, mask)

    out = out[:, :, :l_flat].reshape(N, cout, do, hp, wp)[:, :, :, :ho, :wo]
    return out


def conv_block(x, params, *, padding, if_norm=(True, True),
               if_activation=(True, True)):
    """convBlock.forward: two stacked conv layers (NCDHW throughout)."""
    w1 = params[0]
    kd, kh, kw = w1.shape[2:]
    if (kd == kh == kw) and (2 * padding == kd - 1):
        return conv_block_fused(x, params, padding=padding,
                                if_norm=if_norm, if_activation=if_activation)
    # TODO(synk): fuse the non-"same"-padding case too (needs per-row placement
    # of layer-1's output inside layer-2's differently shaped padded slab).
    w1, b1, a1, w2, b2, a2 = params
    x = conv3d_in_prelu(x, w1, b1, a1, padding=padding,
                        if_norm=if_norm[0], if_activation=if_activation[0])
    x = conv3d_in_prelu(x, w2, b2, a2, padding=padding,
                        if_norm=if_norm[1], if_activation=if_activation[1])
    return x


# ---------------------------------------------------------------------------
# Pure-JAX reference (matches PyTorch defaults) and demo.
# ---------------------------------------------------------------------------
def _ref_conv_layer(x, w, b, alpha, *, padding, if_norm, if_activation):
    o = jax.lax.conv_general_dilated(
        x, w, window_strides=(1, 1, 1), padding=[(padding, padding)] * 3,
        dimension_numbers=("NCDHW", "OIDHW", "NCDHW"),
        precision=jax.lax.Precision.HIGHEST)
    o = o + b.reshape(1, -1, 1, 1, 1)
    if if_norm:
        mean = jnp.mean(o, axis=(2, 3, 4), keepdims=True)
        var = jnp.mean((o - mean) ** 2, axis=(2, 3, 4), keepdims=True)
        o = (o - mean) * jax.lax.rsqrt(var + 1e-5)
    if if_activation:
        o = jnp.where(o > 0, o, alpha * o)
    return o


def _ref_conv_block(x, params, *, padding):
    w1, b1, a1, w2, b2, a2 = params
    o = _ref_conv_layer(x, w1, b1, a1, padding=padding,
                        if_norm=True, if_activation=True)
    o = _ref_conv_layer(o, w2, b2, a2, padding=padding,
                        if_norm=True, if_activation=True)
    return o


if __name__ == "__main__":
    # Small shapes consistent with a Conv3d block: NCDHW = (2, 4, 8, 8, 8).
    N, Cin, Cout, D, H, W = 2, 4, 8, 8, 8, 8
    kS, pad = 3, 1

    key = jax.random.PRNGKey(0)
    kx, kw1, kb1, kw2, kb2 = jax.random.split(key, 5)
    x = jax.random.normal(kx, (N, Cin, D, H, W), jnp.float32)

    # Deterministic synthetic parameters (shapes per nn.Conv3d / nn.PReLU).
    w1 = 0.1 * jax.random.normal(kw1, (Cout, Cin, kS, kS, kS), jnp.float32)
    b1 = 0.1 * jax.random.normal(kb1, (Cout,), jnp.float32)
    w2 = 0.1 * jax.random.normal(kw2, (Cout, Cout, kS, kS, kS), jnp.float32)
    b2 = 0.1 * jax.random.normal(kb2, (Cout,), jnp.float32)
    a1 = jnp.float32(0.25)   # PReLU default init
    a2 = jnp.float32(0.25)
    params = (w1, b1, a1, w2, b2, a2)

    # --- fused ("same" padding) path ---
    y = jax.jit(functools.partial(conv_block, padding=pad))(x, params)
    jax.block_until_ready(y)
    assert y.shape == (N, Cout, D, H, W), y.shape
    y_ref = _ref_conv_block(x, params, padding=pad)
    err = float(jnp.max(jnp.abs(y - y_ref)))
    assert err < 1.5e-1, f"fused path max abs err {err}"

    # --- general fallback path (padding=0 is not a "same" conv) ---
    y0 = jax.jit(functools.partial(conv_block, padding=0))(x, params)
    jax.block_until_ready(y0)
    assert y0.shape == (N, Cout, D - 4, H - 4, W - 4), y0.shape
    y0_ref = _ref_conv_block(x, params, padding=0)
    err0 = float(jnp.max(jnp.abs(y0 - y0_ref)))
    assert err0 < 1.5e-1, f"fallback path max abs err {err0}"

    print("KERNEL_OK")
</pallas_src>

<mosaic_0001>
module attributes {stable_mosaic.version = 11 : i64} {
  func.func @_conv_block_fused_kernel(%arg0: i32, %arg1: memref<1x8x1152xbf16, #tpu.memory_space<vmem>>, %arg2: memref<16x216xbf16, #tpu.memory_space<vmem>>, %arg3: memref<16x1xf32, #tpu.memory_space<vmem>>, %arg4: memref<16x216xbf16, #tpu.memory_space<vmem>>, %arg5: memref<16x1xf32, #tpu.memory_space<vmem>>, %arg6: memref<2xf32, #tpu.memory_space<smem>>, %arg7: memref<1x896xf32, #tpu.memory_space<vmem>>, %arg8: memref<1x8x896xf32, #tpu.memory_space<vmem>>, %arg9: memref<216x896xbf16, #tpu.memory_space<vmem>>, %arg10: memref<8x1152xbf16, #tpu.memory_space<vmem>>) attributes {dimension_semantics = [#tpu.dimension_semantics<parallel>], iteration_bounds = array<i64: 2>, scalar_prefetch = 0 : i64, scratch_operands = 2 : i64, tpu.core_type = #tpu.core_type<tc>, window_params = [{transform_indices = @transform_0, window_bounds = array<i64: 1, 8, 1152>}, {pipeline_mode = #tpu.pipeline_mode<synchronous>, transform_indices = @transform_1, window_bounds = array<i64: 16, 216>}, {pipeline_mode = #tpu.pipeline_mode<synchronous>, transform_indices = @transform_2, window_bounds = array<i64: 16, 1>}, {pipeline_mode = #tpu.pipeline_mode<synchronous>, transform_indices = @transform_3, window_bounds = array<i64: 16, 216>}, {pipeline_mode = #tpu.pipeline_mode<synchronous>, transform_indices = @transform_4, window_bounds = array<i64: 16, 1>}, {transform_indices = @transform_5, window_bounds = array<i64: 2>}, {pipeline_mode = #tpu.pipeline_mode<synchronous>, transform_indices = @transform_6, window_bounds = array<i64: 1, 896>}, {transform_indices = @transform_7, window_bounds = array<i64: 1, 8, 896>}]} {
    %cst = arith.constant 0.000000e+00 : bf16
    %0 = vector.broadcast %cst : bf16 to vector<8x1152xbf16>
    %c0 = arith.constant 0 : index
    %c0_0 = arith.constant 0 : index
    %1 = vector.load %arg10[%c0, %c0_0] : memref<8x1152xbf16, #tpu.memory_space<vmem>>, vector<8x1152xbf16>
    tpu.vector_store %arg10[%c0, %c0_0], %0 {strides = array<i32>} : memref<8x1152xbf16, #tpu.memory_space<vmem>>, vector<8x1152xbf16>,
    %c0_1 = arith.constant 0 : index
    %c0_2 = arith.constant 0 : index
    %2 = vector.load %arg7[%c0_1, %c0_2] : memref<1x896xf32, #tpu.memory_space<vmem>>, vector<1x896xf32>
    %c0_3 = arith.constant 0 : index
    %c0_4 = arith.constant 0 : index
    %c0_5 = arith.constant 0 : index
    %3 = vector.load %arg1[%c0_3, %c0_4, %c0_5] : memref<1x8x1152xbf16, #tpu.memory_space<vmem>>, vector<1x8x896xbf16>
    %4 = vector.shape_cast %3 : vector<1x8x896xbf16> to vector<8x896xbf16>
    %c0_6 = arith.constant 0 : index
    %c0_7 = arith.constant 0 : index
    %5 = vector.load %arg9[%c0_6, %c0_7] : memref<216x896xbf16, #tpu.memory_space<vmem>>, vector<8x896xbf16>
    tpu.vector_store %arg9[%c0_6, %c0_7], %4 {strides = array<i32>} : memref<216x896xbf16, #tpu.memory_space<vmem>>, vector<8x896xbf16>,
    %c0_8 = arith.constant 0 : index
    %c0_9 = arith.constant 0 : index
    %c1 = arith.constant 1 : index
    %6 = vector.load %arg1[%c0_8, %c0_9, %c1] : memref<1x8x1152xbf16, #tpu.memory_space<vmem>>, vector<1x8x896xbf16>
    %7 = vector.shape_cast %6 : vector<1x8x896xbf16> to vector<8x896xbf16>
    %c8 = arith.constant 8 : index
    %c0_10 = arith.constant 0 : index
    %8 = vector.load %arg9[%c8, %c0_10] : memref<216x896xbf16, #tpu.memory_space<vmem>>, vector<8x896xbf16>
    tpu.vector_store %arg9[%c8, %c0_10], %7 {strides = array<i32>} : memref<216x896xbf16, #tpu.memory_space<vmem>>, vector<8x896xbf16>,
    %c0_11 = arith.constant 0 : index
    %c0_12 = arith.constant 0 : index
    %c2 = arith.constant 2 : index
    %9 = vector.load %arg1[%c0_11, %c0_12, %c2] : memref<1x8x1152xbf16, #tpu.memory_space<vmem>>, vector<1x8x896xbf16>
    %10 = vector.shape_cast %9 : vector<1x8x896xbf16> to vector<8x896xbf16>
    %c16 = arith.constant 16 : index
    %c0_13 = arith.constant 0 : index
    %11 = vector.load %arg9[%c16, %c0_13] : memref<216x896xbf16, #tpu.memory_space<vmem>>, vector<8x896xbf16>
    tpu.vector_store %arg9[%c16, %c0_13], %10 {strides = array<i32>} : memref<216x896xbf16, #tpu.memory_space<vmem>>, vector<8x896xbf16>,
    %c0_14 = arith.constant 0 : index
    %c0_15 = arith.constant 0 : index
    %c10 = arith.constant 10 : index
    %12 = vector.load %arg1[%c0_14, %c0_15, %c10] : memref<1x8x1152xbf16, #tpu.memory_space<vmem>>, vector<1x8x896xbf16>
    %13 = vector.shape_cast %12 : vector<1x8x896xbf16> to vector<8x896xbf16>
    %c24 = arith.constant 24 : index
    %c0_16 = arith.constant 0 : index
    %14 = vector.load %arg9[%c24, %c0_16] : memref<216x896xbf16, #tpu.memory_space<vmem>>, vector<8x896xbf16>
    tpu.vector_store %arg9[%c24, %c0_16], %13 {strides = array<i32>} : memref<216x896xbf16, #tpu.memory_space<vmem>>, vector<8x896xbf16>,
    %c0_17 = arith.constant 0 : index
    %c0_18 = arith.constant 0 : index
    %c11 = arith.constant 11 : index
    %15 = vector.load %arg1[%c0_17, %c0_18, %c11] : memref<1x8x1152xbf16, #tpu.memory_space<vmem>>, vector<1x8x896xbf16>
    %16 = vector.shape_cast %15 : vector<1x8x896xbf16> to vector<8x896xbf16>
    %c32 = arith.constant 32 : index
    %c0_19 = arith.constant 0 : index
    %17 = vector.load %arg9[%c32, %c0_19] : memref<216x896xbf16, #tpu.memory_space<vmem>>, vector<8x896xbf16>
    tpu.vector_store %arg9[%c32, %c0_19], %16 {strides = array<i32>} : memref<216x896xbf16, #tpu.memory_space<vmem>>, vector<8x896xbf16>,
    %c0_20 = arith.constant 0 : index
    %c0_21 = arith.constant 0 : index
    %c12 = arith.constant 12 : index
    %18 = vector.load %arg1[%c0_20, %c0_21, %c12] : memref<1x8x1152xbf16, #tpu.memory_space<vmem>>, vector<1x8x896xbf16>
    %19 = vector.shape_cast %18 : vector<1x8x896xbf16> to vector<8x896xbf16>
    %c40 = arith.constant 40 : index
    %c0_22 = arith.constant 0 : index
    %20 = vector.load %arg9[%c40, %c0_22] : memref<216x896xbf16, #tpu.memory_space<vmem>>, vector<8x896xbf16>
    tpu.vector_store %arg9[%c40, %c0_22], %19 {strides = array<i32>} : memref<216x896xbf16, #tpu.memory_space<vmem>>, vector<8x896xbf16>,
    %c0_23 = arith.constant 0 : index
    %c0_24 = arith.constant 0 : index
    %c20 = arith.constant 20 : index
    %21 = vector.load %arg1[%c0_23, %c0_24, %c20] : memref<1x8x1152xbf16, #tpu.memory_space<vmem>>, vector<1x8x896xbf16>
    %22 = vector.shape_cast %21 : vector<1x8x896xbf16> to vector<8x896xbf16>
    %c48 = arith.constant 48 : index
    %c0_25 = arith.constant 0 : index
    %23 = vector.load %arg9[%c48, %c0_25] : memref<216x896xbf16, #tpu.memory_space<vmem>>, vector<8x896xbf16>
    tpu.vector_store %arg9[%c48, %c0_25], %22 {strides = array<i32>} : memref<216x896xbf16, #tpu.memory_space<vmem>>, vector<8x896xbf16>,
    %c0_26 = arith.constant 0 : index
    %c0_27 = arith.constant 0 : index
    %c21 = arith.constant 21 : index
    %24 = vector.load %arg1[%c0_26, %c0_27, %c21] : memref<1x8x1152xbf16, #tpu.memory_space<vmem>>, vector<1x8x896xbf16>
    %25 = vector.shape_cast %24 : vector<1x8x896xbf16> to vector<8x896xbf16>
    %c56 = arith.constant 56 : index
    %c0_28 = arith.constant 0 : index
    %26 = vector.load %arg9[%c56, %c0_28] : memref<216x896xbf16, #tpu.memory_space<vmem>>, vector<8x896xbf16>
    tpu.vector_store %arg9[%c56, %c0_28], %25 {strides = array<i32>} : memref<216x896xbf16, #tpu.memory_space<vmem>>, vector<8x896xbf16>,
    %c0_29 = arith.constant 0 : index
    %c0_30 = arith.constant 0 : index
    %c22 = arith.constant 22 : index
    %27 = vector.load %arg1[%c0_29, %c0_30, %c22] : memref<1x8x1152xbf16, #tpu.memory_space<vmem>>, vector<1x8x896xbf16>
    %28 = vector.shape_cast %27 : vector<1x8x896xbf16> to vector<8x896xbf16>
    %c64 = arith.constant 64 : index
    %c0_31 = arith.constant 0 : index
    %29 = vector.load %arg9[%c64, %c0_31] : memref<216x896xbf16, #tpu.memory_space<vmem>>, vector<8x896xbf16>
    tpu.vector_store %arg9[%c64, %c0_31], %28 {strides = array<i32>} : memref<216x896xbf16, #tpu.memory_space<vmem>>, vector<8x896xbf16>,
    %c0_32 = arith.constant 0 : index
    %c0_33 = arith.constant 0 : index
    %c100 = arith.constant 100 : index
    %30 = vector.load %arg1[%c0_32, %c0_33, %c100] : memref<1x8x1152xbf16, #tpu.memory_space<vmem>>, vector<1x8x896xbf16>
    %31 = vector.shape_cast %30 : vector<1x8x896xbf16> to vector<8x896xbf16>
    %c72 = arith.constant 72 : index
    %c0_34 = arith.constant 0 : index
    %32 = vector.load %arg9[%c72, %c0_34] : memref<216x896xbf16, #tpu.memory_space<vmem>>, vector<8x896xbf16>
    tpu.vector_store %arg9[%c72, %c0_34], %31 {strides = array<i32>} : memref<216x896xbf16, #tpu.memory_space<vmem>>, vector<8x896xbf16>,
    %c0_35 = arith.constant 0 : index
    %c0_36 = arith.constant 0 : index
    %c101 = arith.constant 101 : index
    %33 = vector.load %arg1[%c0_35, %c0_36, %c101] : memref<1x8x1152xbf16, #tpu.memory_space<vmem>>, vector<1x8x896xbf16>
    %34 = vector.shape_cast %33 : vector<1x8x896xbf16> to vector<8x896xbf16>
    %c80 = arith.constant 80 : index
    %c0_37 = arith.constant 0 : index
    %35 = vector.load %arg9[%c80, %c0_37] : memref<216x896xbf16, #tpu.memory_space<vmem>>, vector<8x896xbf16>
    tpu.vector_store %arg9[%c80, %c0_37], %34 {strides = array<i32>} : memref<216x896xbf16, #tpu.memory_space<vmem>>, vector<8x896xbf16>,
    %c0_38 = arith.constant 0 : index
    %c0_39 = arith.constant 0 : index
    %c102 = arith.constant 102 : index
    %36 = vector.load %arg1[%c0_38, %c0_39, %c102] : memref<1x8x1152xbf16, #tpu.memory_space<vmem>>, vector<1x8x896xbf16>
    %37 = vector.shape_cast %36 : vector<1x8x896xbf16> to vector<8x896xbf16>
    %c88 = arith.constant 88 : index
    %c0_40 = arith.constant 0 : index
    %38 = vector.load %arg9[%c88, %c0_40] : memref<216x896xbf16, #tpu.memory_space<vmem>>, vector<8x896xbf16>
    tpu.vector_store %arg9[%c88, %c0_40], %37 {strides = array<i32>} : memref<216x896xbf16, #tpu.memory_space<vmem>>, vector<8x896xbf16>,
    %c0_41 = arith.constant 0 : index
    %c0_42 = arith.constant 0 : index
    %c110 = arith.constant 110 : index
    %39 = vector.load %arg1[%c0_41, %c0_42, %c110] : memref<1x8x1152xbf16, #tpu.memory_space<vmem>>, vector<1x8x896xbf16>
    %40 = vector.shape_cast %39 : vector<1x8x896xbf16> to vector<8x896xbf16>
    %c96 = arith.constant 96 : index
    %c0_43 = arith.constant 0 : index
    %41 = vector.load %arg9[%c96, %c0_43] : memref<216x896xbf16, #tpu.memory_space<vmem>>, vector<8x896xbf16>
    tpu.vector_store %arg9[%c96, %c0_43], %40 {strides = array<i32>} : memref<216x896xbf16, #tpu.memory_space<vmem>>, vector<8x896xbf16>,
    %c0_44 = arith.constant 0 : index
    %c0_45 = arith.constant 0 : index
    %c111 = arith.constant 111 : index
    %42 = vector.load %arg1[%c0_44, %c0_45, %c111] : memref<1x8x1152xbf16, #tpu.memory_space<vmem>>, vector<1x8x896xbf16>
    %43 = vector.shape_cast %42 : vector<1x8x896xbf16> to vector<8x896xbf16>
    %c104 = arith.constant 104 : index
    %c0_46 = arith.constant 0 : index
    %44 = vector.load %arg9[%c104, %c0_46] : memref<216x896xbf16, #tpu.memory_space<vmem>>, vector<8x896xbf16>
    tpu.vector_store %arg9[%c104, %c0_46], %43 {strides = array<i32>} : memref<216x896xbf16, #tpu.memory_space<vmem>>, vector<8x896xbf16>,
    %c0_47 = arith.constant 0 : index
    %c0_48 = arith.constant 0 : index
    %c112 = arith.constant 112 : index
    %45 = vector.load %arg1[%c0_47, %c0_48, %c112] : memref<1x8x1152xbf16, #tpu.memory_space<vmem>>, vector<1x8x896xbf16>
    %46 = vector.shape_cast %45 : vector<1x8x896xbf16> to vector<8x896xbf16>
    %c112_49 = arith.constant 112 : index
    %c0_50 = arith.constant 0 : index
    %47 = vector.load %arg9[%c112_49, %c0_50] : memref<216x896xbf16, #tpu.memory_space<vmem>>, vector<8x896xbf16>
    tpu.vector_store %arg9[%c112_49, %c0_50], %46 {strides = array<i32>} : memref<216x896xbf16, #tpu.memory_space<vmem>>, vector<8x896xbf16>,
    %c0_51 = arith.constant 0 : index
    %c0_52 = arith.constant 0 : index
    %c120 = arith.constant 120 : index
    %48 = vector.load %arg1[%c0_51, %c0_52, %c120] : memref<1x8x1152xbf16, #tpu.memory_space<vmem>>, vector<1x8x896xbf16>
    %49 = vector.shape_cast %48 : vector<1x8x896xbf16> to vector<8x896xbf16>
    %c120_53 = arith.constant 120 : index
    %c0_54 = arith.constant 0 : index
    %50 = vector.load %arg9[%c120_53, %c0_54] : memref<216x896xbf16, #tpu.memory_space<vmem>>, vector<8x896xbf16>
    tpu.vector_store %arg9[%c120_53, %c0_54], %49 {strides = array<i32>} : memref<216x896xbf16, #tpu.memory_space<vmem>>, vector<8x896xbf16>,
    %c0_55 = arith.constant 0 : index
    %c0_56 = arith.constant 0 : index
    %c121 = arith.constant 121 : index
    %51 = vector.load %arg1[%c0_55, %c0_56, %c121] : memref<1x8x1152xbf16, #tpu.memory_space<vmem>>, vector<1x8x896xbf16>
    %52 = vector.shape_cast %51 : vector<1x8x896xbf16> to vector<8x896xbf16>
    %c128 = arith.constant 128 : index
    %c0_57 = arith.constant 0 : index
    %53 = vector.load %arg9[%c128, %c0_57] : memref<216x896xbf16, #tpu.memory_space<vmem>>, vector<8x896xbf16>
    tpu.vector_store %arg9[%c128, %c0_57], %52 {strides = array<i32>} : memref<216x896xbf16, #tpu.memory_space<vmem>>, vector<8x896xbf16>,
    %c0_58 = arith.constant 0 : index
    %c0_59 = arith.constant 0 : index
    %c122 = arith.constant 122 : index
    %54 = vector.load %arg1[%c0_58, %c0_59, %c122] : memref<1x8x1152xbf16, #tpu.memory_space<vmem>>, vector<1x8x896xbf16>
    %55 = vector.shape_cast %54 : vector<1x8x896xbf16> to vector<8x896xbf16>
    %c136 = arith.constant 136 : index
    %c0_60 = arith.constant 0 : index
    %56 = vector.load %arg9[%c136, %c0_60] : memref<216x896xbf16, #tpu.memory_space<vmem>>, vector<8x896xbf16>
    tpu.vector_store %arg9[%c136, %c0_60], %55 {strides = array<i32>} : memref<216x896xbf16, #tpu.memory_space<vmem>>, vector<8x896xbf16>,
    %c0_61 = arith.constant 0 : index
    %c0_62 = arith.constant 0 : index
    %c200 = arith.constant 200 : index
    %57 = vector.load %arg1[%c0_61, %c0_62, %c200] : memref<1x8x1152xbf16, #tpu.memory_space<vmem>>, vector<1x8x896xbf16>
    %58 = vector.shape_cast %57 : vector<1x8x896xbf16> to vector<8x896xbf16>
    %c144 = arith.constant 144 : index
    %c0_63 = arith.constant 0 : index
    %59 = vector.load %arg9[%c144, %c0_63] : memref<216x896xbf16, #tpu.memory_space<vmem>>, vector<8x896xbf16>
    tpu.vector_store %arg9[%c144, %c0_63], %58 {strides = array<i32>} : memref<216x896xbf16, #tpu.memory_space<vmem>>, vector<8x896xbf16>,
    %c0_64 = arith.constant 0 : index
    %c0_65 = arith.constant 0 : index
    %c201 = arith.constant 201 : index
    %60 = vector.load %arg1[%c0_64, %c0_65, %c201] : memref<1x8x1152xbf16, #tpu.memory_space<vmem>>, vector<1x8x896xbf16>
    %61 = vector.shape_cast %60 : vector<1x8x896xbf16> to vector<8x896xbf16>
    %c152 = arith.constant 152 : index
    %c0_66 = arith.constant 0 : index
    %62 = vector.load %arg9[%c152, %c0_66] : memref<216x896xbf16, #tpu.memory_space<vmem>>, vector<8x896xbf16>
    tpu.vector_store %arg9[%c152, %c0_66], %61 {strides = array<i32>} : memref<216x896xbf16, #tpu.memory_space<vmem>>, vector<8x896xbf16>,
    %c0_67 = arith.constant 0 : index
    %c0_68 = arith.constant 0 : index
    %c202 = arith.constant 202 : index
    %63 = vector.load %arg1[%c0_67, %c0_68, %c202] : memref<1x8x1152xbf16, #tpu.memory_space<vmem>>, vector<1x8x896xbf16>
    %64 = vector.shape_cast %63 : vector<1x8x896xbf16> to vector<8x896xbf16>
    %c160 = arith.constant 160 : index
    %c0_69 = arith.constant 0 : index
    %65 = vector.load %arg9[%c160, %c0_69] : memref<216x896xbf16, #tpu.memory_space<vmem>>, vector<8x896xbf16>
    tpu.vector_store %arg9[%c160, %c0_69], %64 {strides = array<i32>} : memref<216x896xbf16, #tpu.memory_space<vmem>>, vector<8x896xbf16>,
    %c0_70 = arith.constant 0 : index
    %c0_71 = arith.constant 0 : index
    %c210 = arith.constant 210 : index
    %66 = vector.load %arg1[%c0_70, %c0_71, %c210] : memref<1x8x1152xbf16, #tpu.memory_space<vmem>>, vector<1x8x896xbf16>
    %67 = vector.shape_cast %66 : vector<1x8x896xbf16> to vector<8x896xbf16>
    %c168 = arith.constant 168 : index
    %c0_72 = arith.constant 0 : index
    %68 = vector.load %arg9[%c168, %c0_72] : memref<216x896xbf16, #tpu.memory_space<vmem>>, vector<8x896xbf16>
    tpu.vector_store %arg9[%c168, %c0_72], %67 {strides = array<i32>} : memref<216x896xbf16, #tpu.memory_space<vmem>>, vector<8x896xbf16>,
    %c0_73 = arith.constant 0 : index
    %c0_74 = arith.constant 0 : index
    %c211 = arith.constant 211 : index
    %69 = vector.load %arg1[%c0_73, %c0_74, %c211] : memref<1x8x1152xbf16, #tpu.memory_space<vmem>>, vector<1x8x896xbf16>
    %70 = vector.shape_cast %69 : vector<1x8x896xbf16> to vector<8x896xbf16>
    %c176 = arith.constant 176 : index
    %c0_75 = arith.constant 0 : index
    %71 = vector.load %arg9[%c176, %c0_75] : memref<216x896xbf16, #tpu.memory_space<vmem>>, vector<8x896xbf16>
    tpu.vector_store %arg9[%c176, %c0_75], %70 {strides = array<i32>} : memref<216x896xbf16, #tpu.memory_space<vmem>>, vector<8x896xbf16>,
    %c0_76 = arith.constant 0 : index
    %c0_77 = arith.constant 0 : index
    %c212 = arith.constant 212 : index
    %72 = vector.load %arg1[%c0_76, %c0_77, %c212] : memref<1x8x1152xbf16, #tpu.memory_space<vmem>>, vector<1x8x896xbf16>
    %73 = vector.shape_cast %72 : vector<1x8x896xbf16> to vector<8x896xbf16>
    %c184 = arith.constant 184 : index
    %c0_78 = arith.constant 0 : index
    %74 = vector.load %arg9[%c184, %c0_78] : memref<216x896xbf16, #tpu.memory_space<vmem>>, vector<8x896xbf16>
    tpu.vector_store %arg9[%c184, %c0_78], %73 {strides = array<i32>} : memref<216x896xbf16, #tpu.memory_space<vmem>>, vector<8x896xbf16>,
    %c0_79 = arith.constant 0 : index
    %c0_80 = arith.constant 0 : index
    %c220 = arith.constant 220 : index
    %75 = vector.load %arg1[%c0_79, %c0_80, %c220] : memref<1x8x1152xbf16, #tpu.memory_space<vmem>>, vector<1x8x896xbf16>
    %76 = vector.shape_cast %75 : vector<1x8x896xbf16> to vector<8x896xbf16>
    %c192 = arith.constant 192 : index
    %c0_81 = arith.constant 0 : index
    %77 = vector.load %arg9[%c192, %c0_81] : memref<216x896xbf16, #tpu.memory_space<vmem>>, vector<8x896xbf16>
    tpu.vector_store %arg9[%c192, %c0_81], %76 {strides = array<i32>} : memref<216x896xbf16, #tpu.memory_space<vmem>>, vector<8x896xbf16>,
    %c0_82 = arith.constant 0 : index
    %c0_83 = arith.constant 0 : index
    %c221 = arith.constant 221 : index
    %78 = vector.load %arg1[%c0_82, %c0_83, %c221] : memref<1x8x1152xbf16, #tpu.memory_space<vmem>>, vector<1x8x896xbf16>
    %79 = vector.shape_cast %78 : vector<1x8x896xbf16> to vector<8x896xbf16>
    %c200_84 = arith.constant 200 : index
    %c0_85 = arith.constant 0 : index
    %80 = vector.load %arg9[%c200_84, %c0_85] : memref<216x896xbf16, #tpu.memory_space<vmem>>, vector<8x896xbf16>
    tpu.vector_store %arg9[%c200_84, %c0_85], %79 {strides = array<i32>} : memref<216x896xbf16, #tpu.memory_space<vmem>>, vector<8x896xbf16>,
    %c0_86 = arith.constant 0 : index
    %c0_87 = arith.constant 0 : index
    %c222 = arith.constant 222 : index
    %81 = vector.load %arg1[%c0_86, %c0_87, %c222] : memref<1x8x1152xbf16, #tpu.memory_space<vmem>>, vector<1x8x896xbf16>
    %82 = vector.shape_cast %81 : vector<1x8x896xbf16> to vector<8x896xbf16>
    %c208 = arith.constant 208 : index
    %c0_88 = arith.constant 0 : index
    %83 = vector.load %arg9[%c208, %c0_88] : memref<216x896xbf16, #tpu.memory_space<vmem>>, vector<8x896xbf16>
    tpu.vector_store %arg9[%c208, %c0_88], %82 {strides = array<i32>} : memref<216x896xbf16, #tpu.memory_space<vmem>>, vector<8x896xbf16>,
    %c0_89 = arith.constant 0 : index
    %c0_90 = arith.constant 0 : index
    %84 = vector.load %arg2[%c0_89, %c0_90] : memref<16x216xbf16, #tpu.memory_space<vmem>>, vector<16x216xbf16>
    %c0_91 = arith.constant 0 : index
    %c0_92 = arith.constant 0 : index
    %85 = vector.load %arg9[%c0_91, %c0_92] : memref<216x896xbf16, #tpu.memory_space<vmem>>, vector<216x896xbf16>
    %cst_93 = arith.constant dense<0.000000e+00> : vector<16x896xf32>
    %86 = tpu.matmul %84, %85, %cst_93 {dimension_numbers = #tpu.dot_dimension_numbers<[1], [0], [0], [1], [0, 0, 1, 1], [], []>} : vector<16x216xbf16>, vector<216x896xbf16>, vector<16x896xf32> -> vector<16x896xf32>
    %c0_94 = arith.constant 0 : index
    %87 = memref.load %arg6[%c0_94] : memref<2xf32, #tpu.memory_space<smem>>
    %88 = vector.broadcast %2 : vector<1x896xf32> to vector<16x896xf32>
    %89 = arith.mulf %86, %88 : vector<16x896xf32>
    %cst_95 = arith.constant dense<0.000000e+00> : vector<16xf32>
    %90 = vector.multi_reduction <add>, %89, %cst_95 [1] : vector<16x896xf32> to vector<16xf32>
    %91 = vector.shape_cast %90 : vector<16xf32> to vector<16x1xf32>
    %cst_96 = arith.constant 0.001953125 : f32
    %92 = vector.broadcast %cst_96 : f32 to vector<16x1xf32>
    %93 = arith.mulf %91, %92 : vector<16x1xf32>
    %94 = vector.broadcast %93 : vector<16x1xf32> to vector<16x896xf32>
    %95 = arith.subf %86, %94 : vector<16x896xf32>
    %96 = arith.mulf %95, %95 : vector<16x896xf32>
    %97 = vector.broadcast %2 : vector<1x896xf32> to vector<16x896xf32>
    %98 = arith.mulf %96, %97 : vector<16x896xf32>
    %cst_97 = arith.constant dense<0.000000e+00> : vector<16xf32>
    %99 = vector.multi_reduction <add>, %98, %cst_97 [1] : vector<16x896xf32> to vector<16xf32>
    %100 = vector.shape_cast %99 : vector<16xf32> to vector<16x1xf32>
    %cst_98 = arith.constant 0.001953125 : f32
    %101 = vector.broadcast %cst_98 : f32 to vector<16x1xf32>
    %102 = arith.mulf %100, %101 : vector<16x1xf32>
    %cst_99 = arith.constant 9.99999974E-6 : f32
    %103 = vector.broadcast %cst_99 : f32 to vector<16x1xf32>
    %104 = arith.addf %102, %103 : vector<16x1xf32>
    %105 = math.rsqrt %104 : vector<16x1xf32>
    %106 = vector.broadcast %105 : vector<16x1xf32> to vector<16x896xf32>
    %107 = arith.mulf %95, %106 : vector<16x896xf32>
    %cst_100 = arith.constant 0.000000e+00 : f32
    %108 = vector.broadcast %cst_100 : f32 to vector<16x896xf32>
    %109 = arith.cmpf ogt, %107, %108 : vector<16x896xf32>
    %110 = vector.broadcast %87 : f32 to vector<16x896xf32>
    %111 = arith.mulf %110, %107 : vector<16x896xf32>
    %112 = arith.select %109, %107, %111 : vector<16x896xi1>, vector<16x896xf32>
    %113 = vector.extract_strided_slice %112 {offsets = [0, 0], sizes = [8, 896], strides = [1, 1]} : vector<16x896xf32> to vector<8x896xf32>
    %114 = vector.broadcast %2 : vector<1x896xf32> to vector<8x896xf32>
    %115 = arith.mulf %113, %114 : vector<8x896xf32>
    %116 = arith.truncf %115 : vector<8x896xf32> to vector<8x896xbf16>
    %c0_101 = arith.constant 0 : index
    %c111_102 = arith.constant 111 : index
    %117 = vector.load %arg10[%c0_101, %c111_102] : memref<8x1152xbf16, #tpu.memory_space<vmem>>, vector<8x896xbf16>
    tpu.vector_store %arg10[%c0_101, %c111_102], %116 {strides = array<i32>} : memref<8x1152xbf16, #tpu.memory_space<vmem>>, vector<8x896xbf16>,
    %c0_103 = arith.constant 0 : index
    %c0_104 = arith.constant 0 : index
    %118 = vector.load %arg10[%c0_103, %c0_104] : memref<8x1152xbf16, #tpu.memory_space<vmem>>, vector<8x896xbf16>
    %c0_105 = arith.constant 0 : index
    %c0_106 = arith.constant 0 : index
    %119 = vector.load %arg9[%c0_105, %c0_106] : memref<216x896xbf16, #tpu.memory_space<vmem>>, vector<8x896xbf16>
    tpu.vector_store %arg9[%c0_105, %c0_106], %118 {strides = array<i32>} : memref<216x896xbf16, #tpu.memory_space<vmem>>, vector<8x896xbf16>,
    %c0_107 = arith.constant 0 : index
    %c1_108 = arith.constant 1 : index
    %120 = vector.load %arg10[%c0_107, %c1_108] : memref<8x1152xbf16, #tpu.memory_space<vmem>>, vector<8x896xbf16>
    %c8_109 = arith.constant 8 : index
    %c0_110 = arith.constant 0 : index
    %121 = vector.load %arg9[%c8_109, %c0_110] : memref<216x896xbf16, #tpu.memory_space<vmem>>, vector<8x896xbf16>
    tpu.vector_store %arg9[%c8_109, %c0_110], %120 {strides = array<i32>} : memref<216x896xbf16, #tpu.memory_space<vmem>>, vector<8x896xbf16>,
    %c0_111 = arith.constant 0 : index
    %c2_112 = arith.constant 2 : index
    %122 = vector.load %arg10[%c0_111, %c2_112] : memref<8x1152xbf16, #tpu.memory_space<vmem>>, vector<8x896xbf16>
    %c16_113 = arith.constant 16 : index
    %c0_114 = arith.constant 0 : index
    %123 = vector.load %arg9[%c16_113, %c0_114] : memref<216x896xbf16, #tpu.memory_space<vmem>>, vector<8x896xbf16>
    tpu.vector_store %arg9[%c16_113, %c0_114], %122 {strides = array<i32>} : memref<216x896xbf16, #tpu.memory_space<vmem>>, vector<8x896xbf16>,
    %c0_115 = arith.constant 0 : index
    %c10_116 = arith.constant 10 : index
    %124 = vector.load %arg10[%c0_115, %c10_116] : memref<8x1152xbf16, #tpu.memory_space<vmem>>, vector<8x896xbf16>
    %c24_117 = arith.constant 24 : index
    %c0_118 = arith.constant 0 : index
    %125 = vector.load %arg9[%c24_117, %c0_118] : memref<216x896xbf16, #tpu.memory_space<vmem>>, vector<8x896xbf16>
    tpu.vector_store %arg9[%c24_117, %c0_118], %124 {strides = array<i32>} : memref<216x896xbf16, #tpu.memory_space<vmem>>, vector<8x896xbf16>,
    %c0_119 = arith.constant 0 : index
    %c11_120 = arith.constant 11 : index
    %126 = vector.load %arg10[%c0_119, %c11_120] : memref<8x1152xbf16, #tpu.memory_space<vmem>>, vector<8x896xbf16>
    %c32_121 = arith.constant 32 : index
    %c0_122 = arith.constant 0 : index
    %127 = vector.load %arg9[%c32_121, %c0_122] : memref<216x896xbf16, #tpu.memory_space<vmem>>, vector<8x896xbf16>
    tpu.vector_store %arg9[%c32_121, %c0_122], %126 {strides = array<i32>} : memref<216x896xbf16, #tpu.memory_space<vmem>>, vector<8x896xbf16>,
    %c0_123 = arith.constant 0 : index
    %c12_124 = arith.constant 12 : index
    %128 = vector.load %arg10[%c0_123, %c12_124] : memref<8x1152xbf16, #tpu.memory_space<vmem>>, vector<8x896xbf16>
    %c40_125 = arith.constant 40 : index
    %c0_126 = arith.constant 0 : index
    %129 = vector.load %arg9[%c40_125, %c0_126] : memref<216x896xbf16, #tpu.memory_space<vmem>>, vector<8x896xbf16>
    tpu.vector_store %arg9[%c40_125, %c0_126], %128 {strides = array<i32>} : memref<216x896xbf16, #tpu.memory_space<vmem>>, vector<8x896xbf16>,
    %c0_127 = arith.constant 0 : index
    %c20_128 = arith.constant 20 : index
    %130 = vector.load %arg10[%c0_127, %c20_128] : memref<8x1152xbf16, #tpu.memory_space<vmem>>, vector<8x896xbf16>
    %c48_129 = arith.constant 48 : index
    %c0_130 = arith.constant 0 : index
    %131 = vector.load %arg9[%c48_129, %c0_130] : memref<216x896xbf16, #tpu.memory_space<vmem>>, vector<8x896xbf16>
    tpu.vector_store %arg9[%c48_129, %c0_130], %130 {strides = array<i32>} : memref<216x896xbf16, #tpu.memory_space<vmem>>, vector<8x896xbf16>,
    %c0_131 = arith.constant 0 : index
    %c21_132 = arith.constant 21 : index
    %132 = vector.load %arg10[%c0_131, %c21_132] : memref<8x1152xbf16, #tpu.memory_space<vmem>>, vector<8x896xbf16>
    %c56_133 = arith.constant 56 : index
    %c0_134 = arith.constant 0 : index
    %133 = vector.load %arg9[%c56_133, %c0_134] : memref<216x896xbf16, #tpu.memory_space<vmem>>, vector<8x896xbf16>
    tpu.vector_store %arg9[%c56_133, %c0_134], %132 {strides = array<i32>} : memref<216x896xbf16, #tpu.memory_space<vmem>>, vector<8x896xbf16>,
    %c0_135 = arith.constant 0 : index
    %c22_136 = arith.constant 22 : index
    %134 = vector.load %arg10[%c0_135, %c22_136] : memref<8x1152xbf16, #tpu.memory_space<vmem>>, vector<8x896xbf16>
    %c64_137 = arith.constant 64 : index
    %c0_138 = arith.constant 0 : index
    %135 = vector.load %arg9[%c64_137, %c0_138] : memref<216x896xbf16, #tpu.memory_space<vmem>>, vector<8x896xbf16>
    tpu.vector_store %arg9[%c64_137, %c0_138], %134 {strides = array<i32>} : memref<216x896xbf16, #tpu.memory_space<vmem>>, vector<8x896xbf16>,
    %c0_139 = arith.constant 0 : index
    %c100_140 = arith.constant 100 : index
    %136 = vector.load %arg10[%c0_139, %c100_140] : memref<8x1152xbf16, #tpu.memory_space<vmem>>, vector<8x896xbf16>
    %c72_141 = arith.constant 72 : index
    %c0_142 = arith.constant 0 : index
    %137 = vector.load %arg9[%c72_141, %c0_142] : memref<216x896xbf16, #tpu.memory_space<vmem>>, vector<8x896xbf16>
    tpu.vector_store %arg9[%c72_141, %c0_142], %136 {strides = array<i32>} : memref<216x896xbf16, #tpu.memory_space<vmem>>, vector<8x896xbf16>,
    %c0_143 = arith.constant 0 : index
    %c101_144 = arith.constant 101 : index
    %138 = vector.load %arg10[%c0_143, %c101_144] : memref<8x1152xbf16, #tpu.memory_space<vmem>>, vector<8x896xbf16>
    %c80_145 = arith.constant 80 : index
    %c0_146 = arith.constant 0 : index
    %139 = vector.load %arg9[%c80_145, %c0_146] : memref<216x896xbf16, #tpu.memory_space<vmem>>, vector<8x896xbf16>
    tpu.vector_store %arg9[%c80_145, %c0_146], %138 {strides = array<i32>} : memref<216x896xbf16, #tpu.memory_space<vmem>>, vector<8x896xbf16>,
    %c0_147 = arith.constant 0 : index
    %c102_148 = arith.constant 102 : index
    %140 = vector.load %arg10[%c0_147, %c102_148] : memref<8x1152xbf16, #tpu.memory_space<vmem>>, vector<8x896xbf16>
    %c88_149 = arith.constant 88 : index
    %c0_150 = arith.constant 0 : index
    %141 = vector.load %arg9[%c88_149, %c0_150] : memref<216x896xbf16, #tpu.memory_space<vmem>>, vector<8x896xbf16>
    tpu.vector_store %arg9[%c88_149, %c0_150], %140 {strides = array<i32>} : memref<216x896xbf16, #tpu.memory_space<vmem>>, vector<8x896xbf16>,
    %c0_151 = arith.constant 0 : index
    %c110_152 = arith.constant 110 : index
    %142 = vector.load %arg10[%c0_151, %c110_152] : memref<8x1152xbf16, #tpu.memory_space<vmem>>, vector<8x896xbf16>
    %c96_153 = arith.constant 96 : index
    %c0_154 = arith.constant 0 : index
    %143 = vector.load %arg9[%c96_153, %c0_154] : memref<216x896xbf16, #tpu.memory_space<vmem>>, vector<8x896xbf16>
    tpu.vector_store %arg9[%c96_153, %c0_154], %142 {strides = array<i32>} : memref<216x896xbf16, #tpu.memory_space<vmem>>, vector<8x896xbf16>,
    %c0_155 = arith.constant 0 : index
    %c111_156 = arith.constant 111 : index
    %144 = vector.load %arg10[%c0_155, %c111_156] : memref<8x1152xbf16, #tpu.memory_space<vmem>>, vector<8x896xbf16>
    %c104_157 = arith.constant 104 : index
    %c0_158 = arith.constant 0 : index
    %145 = vector.load %arg9[%c104_157, %c0_158] : memref<216x896xbf16, #tpu.memory_space<vmem>>, vector<8x896xbf16>
    tpu.vector_store %arg9[%c104_157, %c0_158], %144 {strides = array<i32>} : memref<216x896xbf16, #tpu.memory_space<vmem>>, vector<8x896xbf16>,
    %c0_159 = arith.constant 0 : index
    %c112_160 = arith.constant 112 : index
    %146 = vector.load %arg10[%c0_159, %c112_160] : memref<8x1152xbf16, #tpu.memory_space<vmem>>, vector<8x896xbf16>
    %c112_161 = arith.constant 112 : index
    %c0_162 = arith.constant 0 : index
    %147 = vector.load %arg9[%c112_161, %c0_162] : memref<216x896xbf16, #tpu.memory_space<vmem>>, vector<8x896xbf16>
    tpu.vector_store %arg9[%c112_161, %c0_162], %146 {strides = array<i32>} : memref<216x896xbf16, #tpu.memory_space<vmem>>, vector<8x896xbf16>,
    %c0_163 = arith.constant 0 : index
    %c120_164 = arith.constant 120 : index
    %148 = vector.load %arg10[%c0_163, %c120_164] : memref<8x1152xbf16, #tpu.memory_space<vmem>>, vector<8x896xbf16>
    %c120_165 = arith.constant 120 : index
    %c0_166 = arith.constant 0 : index
    %149 = vector.load %arg9[%c120_165, %c0_166] : memref<216x896xbf16, #tpu.memory_space<vmem>>, vector<8x896xbf16>
    tpu.vector_store %arg9[%c120_165, %c0_166], %148 {strides = array<i32>} : memref<216x896xbf16, #tpu.memory_space<vmem>>, vector<8x896xbf16>,
    %c0_167 = arith.constant 0 : index
    %c121_168 = arith.constant 121 : index
    %150 = vector.load %arg10[%c0_167, %c121_168] : memref<8x1152xbf16, #tpu.memory_space<vmem>>, vector<8x896xbf16>
    %c128_169 = arith.constant 128 : index
    %c0_170 = arith.constant 0 : index
    %151 = vector.load %arg9[%c128_169, %c0_170] : memref<216x896xbf16, #tpu.memory_space<vmem>>, vector<8x896xbf16>
    tpu.vector_store %arg9[%c128_169, %c0_170], %150 {strides = array<i32>} : memref<216x896xbf16, #tpu.memory_space<vmem>>, vector<8x896xbf16>,
    %c0_171 = arith.constant 0 : index
    %c122_172 = arith.constant 122 : index
    %152 = vector.load %arg10[%c0_171, %c122_172] : memref<8x1152xbf16, #tpu.memory_space<vmem>>, vector<8x896xbf16>
    %c136_173 = arith.constant 136 : index
    %c0_174 = arith.constant 0 : index
    %153 = vector.load %arg9[%c136_173, %c0_174] : memref<216x896xbf16, #tpu.memory_space<vmem>>, vector<8x896xbf16>
    tpu.vector_store %arg9[%c136_173, %c0_174], %152 {strides = array<i32>} : memref<216x896xbf16, #tpu.memory_space<vmem>>, vector<8x896xbf16>,
    %c0_175 = arith.constant 0 : index
    %c200_176 = arith.constant 200 : index
    %154 = vector.load %arg10[%c0_175, %c200_176] : memref<8x1152xbf16, #tpu.memory_space<vmem>>, vector<8x896xbf16>
    %c144_177 = arith.constant 144 : index
    %c0_178 = arith.constant 0 : index
    %155 = vector.load %arg9[%c144_177, %c0_178] : memref<216x896xbf16, #tpu.memory_space<vmem>>, vector<8x896xbf16>
    tpu.vector_store %arg9[%c144_177, %c0_178], %154 {strides = array<i32>} : memref<216x896xbf16, #tpu.memory_space<vmem>>, vector<8x896xbf16>,
    %c0_179 = arith.constant 0 : index
    %c201_180 = arith.constant 201 : index
    %156 = vector.load %arg10[%c0_179, %c201_180] : memref<8x1152xbf16, #tpu.memory_space<vmem>>, vector<8x896xbf16>
    %c152_181 = arith.constant 152 : index
    %c0_182 = arith.constant 0 : index
    %157 = vector.load %arg9[%c152_181, %c0_182] : memref<216x896xbf16, #tpu.memory_space<vmem>>, vector<8x896xbf16>
    tpu.vector_store %arg9[%c152_181, %c0_182], %156 {strides = array<i32>} : memref<216x896xbf16, #tpu.memory_space<vmem>>, vector<8x896xbf16>,
    %c0_183 = arith.constant 0 : index
    %c202_184 = arith.constant 202 : index
    %158 = vector.load %arg10[%c0_183, %c202_184] : memref<8x1152xbf16, #tpu.memory_space<vmem>>, vector<8x896xbf16>
    %c160_185 = arith.constant 160 : index
    %c0_186 = arith.constant 0 : index
    %159 = vector.load %arg9[%c160_185, %c0_186] : memref<216x896xbf16, #tpu.memory_space<vmem>>, vector<8x896xbf16>
    tpu.vector_store %arg9[%c160_185, %c0_186], %158 {strides = array<i32>} : memref<216x896xbf16, #tpu.memory_space<vmem>>, vector<8x896xbf16>,
    %c0_187 = arith.constant 0 : index
    %c210_188 = arith.constant 210 : index
    %160 = vector.load %arg10[%c0_187, %c210_188] : memref<8x1152xbf16, #tpu.memory_space<vmem>>, vector<8x896xbf16>
    %c168_189 = arith.constant 168 : index
    %c0_190 = arith.constant 0 : index
    %161 = vector.load %arg9[%c168_189, %c0_190] : memref<216x896xbf16, #tpu.memory_space<vmem>>, vector<8x896xbf16>
    tpu.vector_store %arg9[%c168_189, %c0_190], %160 {strides = array<i32>} : memref<216x896xbf16, #tpu.memory_space<vmem>>, vector<8x896xbf16>,
    %c0_191 = arith.constant 0 : index
    %c211_192 = arith.constant 211 : index
    %162 = vector.load %arg10[%c0_191, %c211_192] : memref<8x1152xbf16, #tpu.memory_space<vmem>>, vector<8x896xbf16>
    %c176_193 = arith.constant 176 : index
    %c0_194 = arith.constant 0 : index
    %163 = vector.load %arg9[%c176_193, %c0_194] : memref<216x896xbf16, #tpu.memory_space<vmem>>, vector<8x896xbf16>
    tpu.vector_store %arg9[%c176_193, %c0_194], %162 {strides = array<i32>} : memref<216x896xbf16, #tpu.memory_space<vmem>>, vector<8x896xbf16>,
    %c0_195 = arith.constant 0 : index
    %c212_196 = arith.constant 212 : index
    %164 = vector.load %arg10[%c0_195, %c212_196] : memref<8x1152xbf16, #tpu.memory_space<vmem>>, vector<8x896xbf16>
    %c184_197 = arith.constant 184 : index
    %c0_198 = arith.constant 0 : index
    %165 = vector.load %arg9[%c184_197, %c0_198] : memref<216x896xbf16, #tpu.memory_space<vmem>>, vector<8x896xbf16>
    tpu.vector_store %arg9[%c184_197, %c0_198], %164 {strides = array<i32>} : memref<216x896xbf16, #tpu.memory_space<vmem>>, vector<8x896xbf16>,
    %c0_199 = arith.constant 0 : index
    %c220_200 = arith.constant 220 : index
    %166 = vector.load %arg10[%c0_199, %c220_200] : memref<8x1152xbf16, #tpu.memory_space<vmem>>, vector<8x896xbf16>
    %c192_201 = arith.constant 192 : index
    %c0_202 = arith.constant 0 : index
    %167 = vector.load %arg9[%c192_201, %c0_202] : memref<216x896xbf16, #tpu.memory_space<vmem>>, vector<8x896xbf16>
    tpu.vector_store %arg9[%c192_201, %c0_202], %166 {strides = array<i32>} : memref<216x896xbf16, #tpu.memory_space<vmem>>, vector<8x896xbf16>,
    %c0_203 = arith.constant 0 : index
    %c221_204 = arith.constant 221 : index
    %168 = vector.load %arg10[%c0_203, %c221_204] : memref<8x1152xbf16, #tpu.memory_space<vmem>>, vector<8x896xbf16>
    %c200_205 = arith.constant 200 : index
    %c0_206 = arith.constant 0 : index
    %169 = vector.load %arg9[%c200_205, %c0_206] : memref<216x896xbf16, #tpu.memory_space<vmem>>, vector<8x896xbf16>
    tpu.vector_store %arg9[%c200_205, %c0_206], %168 {strides = array<i32>} : memref<216x896xbf16, #tpu.memory_space<vmem>>, vector<8x896xbf16>,
    %c0_207 = arith.constant 0 : index
    %c222_208 = arith.constant 222 : index
    %170 = vector.load %arg10[%c0_207, %c222_208] : memref<8x1152xbf16, #tpu.memory_space<vmem>>, vector<8x896xbf16>
    %c208_209 = arith.constant 208 : index
    %c0_210 = arith.constant 0 : index
    %171 = vector.load %arg9[%c208_209, %c0_210] : memref<216x896xbf16, #tpu.memory_space<vmem>>, vector<8x896xbf16>
    tpu.vector_store %arg9[%c208_209, %c0_210], %170 {strides = array<i32>} : memref<216x896xbf16, #tpu.memory_space<vmem>>, vector<8x896xbf16>,
    %c0_211 = arith.constant 0 : index
    %c0_212 = arith.constant 0 : index
    %172 = vector.load %arg4[%c0_211, %c0_212] : memref<16x216xbf16, #tpu.memory_space<vmem>>, vector<16x216xbf16>
    %c0_213 = arith.constant 0 : index
    %c0_214 = arith.constant 0 : index
    %173 = vector.load %arg9[%c0_213, %c0_214] : memref<216x896xbf16, #tpu.memory_space<vmem>>, vector<216x896xbf16>
    %cst_215 = arith.constant dense<0.000000e+00> : vector<16x896xf32>
    %174 = tpu.matmul %172, %173, %cst_215 {dimension_numbers = #tpu.dot_dimension_numbers<[1], [0], [0], [1], [0, 0, 1, 1], [], []>} : vector<16x216xbf16>, vector<216x896xbf16>, vector<16x896xf32> -> vector<16x896xf32>
    %c1_216 = arith.constant 1 : index
    %175 = memref.load %arg6[%c1_216] : memref<2xf32, #tpu.memory_space<smem>>
    %176 = vector.broadcast %2 : vector<1x896xf32> to vector<16x896xf32>
    %177 = arith.mulf %174, %176 : vector<16x896xf32>
    %cst_217 = arith.constant dense<0.000000e+00> : vector<16xf32>
    %178 = vector.multi_reduction <add>, %177, %cst_217 [1] : vector<16x896xf32> to vector<16xf32>
    %179 = vector.shape_cast %178 : vector<16xf32> to vector<16x1xf32>
    %cst_218 = arith.constant 0.001953125 : f32
    %180 = vector.broadcast %cst_218 : f32 to vector<16x1xf32>
    %181 = arith.mulf %179, %180 : vector<16x1xf32>
    %182 = vector.broadcast %181 : vector<16x1xf32> to vector<16x896xf32>
    %183 = arith.subf %174, %182 : vector<16x896xf32>
    %184 = arith.mulf %183, %183 : vector<16x896xf32>
    %185 = vector.broadcast %2 : vector<1x896xf32> to vector<16x896xf32>
    %186 = arith.mulf %184, %185 : vector<16x896xf32>
    %cst_219 = arith.constant dense<0.000000e+00> : vector<16xf32>
    %187 = vector.multi_reduction <add>, %186, %cst_219 [1] : vector<16x896xf32> to vector<16xf32>
    %188 = vector.shape_cast %187 : vector<16xf32> to vector<16x1xf32>
    %cst_220 = arith.constant 0.001953125 : f32
    %189 = vector.broadcast %cst_220 : f32 to vector<16x1xf32>
    %190 = arith.mulf %188, %189 : vector<16x1xf32>
    %cst_221 = arith.constant 9.99999974E-6 : f32
    %191 = vector.broadcast %cst_221 : f32 to vector<16x1xf32>
    %192 = arith.addf %190, %191 : vector<16x1xf32>
    %193 = math.rsqrt %192 : vector<16x1xf32>
    %194 = vector.broadcast %193 : vector<16x1xf32> to vector<16x896xf32>
    %195 = arith.mulf %183, %194 : vector<16x896xf32>
    %cst_222 = arith.constant 0.000000e+00 : f32
    %196 = vector.broadcast %cst_222 : f32 to vector<16x896xf32>
    %197 = arith.cmpf ogt, %195, %196 : vector<16x896xf32>
    %198 = vector.broadcast %175 : f32 to vector<16x896xf32>
    %199 = arith.mulf %198, %195 : vector<16x896xf32>
    %200 = arith.select %197, %195, %199 : vector<16x896xi1>, vector<16x896xf32>
    %201 = vector.extract_strided_slice %200 {offsets = [0, 0], sizes = [8, 896], strides = [1, 1]} : vector<16x896xf32> to vector<8x896xf32>
    %c0_223 = arith.constant 0 : index
    %c0_224 = arith.constant 0 : index
    %c0_225 = arith.constant 0 : index
    %202 = vector.load %arg8[%c0_223, %c0_224, %c0_225] : memref<1x8x896xf32, #tpu.memory_space<vmem>>, vector<1x8x896xf32>
    %203 = vector.shape_cast %202 : vector<1x8x896xf32> to vector<8x896xf32>
    %204 = vector.shape_cast %201 : vector<8x896xf32> to vector<1x8x896xf32>
    tpu.vector_store %arg8[%c0_223, %c0_224, %c0_225], %204 {strides = array<i32>} : memref<1x8x896xf32, #tpu.memory_space<vmem>>, vector<1x8x896xf32>,
    return
  }
  func.func @transform_0(%arg0: i32) -> (i32, i32, i32) {
    %c0_i32 = arith.constant 0 : i32
    %c0_i32_0 = arith.constant 0 : i32
    %c0_i32_1 = arith.constant 0 : i32
    return %arg0, %c0_i32, %c0_i32_0 : i32, i32, i32
  }
  func.func @transform_1(%arg0: i32) -> (i32, i32) {
    %c0_i32 = arith.constant 0 : i32
    %c0_i32_0 = arith.constant 0 : i32
    %c0_i32_1 = arith.constant 0 : i32
    return %c0_i32, %c0_i32_0 : i32, i32
  }
  func.func @transform_2(%arg0: i32) -> (i32, i32) {
    %c0_i32 = arith.constant 0 : i32
    %c0_i32_0 = arith.constant 0 : i32
    %c0_i32_1 = arith.constant 0 : i32
    return %c0_i32, %c0_i32_0 : i32, i32
  }
  func.func @transform_3(%arg0: i32) -> (i32, i32) {
    %c0_i32 = arith.constant 0 : i32
    %c0_i32_0 = arith.constant 0 : i32
    %c0_i32_1 = arith.constant 0 : i32
    return %c0_i32, %c0_i32_0 : i32, i32
  }
  func.func @transform_4(%arg0: i32) -> (i32, i32) {
    %c0_i32 = arith.constant 0 : i32
    %c0_i32_0 = arith.constant 0 : i32
    %c0_i32_1 = arith.constant 0 : i32
    return %c0_i32, %c0_i32_0 : i32, i32
  }
  func.func @transform_5(%arg0: i32) -> i32 {
    %c0_i32 = arith.constant 0 : i32
    %c0_i32_0 = arith.constant 0 : i32
    return %c0_i32 : i32
  }
  func.func @transform_6(%arg0: i32) -> (i32, i32) {
    %c0_i32 = arith.constant 0 : i32
    %c0_i32_0 = arith.constant 0 : i32
    %c0_i32_1 = arith.constant 0 : i32
    return %c0_i32, %c0_i32_0 : i32, i32
  }
  func.func @transform_7(%arg0: i32) -> (i32, i32, i32) {
    %c0_i32 = arith.constant 0 : i32
    %c0_i32_0 = arith.constant 0 : i32
    %c0_i32_1 = arith.constant 0 : i32
    return %arg0, %c0_i32, %c0_i32_0 : i32, i32, i32
  }
}

</mosaic_0001>

<llo_original>
// kernel: conv_block.1
$region0: #{conv_block.1}
  #allocation0 [shape = 'u32[]', space=smem, size = 0x4, offset = 0x4, fixed_abs, tag = 'smem constant byte address 0x4 - core index']
  #allocation1 [shape = 'u32[144,128]{1,0:T(1,128)}', space=vmem, size = 0x12000, scoped, tag = 'internal scratch']
  #allocation2 [shape = 'bf16[216,896]{1,0:T(8,128)(2,1)}', space=vmem, size = 0x5e800, scoped, tag = 'scratch operand']
  #allocation3 [shape = 'bf16[8,1152]{1,0:T(8,128)(2,1)}', space=vmem, size = 0x4800, scoped, tag = 'scratch operand']
  %s0 = inlined_call_operand.vmem [shape: bf16[2,8,1152], index: 0, kind: input, shape index: {}]
  %s1 = inlined_call_operand.vmem [shape: bf16[16,216], index: 1, kind: input, shape index: {}]
  %s2 = inlined_call_operand.vmem [shape: f32[16,1], index: 2, kind: input, shape index: {}]
  %s3 = inlined_call_operand.vmem [shape: bf16[16,216], index: 3, kind: input, shape index: {}]
  %s4 = inlined_call_operand.vmem [shape: f32[16,1], index: 4, kind: input, shape index: {}]
  %s5 = inlined_call_operand.vmem [shape: f32[2], index: 5, kind: input, shape index: {}]
  %s6 = inlined_call_operand.vmem [shape: f32[1,896], index: 6, kind: input, shape index: {}]
  %s7 = inlined_call_operand.vmem [shape: f32[2,8,896], index: 7, kind: output, shape index: {}]
  %s8 = sld [smem:[#allocation0]]
  $region65: #{conv_block.1} parent=0
    _
  %s10 = ssub.s32 1, %s8
  %s11 = scalar_select 0, %s10, %s8
  $region1: #{conv_block.1} parent=0
    #allocation4 [shape = 'u8[512]{0}', space=smem, size = 0x200, scoped, tag = 'input window, operand 5, single buffered']
    #allocation5 [shape = 's32[2]{0}', space=sflag, size = 0x8, scoped, tag = 'scoped memory for conv_block.1']
    %12 = vsyncpa [#allocation5], 0
    loop: start=0, step=1, limit=4
    $region2: #{conv_block.1} parent=1 // loop_pre_header
      _
    $region3: #{conv_block.1} parent=1 // loop_header
      %s14 = sphi 0, %s18
      %p15 = scmp.ge.s32.totalorder %s14, 4
      %s24 = sphi 0, %s26
      %s27 = sphi 0, %s24
      %s28 = sphi 0, %s27
      %s44 = sphi 0, %s28
      %s48 = sphi 0, %s48
      %s50 = sphi 0, %s48
      %s51 = sphi 0, %s50
      %s65 = sphi 0, %s51
      %s69 = sphi 0, %s69
      %s71 = sphi 0, %s69
      %s72 = sphi 0, %s71
      %s86 = sphi 0, %s72
      %s90 = sphi 0, %s90
      %s92 = sphi 0, %s90
      %s93 = sphi 0, %s92
      %s107 = sphi 0, %s93
      %s111 = sphi 0, %s111
      %s113 = sphi 0, %s111
      %s114 = sphi 0, %s113
      %s128 = sphi 0, %s114
      %s132 = sphi 0, %s132
      %s134 = sphi 0, %s132
      %s135 = sphi 0, %s134
      %s149 = sphi 0, %s135
      %s153 = sphi 0, %s153
      %s155 = sphi 0, %s153
      %s156 = sphi 0, %s155
      %s170 = sphi 0, %s156
      %s176 = sphi 0, %s178
      %s179 = sphi 0, %s176
      %s180 = sphi 0, %s179
      %s196 = sphi 0, %s180
    $region4: #{conv_block.1} parent=1 // loop_header_branch
      %17 = sbr.rel (%p15) target = $region8
    $region5: #{conv_block.1} parent=1 // loop_body
      %s19 = ssub.s32 %s14, 1
      %s20 = ssub.s32 %s14, 2
      %s21 = sadd.s32 %s14, 1
      %s22 = ssub.s32 %s14, %s21
      %p23 = scmp.eq.s32.totalorder %s22, 0
      %s25 = sadd.s32 %s24, 1
      %s26 = scalar_select %p23, %s24, %s25
      %p29 = pneg %p23
      %p30 = scmp.eq.s32.totalorder %s14, 1
      %p31 = por %p29, %p30
      %p32 = scmp.ne.s32.totalorder %s24, %s27
      %p33 = scmp.eq.s32.totalorder %s14, 0
      %p34 = por %p32, %p33
      %p35 = scmp.ne.s32.totalorder %s24, %s27
      %p36 = scmp.eq.s32.totalorder %s19, 1
      %p37 = por %p35, %p36
      %p38 = scmp.ne.s32.totalorder %s27, %s28
      %p39 = scmp.eq.s32.totalorder %s19, 0
      %p40 = por %p38, %p39
      %p41 = scmp.ne.s32.totalorder %s27, %s28
      %p42 = scmp.eq.s32.totalorder %s20, 1
      %p43 = por %p41, %p42
      %p45 = scmp.ne.s32.totalorder %s28, %s44
      %p46 = scmp.eq.s32.totalorder %s20, 0
      %p47 = por %p45, %p46
      %s49 = sadd.s32 %s48, 1
      %p52 = scmp.eq.s32.totalorder %s14, 1
      %p53 = scmp.ne.s32.totalorder %s48, %s50
      %p54 = scmp.eq.s32.totalorder %s14, 0
      %p55 = por %p53, %p54
      %p56 = scmp.ne.s32.totalorder %s48, %s50
      %p57 = scmp.eq.s32.totalorder %s19, 1
      %p58 = por %p56, %p57
      %p59 = scmp.ne.s32.totalorder %s50, %s51
      %p60 = scmp.eq.s32.totalorder %s19, 0
      %p61 = por %p59, %p60
      %p62 = scmp.ne.s32.totalorder %s50, %s51
      %p63 = scmp.eq.s32.totalorder %s20, 1
      %p64 = por %p62, %p63
      %p66 = scmp.ne.s32.totalorder %s51, %s65
      %p67 = scmp.eq.s32.totalorder %s20, 0
      %p68 = por %p66, %p67
      %s70 = sadd.s32 %s69, 1
      %p73 = scmp.eq.s32.totalorder %s14, 1
      %p74 = scmp.ne.s32.totalorder %s69, %s71
      %p75 = scmp.eq.s32.totalorder %s14, 0
      %p76 = por %p74, %p75
      %p77 = scmp.ne.s32.totalorder %s69, %s71
      %p78 = scmp.eq.s32.totalorder %s19, 1
      %p79 = por %p77, %p78
      %p80 = scmp.ne.s32.totalorder %s71, %s72
      %p81 = scmp.eq.s32.totalorder %s19, 0
      %p82 = por %p80, %p81
      %p83 = scmp.ne.s32.totalorder %s71, %s72
      %p84 = scmp.eq.s32.totalorder %s20, 1
      %p85 = por %p83, %p84
      %p87 = scmp.ne.s32.totalorder %s72, %s86
      %p88 = scmp.eq.s32.totalorder %s20, 0
      %p89 = por %p87, %p88
      %s91 = sadd.s32 %s90, 1
      %p94 = scmp.eq.s32.totalorder %s14, 1
      %p95 = scmp.ne.s32.totalorder %s90, %s92
      %p96 = scmp.eq.s32.totalorder %s14, 0
      %p97 = por %p95, %p96
      %p98 = scmp.ne.s32.totalorder %s90, %s92
      %p99 = scmp.eq.s32.totalorder %s19, 1
      %p100 = por %p98, %p99
      %p101 = scmp.ne.s32.totalorder %s92, %s93
      %p102 = scmp.eq.s32.totalorder %s19, 0
      %p103 = por %p101, %p102
      %p104 = scmp.ne.s32.totalorder %s92, %s93
      %p105 = scmp.eq.s32.totalorder %s20, 1
      %p106 = por %p104, %p105
      %p108 = scmp.ne.s32.totalorder %s93, %s107
      %p109 = scmp.eq.s32.totalorder %s20, 0
      %p110 = por %p108, %p109
      %s112 = sadd.s32 %s111, 1
      %p115 = scmp.eq.s32.totalorder %s14, 1
      %p116 = scmp.ne.s32.totalorder %s111, %s113
      %p117 = scmp.eq.s32.totalorder %s14, 0
      %p118 = por %p116, %p117
      %p119 = scmp.ne.s32.totalorder %s111, %s113
      %p120 = scmp.eq.s32.totalorder %s19, 1
      %p121 = por %p119, %p120
      %p122 = scmp.ne.s32.totalorder %s113, %s114
      %p123 = scmp.eq.s32.totalorder %s19, 0
      %p124 = por %p122, %p123
      %p125 = scmp.ne.s32.totalorder %s113, %s114
      %p126 = scmp.eq.s32.totalorder %s20, 1
      %p127 = por %p125, %p126
      %p129 = scmp.ne.s32.totalorder %s114, %s128
      %p130 = scmp.eq.s32.totalorder %s20, 0
      %p131 = por %p129, %p130
      %s133 = sadd.s32 %s132, 1
      %p136 = scmp.eq.s32.totalorder %s14, 1
      %p137 = scmp.ne.s32.totalorder %s132, %s134
      %p138 = scmp.eq.s32.totalorder %s14, 0
      %p139 = por %p137, %p138
      %p140 = scmp.ne.s32.totalorder %s132, %s134
      %p141 = scmp.eq.s32.totalorder %s19, 1
      %p142 = por %p140, %p141
      %p143 = scmp.ne.s32.totalorder %s134, %s135
      %p144 = scmp.eq.s32.totalorder %s19, 0
      %p145 = por %p143, %p144
      %p146 = scmp.ne.s32.totalorder %s134, %s135
      %p147 = scmp.eq.s32.totalorder %s20, 1
      %p148 = por %p146, %p147
      %p150 = scmp.ne.s32.totalorder %s135, %s149
      %p151 = scmp.eq.s32.totalorder %s20, 0
      %p152 = por %p150, %p151
      %s154 = sadd.s32 %s153, 1
      %p157 = scmp.eq.s32.totalorder %s14, 1
      %p158 = scmp.ne.s32.totalorder %s153, %s155
      %p159 = scmp.eq.s32.totalorder %s14, 0
      %p160 = por %p158, %p159
      %p161 = scmp.ne.s32.totalorder %s153, %s155
      %p162 = scmp.eq.s32.totalorder %s19, 1
      %p163 = por %p161, %p162
      %p164 = scmp.ne.s32.totalorder %s155, %s156
      %p165 = scmp.eq.s32.totalorder %s19, 0
      %p166 = por %p164, %p165
      %p167 = scmp.ne.s32.totalorder %s155, %s156
      %p168 = scmp.eq.s32.totalorder %s20, 1
      %p169 = por %p167, %p168
      %p171 = scmp.ne.s32.totalorder %s156, %s170
      %p172 = scmp.eq.s32.totalorder %s20, 0
      %p173 = por %p171, %p172
      %s174 = ssub.s32 %s14, %s21
      %p175 = scmp.eq.s32.totalorder %s174, 0
      %s177 = sadd.s32 %s176, 1
      %s178 = scalar_select %p175, %s176, %s177
      %p181 = pneg %p175
      %p182 = scmp.eq.s32.totalorder %s14, 1
      %p183 = por %p181, %p182
      %p184 = scmp.ne.s32.totalorder %s176, %s179
      %p185 = scmp.eq.s32.totalorder %s14, 0
      %p186 = por %p184, %p185
      %p187 = scmp.ne.s32.totalorder %s176, %s179
      %p188 = scmp.eq.s32.totalorder %s19, 1
      %p189 = por %p187, %p188
      %p190 = scmp.ne.s32.totalorder %s179, %s180
      %p191 = scmp.eq.s32.totalorder %s19, 0
      %p192 = por %p190, %p191
      %p193 = scmp.ne.s32.totalorder %s179, %s180
      %p194 = scmp.eq.s32.totalorder %s20, 1
      %p195 = por %p193, %p194
      %p197 = scmp.ne.s32.totalorder %s180, %s196
      %p198 = scmp.eq.s32.totalorder %s20, 0
      %p199 = por %p197, %p198
      %p200 = scmp.le.s32.totalorder 1, %s14
      %p201 = scmp.lt.s32.totalorder %s14, 3
      %p202 = pnand %p200, %p201
      %p203 = pneg %p202
      // Predicated region
      $region9: #{conv_block.1} parent=5 // pred_check
        _
      $region10: #{conv_block.1} parent=5 // pred_check_branch
        %205 = sbr.rel (%p202) target = $region12
      $region11: #{conv_block.1} parent=5 // pred_region
        %s206 = ssub.s32 %s14, 1
        // Predicated region
        $region13: #{conv_block.1} parent=11 // pred_check
          %p207 = pneg %p61
        $region14: #{conv_block.1} parent=11 // pred_check_branch
          %209 = sbr.rel (%p207) target = $region16
        $region15: #{conv_block.1} parent=11 // pred_region
          _
        $region16: #{conv_block.1} parent=11 // pred_fallthru
          _
        // Predicated region
        $region17: #{conv_block.1} parent=11 // pred_check
          %p210 = pneg %p82
        $region18: #{conv_block.1} parent=11 // pred_check_branch
          %212 = sbr.rel (%p210) target = $region20
        $region19: #{conv_block.1} parent=11 // pred_region
          _
        $region20: #{conv_block.1} parent=11 // pred_fallthru
          _
        // Predicated region
        $region21: #{conv_block.1} parent=11 // pred_check
          %p213 = pneg %p103
        $region22: #{conv_block.1} parent=11 // pred_check_branch
          %215 = sbr.rel (%p213) target = $region24
        $region23: #{conv_block.1} parent=11 // pred_region
          _
        $region24: #{conv_block.1} parent=11 // pred_fallthru
          _
        // Predicated region
        $region25: #{conv_block.1} parent=11 // pred_check
          %p216 = pneg %p124
        $region26: #{conv_block.1} parent=11 // pred_check_branch
          %218 = sbr.rel (%p216) target = $region28
        $region27: #{conv_block.1} parent=11 // pred_region
          _
        $region28: #{conv_block.1} parent=11 // pred_fallthru
          _
        // Predicated region
        $region29: #{conv_block.1} parent=11 // pred_check
          %p219 = pneg %p145
        $region30: #{conv_block.1} parent=11 // pred_check_branch
          %221 = sbr.rel (%p219) target = $region32
        $region31: #{conv_block.1} parent=11 // pred_region
          %s223 = ssub.s32 16, 16
          %224 = vsyncadd [#allocation5], %s223
          %s226 = sshll.u32 %s5, 4
          %s227 = int_to_ptr.vmem [resolvable:$true] %s226
          %229 = dma.vmem_to_smem %s227, 16, [#allocation4], [#allocation5]
        $region32: #{conv_block.1} parent=11 // pred_fallthru
          _
        // Predicated region
        $region33: #{conv_block.1} parent=11 // pred_check
          %p230 = pneg %p166
        $region34: #{conv_block.1} parent=11 // pred_check_branch
          %232 = sbr.rel (%p230) target = $region36
        $region35: #{conv_block.1} parent=11 // pred_region
          _
        $region36: #{conv_block.1} parent=11 // pred_fallthru
          _
      $region12: #{conv_block.1} parent=5 // pred_fallthru
        _
      %p233 = scmp.lt.s32.totalorder %s14, 2
      // Predicated region
      $region37: #{conv_block.1} parent=5 // pred_check
        %p234 = pneg %p233
      $region38: #{conv_block.1} parent=5 // pred_check_branch
        %236 = sbr.rel (%p234) target = $region40
      $region39: #{conv_block.1} parent=5 // pred_region
        // Predicated region
        $region41: #{conv_block.1} parent=39 // pred_check
          %p237 = pneg %p34
        $region42: #{conv_block.1} parent=39 // pred_check_branch
          %239 = sbr.rel (%p237) target = $region44
        $region43: #{conv_block.1} parent=39 // pred_region
          %p240 = scmp.lt.s32.totalorder %s14, 1
          %s241 = scalar_select %p240, %s14, 1
          %s242 = smul.addr %s241, 9
          %s243 = smul.addr %s242, 4
          %s244 = scalar_lea.vmem %s0, %s243
        $region44: #{conv_block.1} parent=39 // pred_fallthru
          _
      $region40: #{conv_block.1} parent=5 // pred_fallthru
        _
      %p245 = scmp.le.s32.totalorder 1, %s14
      %p246 = scmp.lt.s32.totalorder %s14, 3
      %p247 = pnand %p245, %p246
      %p248 = pneg %p247
      // Predicated region
      $region45: #{conv_block.1} parent=5 // pred_check
        _
      $region46: #{conv_block.1} parent=5 // pred_check_branch
        %250 = sbr.rel (%p247) target = $region48
      $region47: #{conv_block.1} parent=5 // pred_region
        %s251 = ssub.s32 %s14, 1
        // Predicated region
        $region49: #{conv_block.1} parent=47 // pred_check
          %p252 = pneg %p145
        $region50: #{conv_block.1} parent=47 // pred_check_branch
          %254 = sbr.rel (%p252) target = $region52
        $region51: #{conv_block.1} parent=47 // pred_region
          %255 = dma.done [#allocation5], 16
        $region52: #{conv_block.1} parent=47 // pred_fallthru
          _
        %256 = sfence
        %p257 = scmp.lt.s32.totalorder %s19, 1
        %s258 = scalar_select %p257, %s19, 1
        %s259 = smul.addr %s258, 9
        %s260 = smul.addr %s259, 4
        %s261 = scalar_lea.vmem %s0, %s260
        %p262 = pneg %p40
        %p263 = pneg %p37
        %p264 = pneg %p61
        %p265 = pneg %p58
        %p266 = pneg %p82
        %p267 = pneg %p79
        %p268 = pneg %p103
        %p269 = pneg %p100
        %p270 = pneg %p124
        %p271 = pneg %p121
        %p272 = pneg %p145
        %p273 = pneg %p142
        %p274 = pneg %p166
        %p275 = pneg %p163
        %p276 = pneg %p192
        %p277 = pneg %p189
        %p278 = scmp.lt.s32.totalorder %s19, 1
        %s279 = scalar_select %p278, %s19, 1
        %s280 = smul.addr %s279, 7
        %s281 = smul.addr %s280, 8
        %s282 = scalar_lea.vmem %s7, %s281
        %p283 = scmp.lt.s32.totalorder %s19, 1
        %s284 = scalar_select %p283, %s19, 1
        %s285 = smul.addr %s284, 9
        %s286 = smul.addr %s285, 4
        %s287 = scalar_lea.vmem %s0, %s286
        %p288 = scmp.lt.s32.totalorder %s19, 1
        %s289 = scalar_select %p288, %s19, 1
        %s290 = smul.addr %s289, 7
        %s291 = smul.addr %s290, 8
        %s292 = scalar_lea.vmem %s7, %s291
        %294 = vst [vmem:[#allocation3] sm:$0xff] 0
        %295 = vst [vmem:[#allocation3 + $0x8] sm:$0xff] 0
        %296 = vst [vmem:[#allocation3 + $0x10] sm:$0xff] 0
        %297 = vst [vmem:[#allocation3 + $0x18] sm:$0xff] 0
        %298 = vst [vmem:[#allocation3 + $0x20] sm:$0xf] 0
        %v299 = vld [vmem:[%s6] sm:$0xff]
        %v300 = vld [vmem:[%s287] sm:$0xff]
        %v301 = vld [vmem:[%s287 + $0x8] sm:$0xff]
        %v302 = vld [vmem:[%s287 + $0x10] sm:$0xff]
        %v303 = vld [vmem:[%s287 + $0x18] sm:$0xf]
        %304 = vst [vmem:[#allocation2] sm:$0xff] %v300
        %305 = vst [vmem:[#allocation2 + $0x8] sm:$0xff] %v301
        %306 = vst [vmem:[#allocation2 + $0x10] sm:$0xff] %v302
        %307 = vst [vmem:[#allocation2 + $0x18] sm:$0xf] %v303
        %v308 = vld [vmem:[%s287] sm:$0xff]
        %v309 = vld [vmem:[%s287 + $0x8] sm:$0xff]
        %v310 = vld [vmem:[%s287 + $0x10] sm:$0xff]
        %v311 = vld [vmem:[%s287 + $0x18] sm:$0xff]
        %316 = vrot.lane.b32.xlu0 %v308, 127
        %v317 = vpop.permute.xlu0 %316
        %318 = vrot.lane.b32.xlu0 %v309, 127
        %v319 = vpop.permute.xlu0 %318
        %320 = vrot.lane.b32.xlu0 %v310, 127
        %v321 = vpop.permute.xlu0 %320
        %322 = vrot.lane.b32.xlu0 %v311, 127
        %v323 = vpop.permute.xlu0 %322
        %v324 = vrot.slane %v317, 4
        %v325 = vrot.slane %v319, 4
        %v326 = vrot.slane %v321, 4
        %v327 = vrot.slane %v323, 4
        %vm328 = vcmask 1043456
        %v329 = vsel %vm328, %v324, %v325
        %vm330 = vcmask 1039360
        %v331 = vsel %vm330, %v317, %v329
        %v332 = vsel %vm328, %v325, %v326
        %v333 = vsel %vm330, %v319, %v332
        %v334 = vsel %vm328, %v326, %v327
        %v335 = vsel %vm330, %v321, %v334
        %v336 = vsel %vm330, %v323, %v327
        %341 = vst [vmem:[#allocation2 + $0x1c] sm:$0xff] %v331
        %342 = vst [vmem:[#allocation2 + $0x24] sm:$0xff] %v333
        %343 = vst [vmem:[#allocation2 + $0x2c] sm:$0xff] %v335
        %344 = vst [vmem:[#allocation2 + $0x34] sm:$0xf] %v336
        %v345 = vld [vmem:[%s287] sm:$0xff]
        %v346 = vld [vmem:[%s287 + $0x8] sm:$0xff]
        %v347 = vld [vmem:[%s287 + $0x10] sm:$0xff]
        %v348 = vld [vmem:[%s287 + $0x18] sm:$0xff]
        %353 = vrot.lane.b32.xlu0 %v345, 126
        %v354 = vpop.permute.xlu0 %353
        %355 = vrot.lane.b32.xlu0 %v346, 126
        %v356 = vpop.permute.xlu0 %355
        %357 = vrot.lane.b32.xlu0 %v347, 126
        %v358 = vpop.permute.xlu0 %357
        %359 = vrot.lane.b32.xlu0 %v348, 126
        %v360 = vpop.permute.xlu0 %359
        %v361 = vrot.slane %v354, 4
        %v362 = vrot.slane %v356, 4
        %v363 = vrot.slane %v358, 4
        %v364 = vrot.slane %v360, 4
        %v365 = vsel %vm328, %v361, %v362
        %vm366 = vcmask 1031168
        %v367 = vsel %vm366, %v354, %v365
        %v368 = vsel %vm328, %v362, %v363
        %v369 = vsel %vm366, %v356, %v368
        %v370 = vsel %vm328, %v363, %v364
        %v371 = vsel %vm366, %v358, %v370
        %v372 = vsel %vm366, %v360, %v364
        %377 = vst [vmem:[#allocation2 + $0x38] sm:$0xff] %v367
        %378 = vst [vmem:[#allocation2 + $0x40] sm:$0xff] %v369
        %379 = vst [vmem:[#allocation2 + $0x48] sm:$0xff] %v371
        %380 = vst [vmem:[#allocation2 + $0x50] sm:$0xf] %v372
        %v381 = vld [vmem:[%s287] sm:$0xff]
        %v382 = vld [vmem:[%s287 + $0x8] sm:$0xff]
        %v383 = vld [vmem:[%s287 + $0x10] sm:$0xff]
        %v384 = vld [vmem:[%s287 + $0x18] sm:$0xff]
        %389 = vrot.lane.b32.xlu0 %v381, 118
        %v390 = vpop.permute.xlu0 %389
        %391 = vrot.lane.b32.xlu0 %v382, 118
        %v392 = vpop.permute.xlu0 %391
        %393 = vrot.lane.b32.xlu0 %v383, 118
        %v394 = vpop.permute.xlu0 %393
        %395 = vrot.lane.b32.xlu0 %v384, 118
        %v396 = vpop.permute.xlu0 %395
        %v397 = vrot.slane %v390, 4
        %v398 = vrot.slane %v392, 4
        %v399 = vrot.slane %v394, 4
        %v400 = vrot.slane %v396, 4
        %v401 = vsel %vm328, %v397, %v398
        %vm402 = vcmask 965632
        %v403 = vsel %vm402, %v390, %v401
        %v404 = vsel %vm328, %v398, %v399
        %v405 = vsel %vm402, %v392, %v404
        %v406 = vsel %vm328, %v399, %v400
        %v407 = vsel %vm402, %v394, %v406
        %v408 = vsel %vm402, %v396, %v400
        %413 = vst [vmem:[#allocation2 + $0x54] sm:$0xff] %v403
        %414 = vst [vmem:[#allocation2 + $0x5c] sm:$0xff] %v405
        %415 = vst [vmem:[#allocation2 + $0x64] sm:$0xff] %v407
        %416 = vst [vmem:[#allocation2 + $0x6c] sm:$0xf] %v408
        %v417 = vld [vmem:[%s287] sm:$0xff]
        %v418 = vld [vmem:[%s287 + $0x8] sm:$0xff]
        %v419 = vld [vmem:[%s287 + $0x10] sm:$0xff]
        %v420 = vld [vmem:[%s287 + $0x18] sm:$0xff]
        %425 = vrot.lane.b32.xlu0 %v417, 117
        %v426 = vpop.permute.xlu0 %425
        %427 = vrot.lane.b32.xlu0 %v418, 117
        %v428 = vpop.permute.xlu0 %427
        %429 = vrot.lane.b32.xlu0 %v419, 117
        %v430 = vpop.permute.xlu0 %429
        %431 = vrot.lane.b32.xlu0 %v420, 117
        %v432 = vpop.permute.xlu0 %431
        %v433 = vrot.slane %v426, 4
        %v434 = vrot.slane %v428, 4
        %v435 = vrot.slane %v430, 4
        %v436 = vrot.slane %v432, 4
        %v437 = vsel %vm328, %v433, %v434
        %vm438 = vcmask 957440
        %v439 = vsel %vm438, %v426, %v437
        %v440 = vsel %vm328, %v434, %v435
        %v441 = vsel %vm438, %v428, %v440
        %v442 = vsel %vm328, %v435, %v436
        %v443 = vsel %vm438, %v430, %v442
        %v444 = vsel %vm438, %v432, %v436
        %449 = vst [vmem:[#allocation2 + $0x70] sm:$0xff] %v439
        %450 = vst [vmem:[#allocation2 + $0x78] sm:$0xff] %v441
        %451 = vst [vmem:[#allocation2 + $0x80] sm:$0xff] %v443
        %452 = vst [vmem:[#allocation2 + $0x88] sm:$0xf] %v444
        %v453 = vld [vmem:[%s287] sm:$0xff]
        %v454 = vld [vmem:[%s287 + $0x8] sm:$0xff]
        %v455 = vld [vmem:[%s287 + $0x10] sm:$0xff]
        %v456 = vld [vmem:[%s287 + $0x18] sm:$0xff]
        %461 = vrot.lane.b32.xlu0 %v453, 116
        %v462 = vpop.permute.xlu0 %461
        %463 = vrot.lane.b32.xlu0 %v454, 116
        %v464 = vpop.permute.xlu0 %463
        %465 = vrot.lane.b32.xlu0 %v455, 116
        %v466 = vpop.permute.xlu0 %465
        %467 = vrot.lane.b32.xlu0 %v456, 116
        %v468 = vpop.permute.xlu0 %467
        %v469 = vrot.slane %v462, 4
        %v470 = vrot.slane %v464, 4
        %v471 = vrot.slane %v466, 4
        %v472 = vrot.slane %v468, 4
        %v473 = vsel %vm328, %v469, %v470
        %vm474 = vcmask 949248
        %v475 = vsel %vm474, %v462, %v473
        %v476 = vsel %vm328, %v470, %v471
        %v477 = vsel %vm474, %v464, %v476
        %v478 = vsel %vm328, %v471, %v472
        %v479 = vsel %vm474, %v466, %v478
        %v480 = vsel %vm474, %v468, %v472
        %485 = vst [vmem:[#allocation2 + $0x8c] sm:$0xff] %v475
        %486 = vst [vmem:[#allocation2 + $0x94] sm:$0xff] %v477
        %487 = vst [vmem:[#allocation2 + $0x9c] sm:$0xff] %v479
        %488 = vst [vmem:[#allocation2 + $0xa4] sm:$0xf] %v480
        %v489 = vld [vmem:[%s287] sm:$0xff]
        %v490 = vld [vmem:[%s287 + $0x8] sm:$0xff]
        %v491 = vld [vmem:[%s287 + $0x10] sm:$0xff]
        %v492 = vld [vmem:[%s287 + $0x18] sm:$0xff]
        %497 = vrot.lane.b32.xlu0 %v489, 108
        %v498 = vpop.permute.xlu0 %497
        %499 = vrot.lane.b32.xlu0 %v490, 108
        %v500 = vpop.permute.xlu0 %499
        %501 = vrot.lane.b32.xlu0 %v491, 108
        %v502 = vpop.permute.xlu0 %501
        %503 = vrot.lane.b32.xlu0 %v492, 108
        %v504 = vpop.permute.xlu0 %503
        %v505 = vrot.slane %v498, 4
        %v506 = vrot.slane %v500, 4
        %v507 = vrot.slane %v502, 4
        %v508 = vrot.slane %v504, 4
        %v509 = vsel %vm328, %v505, %v506
        %vm510 = vcmask 883712
        %v511 = vsel %vm510, %v498, %v509
        %v512 = vsel %vm328, %v506, %v507
        %v513 = vsel %vm510, %v500, %v512
        %v514 = vsel %vm328, %v507, %v508
        %v515 = vsel %vm510, %v502, %v514
        %v516 = vsel %vm510, %v504, %v508
        %521 = vst [vmem:[#allocation2 + $0xa8] sm:$0xff] %v511
        %522 = vst [vmem:[#allocation2 + $0xb0] sm:$0xff] %v513
        %523 = vst [vmem:[#allocation2 + $0xb8] sm:$0xff] %v515
        %524 = vst [vmem:[#allocation2 + $0xc0] sm:$0xf] %v516
        %v525 = vld [vmem:[%s287] sm:$0xff]
        %v526 = vld [vmem:[%s287 + $0x8] sm:$0xff]
        %v527 = vld [vmem:[%s287 + $0x10] sm:$0xff]
        %v528 = vld [vmem:[%s287 + $0x18] sm:$0xff]
        %533 = vrot.lane.b32.xlu0 %v525, 107
        %v534 = vpop.permute.xlu0 %533
        %535 = vrot.lane.b32.xlu0 %v526, 107
        %v536 = vpop.permute.xlu0 %535
        %537 = vrot.lane.b32.xlu0 %v527, 107
        %v538 = vpop.permute.xlu0 %537
        %539 = vrot.lane.b32.xlu0 %v528, 107
        %v540 = vpop.permute.xlu0 %539
        %v541 = vrot.slane %v534, 4
        %v542 = vrot.slane %v536, 4
        %v543 = vrot.slane %v538, 4
        %v544 = vrot.slane %v540, 4
        %v545 = vsel %vm328, %v541, %v542
        %vm546 = vcmask 875520
        %v547 = vsel %vm546, %v534, %v545
        %v548 = vsel %vm328, %v542, %v543
        %v549 = vsel %vm546, %v536, %v548
        %v550 = vsel %vm328, %v543, %v544
        %v551 = vsel %vm546, %v538, %v550
        %v552 = vsel %vm546, %v540, %v544
        %557 = vst [vmem:[#allocation2 + $0xc4] sm:$0xff] %v547
        %558 = vst [vmem:[#allocation2 + $0xcc] sm:$0xff] %v549
        %559 = vst [vmem:[#allocation2 + $0xd4] sm:$0xff] %v551
        %560 = vst [vmem:[#allocation2 + $0xdc] sm:$0xf] %v552
        %v561 = vld [vmem:[%s287] sm:$0xff]
        %v562 = vld [vmem:[%s287 + $0x8] sm:$0xff]
        %v563 = vld [vmem:[%s287 + $0x10] sm:$0xff]
        %v564 = vld [vmem:[%s287 + $0x18] sm:$0xff]
        %569 = vrot.lane.b32.xlu0 %v561, 106
        %v570 = vpop.permute.xlu0 %569
        %571 = vrot.lane.b32.xlu0 %v562, 106
        %v572 = vpop.permute.xlu0 %571
        %573 = vrot.lane.b32.xlu0 %v563, 106
        %v574 = vpop.permute.xlu0 %573
        %575 = vrot.lane.b32.xlu0 %v564, 106
        %v576 = vpop.permute.xlu0 %575
        %v577 = vrot.slane %v570, 4
        %v578 = vrot.slane %v572, 4
        %v579 = vrot.slane %v574, 4
        %v580 = vrot.slane %v576, 4
        %v581 = vsel %vm328, %v577, %v578
        %vm582 = vcmask 867328
        %v583 = vsel %vm582, %v570, %v581
        %v584 = vsel %vm328, %v578, %v579
        %v585 = vsel %vm582, %v572, %v584
        %v586 = vsel %vm328, %v579, %v580
        %v587 = vsel %vm582, %v574, %v586
        %v588 = vsel %vm582, %v576, %v580
        %593 = vst [vmem:[#allocation2 + $0xe0] sm:$0xff] %v583
        %594 = vst [vmem:[#allocation2 + $0xe8] sm:$0xff] %v585
        %595 = vst [vmem:[#allocation2 + $0xf0] sm:$0xff] %v587
        %596 = vst [vmem:[#allocation2 + $0xf8] sm:$0xf] %v588
        %v597 = vld [vmem:[%s287] sm:$0xff]
        %v598 = vld [vmem:[%s287 + $0x8] sm:$0xff]
        %v599 = vld [vmem:[%s287 + $0x10] sm:$0xff]
        %v600 = vld [vmem:[%s287 + $0x18] sm:$0xff]
        %605 = vrot.lane.b32.xlu0 %v597, 28
        %v606 = vpop.permute.xlu0 %605
        %607 = vrot.lane.b32.xlu0 %v598, 28
        %v608 = vpop.permute.xlu0 %607
        %609 = vrot.lane.b32.xlu0 %v599, 28
        %v610 = vpop.permute.xlu0 %609
        %611 = vrot.lane.b32.xlu0 %v600, 28
        %v612 = vpop.permute.xlu0 %611
        %v613 = vrot.slane %v606, 4
        %v614 = vrot.slane %v608, 4
        %v615 = vrot.slane %v610, 4
        %v616 = vrot.slane %v612, 4
        %v617 = vsel %vm328, %v613, %v614
        %vm618 = vcmask 228352
        %v619 = vsel %vm618, %v606, %v617
        %v620 = vsel %vm328, %v614, %v615
        %v621 = vsel %vm618, %v608, %v620
        %v622 = vsel %vm328, %v615, %v616
        %v623 = vsel %vm618, %v610, %v622
        %v624 = vsel %vm618, %v612, %v616
        %629 = vst [vmem:[#allocation2 + $0xfc] sm:$0xff] %v619
        %630 = vst [vmem:[#allocation2 + $0x104] sm:$0xff] %v621
        %631 = vst [vmem:[#allocation2 + $0x10c] sm:$0xff] %v623
        %632 = vst [vmem:[#allocation2 + $0x114] sm:$0xf] %v624
        %v633 = vld [vmem:[%s287] sm:$0xff]
        %v634 = vld [vmem:[%s287 + $0x8] sm:$0xff]
        %v635 = vld [vmem:[%s287 + $0x10] sm:$0xff]
        %v636 = vld [vmem:[%s287 + $0x18] sm:$0xff]
        %641 = vrot.lane.b32.xlu0 %v633, 27
        %v642 = vpop.permute.xlu0 %641
        %643 = vrot.lane.b32.xlu0 %v634, 27
        %v644 = vpop.permute.xlu0 %643
        %645 = vrot.lane.b32.xlu0 %v635, 27
        %v646 = vpop.permute.xlu0 %645
        %647 = vrot.lane.b32.xlu0 %v636, 27
        %v648 = vpop.permute.xlu0 %647
        %v649 = vrot.slane %v642, 4
        %v650 = vrot.slane %v644, 4
        %v651 = vrot.slane %v646, 4
        %v652 = vrot.slane %v648, 4
        %v653 = vsel %vm328, %v649, %v650
        %vm654 = vcmask 220160
        %v655 = vsel %vm654, %v642, %v653
        %v656 = vsel %vm328, %v650, %v651
        %v657 = vsel %vm654, %v644, %v656
        %v658 = vsel %vm328, %v651, %v652
        %v659 = vsel %vm654, %v646, %v658
        %v660 = vsel %vm654, %v648, %v652
        %665 = vst [vmem:[#allocation2 + $0x118] sm:$0xff] %v655
        %666 = vst [vmem:[#allocation2 + $0x120] sm:$0xff] %v657
        %667 = vst [vmem:[#allocation2 + $0x128] sm:$0xff] %v659
        %668 = vst [vmem:[#allocation2 + $0x130] sm:$0xf] %v660
        %v669 = vld [vmem:[%s287] sm:$0xff]
        %v670 = vld [vmem:[%s287 + $0x8] sm:$0xff]
        %v671 = vld [vmem:[%s287 + $0x10] sm:$0xff]
        %v672 = vld [vmem:[%s287 + $0x18] sm:$0xff]
        %677 = vrot.lane.b32.xlu0 %v669, 26
        %v678 = vpop.permute.xlu0 %677
        %679 = vrot.lane.b32.xlu0 %v670, 26
        %v680 = vpop.permute.xlu0 %679
        %681 = vrot.lane.b32.xlu0 %v671, 26
        %v682 = vpop.permute.xlu0 %681
        %683 = vrot.lane.b32.xlu0 %v672, 26
        %v684 = vpop.permute.xlu0 %683
        %v685 = vrot.slane %v678, 4
        %v686 = vrot.slane %v680, 4
        %v687 = vrot.slane %v682, 4
        %v688 = vrot.slane %v684, 4
        %v689 = vsel %vm328, %v685, %v686
        %vm690 = vcmask 211968
        %v691 = vsel %vm690, %v678, %v689
        %v692 = vsel %vm328, %v686, %v687
        %v693 = vsel %vm690, %v680, %v692
        %v694 = vsel %vm328, %v687, %v688
        %v695 = vsel %vm690, %v682, %v694
        %v696 = vsel %vm690, %v684, %v688
        %701 = vst [vmem:[#allocation2 + $0x134] sm:$0xff] %v691
        %702 = vst [vmem:[#allocation2 + $0x13c] sm:$0xff] %v693
        %703 = vst [vmem:[#allocation2 + $0x144] sm:$0xff] %v695
        %704 = vst [vmem:[#allocation2 + $0x14c] sm:$0xf] %v696
        %v705 = vld [vmem:[%s287] sm:$0xff]
        %v706 = vld [vmem:[%s287 + $0x8] sm:$0xff]
        %v707 = vld [vmem:[%s287 + $0x10] sm:$0xff]
        %v708 = vld [vmem:[%s287 + $0x18] sm:$0xff]
        %713 = vrot.lane.b32.xlu0 %v705, 18
        %v714 = vpop.permute.xlu0 %713
        %715 = vrot.lane.b32.xlu0 %v706, 18
        %v716 = vpop.permute.xlu0 %715
        %717 = vrot.lane.b32.xlu0 %v707, 18
        %v718 = vpop.permute.xlu0 %717
        %719 = vrot.lane.b32.xlu0 %v708, 18
        %v720 = vpop.permute.xlu0 %719
        %v721 = vrot.slane %v714, 4
        %v722 = vrot.slane %v716, 4
        %v723 = vrot.slane %v718, 4
        %v724 = vrot.slane %v720, 4
        %v725 = vsel %vm328, %v721, %v722
        %vm726 = vcmask 146432
        %v727 = vsel %vm726, %v714, %v725
        %v728 = vsel %vm328, %v722, %v723
        %v729 = vsel %vm726, %v716, %v728
        %v730 = vsel %vm328, %v723, %v724
        %v731 = vsel %vm726, %v718, %v730
        %v732 = vsel %vm726, %v720, %v724
        %737 = vst [vmem:[#allocation2 + $0x150] sm:$0xff] %v727
        %738 = vst [vmem:[#allocation2 + $0x158] sm:$0xff] %v729
        %739 = vst [vmem:[#allocation2 + $0x160] sm:$0xff] %v731
        %740 = vst [vmem:[#allocation2 + $0x168] sm:$0xf] %v732
        %v741 = vld [vmem:[%s287] sm:$0xff]
        %v742 = vld [vmem:[%s287 + $0x8] sm:$0xff]
        %v743 = vld [vmem:[%s287 + $0x10] sm:$0xff]
        %v744 = vld [vmem:[%s287 + $0x18] sm:$0xff]
        %749 = vrot.lane.b32.xlu0 %v741, 17
        %v750 = vpop.permute.xlu0 %749
        %751 = vrot.lane.b32.xlu0 %v742, 17
        %v752 = vpop.permute.xlu0 %751
        %753 = vrot.lane.b32.xlu0 %v743, 17
        %v754 = vpop.permute.xlu0 %753
        %755 = vrot.lane.b32.xlu0 %v744, 17
        %v756 = vpop.permute.xlu0 %755
        %v757 = vrot.slane %v750, 4
        %v758 = vrot.slane %v752, 4
        %v759 = vrot.slane %v754, 4
        %v760 = vrot.slane %v756, 4
        %v761 = vsel %vm328, %v757, %v758
        %vm762 = vcmask 138240
        %v763 = vsel %vm762, %v750, %v761
        %v764 = vsel %vm328, %v758, %v759
        %v765 = vsel %vm762, %v752, %v764
        %v766 = vsel %vm328, %v759, %v760
        %v767 = vsel %vm762, %v754, %v766
        %v768 = vsel %vm762, %v756, %v760
        %773 = vst [vmem:[#allocation2 + $0x16c] sm:$0xff] %v763
        %774 = vst [vmem:[#allocation2 + $0x174] sm:$0xff] %v765
        %775 = vst [vmem:[#allocation2 + $0x17c] sm:$0xff] %v767
        %776 = vst [vmem:[#allocation2 + $0x184] sm:$0xf] %v768
        %v777 = vld [vmem:[%s287] sm:$0xff]
        %v778 = vld [vmem:[%s287 + $0x8] sm:$0xff]
        %v779 = vld [vmem:[%s287 + $0x10] sm:$0xff]
        %v780 = vld [vmem:[%s287 + $0x18] sm:$0xff]
        %785 = vrot.lane.b32.xlu0 %v777, 16
        %v786 = vpop.permute.xlu0 %785
        %787 = vrot.lane.b32.xlu0 %v778, 16
        %v788 = vpop.permute.xlu0 %787
        %789 = vrot.lane.b32.xlu0 %v779, 16
        %v790 = vpop.permute.xlu0 %789
        %791 = vrot.lane.b32.xlu0 %v780, 16
        %v792 = vpop.permute.xlu0 %791
        %v793 = vrot.slane %v786, 4
        %v794 = vrot.slane %v788, 4
        %v795 = vrot.slane %v790, 4
        %v796 = vrot.slane %v792, 4
        %v797 = vsel %vm328, %v793, %v794
        %vm798 = vcmask 130048
        %v799 = vsel %vm798, %v786, %v797
        %v800 = vsel %vm328, %v794, %v795
        %v801 = vsel %vm798, %v788, %v800
        %v802 = vsel %vm328, %v795, %v796
        %v803 = vsel %vm798, %v790, %v802
        %v804 = vsel %vm798, %v792, %v796
        %809 = vst [vmem:[#allocation2 + $0x188] sm:$0xff] %v799
        %810 = vst [vmem:[#allocation2 + $0x190] sm:$0xff] %v801
        %811 = vst [vmem:[#allocation2 + $0x198] sm:$0xff] %v803
        %812 = vst [vmem:[#allocation2 + $0x1a0] sm:$0xf] %v804
        %v813 = vld [vmem:[%s287] sm:$0xff]
        %v814 = vld [vmem:[%s287 + $0x8] sm:$0xff]
        %v815 = vld [vmem:[%s287 + $0x10] sm:$0xff]
        %v816 = vld [vmem:[%s287 + $0x18] sm:$0xff]
        %821 = vrot.lane.b32.xlu0 %v813, 8
        %v822 = vpop.permute.xlu0 %821
        %823 = vrot.lane.b32.xlu0 %v814, 8
        %v824 = vpop.permute.xlu0 %823
        %825 = vrot.lane.b32.xlu0 %v815, 8
        %v826 = vpop.permute.xlu0 %825
        %827 = vrot.lane.b32.xlu0 %v816, 8
        %v828 = vpop.permute.xlu0 %827
        %v829 = vrot.slane %v822, 4
        %v830 = vrot.slane %v824, 4
        %v831 = vrot.slane %v826, 4
        %v832 = vrot.slane %v828, 4
        %v833 = vsel %vm328, %v829, %v830
        %vm834 = vcmask 64512
        %v835 = vsel %vm834, %v822, %v833
        %v836 = vsel %vm328, %v830, %v831
        %v837 = vsel %vm834, %v824, %v836
        %v838 = vsel %vm328, %v831, %v832
        %v839 = vsel %vm834, %v826, %v838
        %v840 = vsel %vm834, %v828, %v832
        %845 = vst [vmem:[#allocation2 + $0x1a4] sm:$0xff] %v835
        %846 = vst [vmem:[#allocation2 + $0x1ac] sm:$0xff] %v837
        %847 = vst [vmem:[#allocation2 + $0x1b4] sm:$0xff] %v839
        %848 = vst [vmem:[#allocation2 + $0x1bc] sm:$0xf] %v840
        %v849 = vld [vmem:[%s287] sm:$0xff]
        %v850 = vld [vmem:[%s287 + $0x8] sm:$0xff]
        %v851 = vld [vmem:[%s287 + $0x10] sm:$0xff]
        %v852 = vld [vmem:[%s287 + $0x18] sm:$0xff]
        %857 = vrot.lane.b32.xlu0 %v849, 7
        %v858 = vpop.permute.xlu0 %857
        %859 = vrot.lane.b32.xlu0 %v850, 7
        %v860 = vpop.permute.xlu0 %859
        %861 = vrot.lane.b32.xlu0 %v851, 7
        %v862 = vpop.permute.xlu0 %861
        %863 = vrot.lane.b32.xlu0 %v852, 7
        %v864 = vpop.permute.xlu0 %863
        %v865 = vrot.slane %v858, 4
        %v866 = vrot.slane %v860, 4
        %v867 = vrot.slane %v862, 4
        %v868 = vrot.slane %v864, 4
        %v869 = vsel %vm328, %v865, %v866
        %vm870 = vcmask 56320
        %v871 = vsel %vm870, %v858, %v869
        %v872 = vsel %vm328, %v866, %v867
        %v873 = vsel %vm870, %v860, %v872
        %v874 = vsel %vm328, %v867, %v868
        %v875 = vsel %vm870, %v862, %v874
        %v876 = vsel %vm870, %v864, %v868
        %881 = vst [vmem:[#allocation2 + $0x1c0] sm:$0xff] %v871
        %882 = vst [vmem:[#allocation2 + $0x1c8] sm:$0xff] %v873
        %883 = vst [vmem:[#allocation2 + $0x1d0] sm:$0xff] %v875
        %884 = vst [vmem:[#allocation2 + $0x1d8] sm:$0xf] %v876
        %v885 = vld [vmem:[%s287] sm:$0xff]
        %v886 = vld [vmem:[%s287 + $0x8] sm:$0xff]
        %v887 = vld [vmem:[%s287 + $0x10] sm:$0xff]
        %v888 = vld [vmem:[%s287 + $0x18] sm:$0xff]
        %893 = vrot.lane.b32.xlu0 %v885, 6
        %v894 = vpop.permute.xlu0 %893
        %895 = vrot.lane.b32.xlu0 %v886, 6
        %v896 = vpop.permute.xlu0 %895
        %897 = vrot.lane.b32.xlu0 %v887, 6
        %v898 = vpop.permute.xlu0 %897
        %899 = vrot.lane.b32.xlu0 %v888, 6
        %v900 = vpop.permute.xlu0 %899
        %v901 = vrot.slane %v894, 4
        %v902 = vrot.slane %v896, 4
        %v903 = vrot.slane %v898, 4
        %v904 = vrot.slane %v900, 4
        %v905 = vsel %vm328, %v901, %v902
        %vm906 = vcmask 48128
        %v907 = vsel %vm906, %v894, %v905
        %v908 = vsel %vm328, %v902, %v903
        %v909 = vsel %vm906, %v896, %v908
        %v910 = vsel %vm328, %v903, %v904
        %v911 = vsel %vm906, %v898, %v910
        %v912 = vsel %vm906, %v900, %v904
        %917 = vst [vmem:[#allocation2 + $0x1dc] sm:$0xff] %v907
        %918 = vst [vmem:[#allocation2 + $0x1e4] sm:$0xff] %v909
        %919 = vst [vmem:[#allocation2 + $0x1ec] sm:$0xff] %v911
        %920 = vst [vmem:[#allocation2 + $0x1f4] sm:$0xf] %v912
        %v921 = vld [vmem:[%s287 + $0x4] sm:$0xff]
        %v922 = vld [vmem:[%s287 + $0xc] sm:$0xff]
        %v923 = vld [vmem:[%s287 + $0x14] sm:$0xff]
        %v924 = vld [vmem:[%s287 + $0x1c] sm:$0xff]
        %929 = vrot.lane.b32.xlu0 %v921, 56
        %v930 = vpop.permute.xlu0 %929
        %931 = vrot.lane.b32.xlu0 %v922, 56
        %v932 = vpop.permute.xlu0 %931
        %933 = vrot.lane.b32.xlu0 %v923, 56
        %v934 = vpop.permute.xlu0 %933
        %935 = vrot.lane.b32.xlu0 %v924, 56
        %v936 = vpop.permute.xlu0 %935
        %v937 = vrot.slane %v930, 4
        %v938 = vrot.slane %v932, 4
        %v939 = vrot.slane %v934, 4
        %v940 = vrot.slane %v936, 4
        %v941 = vsel %vm328, %v937, %v938
        %vm942 = vcmask 457728
        %v943 = vsel %vm942, %v930, %v941
        %v944 = vsel %vm328, %v938, %v939
        %v945 = vsel %vm942, %v932, %v944
        %v946 = vsel %vm328, %v939, %v940
        %v947 = vsel %vm942, %v934, %v946
        %v948 = vsel %vm942, %v936, %v940
        %953 = vst [vmem:[#allocation2 + $0x1f8] sm:$0xff] %v943
        %954 = vst [vmem:[#allocation2 + $0x200] sm:$0xff] %v945
        %955 = vst [vmem:[#allocation2 + $0x208] sm:$0xff] %v947
        %956 = vst [vmem:[#allocation2 + $0x210] sm:$0xf] %v948
        %v957 = vld [vmem:[%s287 + $0x4] sm:$0xff]
        %v958 = vld [vmem:[%s287 + $0xc] sm:$0xff]
        %v959 = vld [vmem:[%s287 + $0x14] sm:$0xff]
        %v960 = vld [vmem:[%s287 + $0x1c] sm:$0xff]
        %965 = vrot.lane.b32.xlu0 %v957, 55
        %v966 = vpop.permute.xlu0 %965
        %967 = vrot.lane.b32.xlu0 %v958, 55
        %v968 = vpop.permute.xlu0 %967
        %969 = vrot.lane.b32.xlu0 %v959, 55
        %v970 = vpop.permute.xlu0 %969
        %971 = vrot.lane.b32.xlu0 %v960, 55
        %v972 = vpop.permute.xlu0 %971
        %v973 = vrot.slane %v966, 4
        %v974 = vrot.slane %v968, 4
        %v975 = vrot.slane %v970, 4
        %v976 = vrot.slane %v972, 4
        %v977 = vsel %vm328, %v973, %v974
        %vm978 = vcmask 449536
        %v979 = vsel %vm978, %v966, %v977
        %v980 = vsel %vm328, %v974, %v975
        %v981 = vsel %vm978, %v968, %v980
        %v982 = vsel %vm328, %v975, %v976
        %v983 = vsel %vm978, %v970, %v982
        %v984 = vsel %vm978, %v972, %v976
        %989 = vst [vmem:[#allocation2 + $0x214] sm:$0xff] %v979
        %990 = vst [vmem:[#allocation2 + $0x21c] sm:$0xff] %v981
        %991 = vst [vmem:[#allocation2 + $0x224] sm:$0xff] %v983
        %992 = vst [vmem:[#allocation2 + $0x22c] sm:$0xf] %v984
        %v993 = vld [vmem:[%s287 + $0x4] sm:$0xff]
        %v994 = vld [vmem:[%s287 + $0xc] sm:$0xff]
        %v995 = vld [vmem:[%s287 + $0x14] sm:$0xff]
        %v996 = vld [vmem:[%s287 + $0x1c] sm:$0xff]
        %1001 = vrot.lane.b32.xlu0 %v993, 54
        %v1002 = vpop.permute.xlu0 %1001
        %1003 = vrot.lane.b32.xlu0 %v994, 54
        %v1004 = vpop.permute.xlu0 %1003
        %1005 = vrot.lane.b32.xlu0 %v995, 54
        %v1006 = vpop.permute.xlu0 %1005
        %1007 = vrot.lane.b32.xlu0 %v996, 54
        %v1008 = vpop.permute.xlu0 %1007
        %v1009 = vrot.slane %v1002, 4
        %v1010 = vrot.slane %v1004, 4
        %v1011 = vrot.slane %v1006, 4
        %v1012 = vrot.slane %v1008, 4
        %v1013 = vsel %vm328, %v1009, %v1010
        %vm1014 = vcmask 441344
        %v1015 = vsel %vm1014, %v1002, %v1013
        %v1016 = vsel %vm328, %v1010, %v1011
        %v1017 = vsel %vm1014, %v1004, %v1016
        %v1018 = vsel %vm328, %v1011, %v1012
        %v1019 = vsel %vm1014, %v1006, %v1018
        %v1020 = vsel %vm1014, %v1008, %v1012
        %1025 = vst [vmem:[#allocation2 + $0x230] sm:$0xff] %v1015
        %1026 = vst [vmem:[#allocation2 + $0x238] sm:$0xff] %v1017
        %1027 = vst [vmem:[#allocation2 + $0x240] sm:$0xff] %v1019
        %1028 = vst [vmem:[#allocation2 + $0x248] sm:$0xf] %v1020
        %v1029 = vld [vmem:[%s287 + $0x4] sm:$0xff]
        %v1030 = vld [vmem:[%s287 + $0xc] sm:$0xff]
        %v1031 = vld [vmem:[%s287 + $0x14] sm:$0xff]
        %v1032 = vld [vmem:[%s287 + $0x1c] sm:$0xff]
        %1037 = vrot.lane.b32.xlu0 %v1029, 46
        %v1038 = vpop.permute.xlu0 %1037
        %1039 = vrot.lane.b32.xlu0 %v1030, 46
        %v1040 = vpop.permute.xlu0 %1039
        %1041 = vrot.lane.b32.xlu0 %v1031, 46
        %v1042 = vpop.permute.xlu0 %1041
        %1043 = vrot.lane.b32.xlu0 %v1032, 46
        %v1044 = vpop.permute.xlu0 %1043
        %v1045 = vrot.slane %v1038, 4
        %v1046 = vrot.slane %v1040, 4
        %v1047 = vrot.slane %v1042, 4
        %v1048 = vrot.slane %v1044, 4
        %v1049 = vsel %vm328, %v1045, %v1046
        %vm1050 = vcmask 375808
        %v1051 = vsel %vm1050, %v1038, %v1049
        %v1052 = vsel %vm328, %v1046, %v1047
        %v1053 = vsel %vm1050, %v1040, %v1052
        %v1054 = vsel %vm328, %v1047, %v1048
        %v1055 = vsel %vm1050, %v1042, %v1054
        %v1056 = vsel %vm1050, %v1044, %v1048
        %1061 = vst [vmem:[#allocation2 + $0x24c] sm:$0xff] %v1051
        %1062 = vst [vmem:[#allocation2 + $0x254] sm:$0xff] %v1053
        %1063 = vst [vmem:[#allocation2 + $0x25c] sm:$0xff] %v1055
        %1064 = vst [vmem:[#allocation2 + $0x264] sm:$0xf] %v1056
        %v1065 = vld [vmem:[%s287 + $0x4] sm:$0xff]
        %v1066 = vld [vmem:[%s287 + $0xc] sm:$0xff]
        %v1067 = vld [vmem:[%s287 + $0x14] sm:$0xff]
        %v1068 = vld [vmem:[%s287 + $0x1c] sm:$0xff]
        %1073 = vrot.lane.b32.xlu0 %v1065, 45
        %v1074 = vpop.permute.xlu0 %1073
        %1075 = vrot.lane.b32.xlu0 %v1066, 45
        %v1076 = vpop.permute.xlu0 %1075
        %1077 = vrot.lane.b32.xlu0 %v1067, 45
        %v1078 = vpop.permute.xlu0 %1077
        %1079 = vrot.lane.b32.xlu0 %v1068, 45
        %v1080 = vpop.permute.xlu0 %1079
        %v1081 = vrot.slane %v1074, 4
        %v1082 = vrot.slane %v1076, 4
        %v1083 = vrot.slane %v1078, 4
        %v1084 = vrot.slane %v1080, 4
        %v1085 = vsel %vm328, %v1081, %v1082
        %vm1086 = vcmask 367616
        %v1087 = vsel %vm1086, %v1074, %v1085
        %v1088 = vsel %vm328, %v1082, %v1083
        %v1089 = vsel %vm1086, %v1076, %v1088
        %v1090 = vsel %vm328, %v1083, %v1084
        %v1091 = vsel %vm1086, %v1078, %v1090
        %v1092 = vsel %vm1086, %v1080, %v1084
        %1097 = vst [vmem:[#allocation2 + $0x268] sm:$0xff] %v1087
        %1098 = vst [vmem:[#allocation2 + $0x270] sm:$0xff] %v1089
        %1099 = vst [vmem:[#allocation2 + $0x278] sm:$0xff] %v1091
        %1100 = vst [vmem:[#allocation2 + $0x280] sm:$0xf] %v1092
        %v1101 = vld [vmem:[%s287 + $0x4] sm:$0xff]
        %v1102 = vld [vmem:[%s287 + $0xc] sm:$0xff]
        %v1103 = vld [vmem:[%s287 + $0x14] sm:$0xff]
        %v1104 = vld [vmem:[%s287 + $0x1c] sm:$0xff]
        %1109 = vrot.lane.b32.xlu0 %v1101, 44
        %v1110 = vpop.permute.xlu0 %1109
        %1111 = vrot.lane.b32.xlu0 %v1102, 44
        %v1112 = vpop.permute.xlu0 %1111
        %1113 = vrot.lane.b32.xlu0 %v1103, 44
        %v1114 = vpop.permute.xlu0 %1113
        %1115 = vrot.lane.b32.xlu0 %v1104, 44
        %v1116 = vpop.permute.xlu0 %1115
        %v1117 = vrot.slane %v1110, 4
        %v1118 = vrot.slane %v1112, 4
        %v1119 = vrot.slane %v1114, 4
        %v1120 = vrot.slane %v1116, 4
        %v1121 = vsel %vm328, %v1117, %v1118
        %vm1122 = vcmask 359424
        %v1123 = vsel %vm1122, %v1110, %v1121
        %v1124 = vsel %vm328, %v1118, %v1119
        %v1125 = vsel %vm1122, %v1112, %v1124
        %v1126 = vsel %vm328, %v1119, %v1120
        %v1127 = vsel %vm1122, %v1114, %v1126
        %v1128 = vsel %vm1122, %v1116, %v1120
        %1133 = vst [vmem:[#allocation2 + $0x284] sm:$0xff] %v1123
        %1134 = vst [vmem:[#allocation2 + $0x28c] sm:$0xff] %v1125
        %1135 = vst [vmem:[#allocation2 + $0x294] sm:$0xff] %v1127
        %1136 = vst [vmem:[#allocation2 + $0x29c] sm:$0xf] %v1128
        %v1137 = vld [vmem:[%s287 + $0x4] sm:$0xff]
        %v1138 = vld [vmem:[%s287 + $0xc] sm:$0xff]
        %v1139 = vld [vmem:[%s287 + $0x14] sm:$0xff]
        %v1140 = vld [vmem:[%s287 + $0x1c] sm:$0xff]
        %1145 = vrot.lane.b32.xlu0 %v1137, 36
        %v1146 = vpop.permute.xlu0 %1145
        %1147 = vrot.lane.b32.xlu0 %v1138, 36
        %v1148 = vpop.permute.xlu0 %1147
        %1149 = vrot.lane.b32.xlu0 %v1139, 36
        %v1150 = vpop.permute.xlu0 %1149
        %1151 = vrot.lane.b32.xlu0 %v1140, 36
        %v1152 = vpop.permute.xlu0 %1151
        %v1153 = vrot.slane %v1146, 4
        %v1154 = vrot.slane %v1148, 4
        %v1155 = vrot.slane %v1150, 4
        %v1156 = vrot.slane %v1152, 4
        %v1157 = vsel %vm328, %v1153, %v1154
        %vm1158 = vcmask 293888
        %v1159 = vsel %vm1158, %v1146, %v1157
        %v1160 = vsel %vm328, %v1154, %v1155
        %v1161 = vsel %vm1158, %v1148, %v1160
        %v1162 = vsel %vm328, %v1155, %v1156
        %v1163 = vsel %vm1158, %v1150, %v1162
        %v1164 = vsel %vm1158, %v1152, %v1156
        %1169 = vst [vmem:[#allocation2 + $0x2a0] sm:$0xff] %v1159
        %1170 = vst [vmem:[#allocation2 + $0x2a8] sm:$0xff] %v1161
        %1171 = vst [vmem:[#allocation2 + $0x2b0] sm:$0xff] %v1163
        %1172 = vst [vmem:[#allocation2 + $0x2b8] sm:$0xf] %v1164
        %v1173 = vld [vmem:[%s287 + $0x4] sm:$0xff]
        %v1174 = vld [vmem:[%s287 + $0xc] sm:$0xff]
        %v1175 = vld [vmem:[%s287 + $0x14] sm:$0xff]
        %v1176 = vld [vmem:[%s287 + $0x1c] sm:$0xff]
        %1181 = vrot.lane.b32.xlu0 %v1173, 35
        %v1182 = vpop.permute.xlu0 %1181
        %1183 = vrot.lane.b32.xlu0 %v1174, 35
        %v1184 = vpop.permute.xlu0 %1183
        %1185 = vrot.lane.b32.xlu0 %v1175, 35
        %v1186 = vpop.permute.xlu0 %1185
        %1187 = vrot.lane.b32.xlu0 %v1176, 35
        %v1188 = vpop.permute.xlu0 %1187
        %v1189 = vrot.slane %v1182, 4
        %v1190 = vrot.slane %v1184, 4
        %v1191 = vrot.slane %v1186, 4
        %v1192 = vrot.slane %v1188, 4
        %v1193 = vsel %vm328, %v1189, %v1190
        %vm1194 = vcmask 285696
        %v1195 = vsel %vm1194, %v1182, %v1193
        %v1196 = vsel %vm328, %v1190, %v1191
        %v1197 = vsel %vm1194, %v1184, %v1196
        %v1198 = vsel %vm328, %v1191, %v1192
        %v1199 = vsel %vm1194, %v1186, %v1198
        %v1200 = vsel %vm1194, %v1188, %v1192
        %1205 = vst [vmem:[#allocation2 + $0x2bc] sm:$0xff] %v1195
        %1206 = vst [vmem:[#allocation2 + $0x2c4] sm:$0xff] %v1197
        %1207 = vst [vmem:[#allocation2 + $0x2cc] sm:$0xff] %v1199
        %1208 = vst [vmem:[#allocation2 + $0x2d4] sm:$0xf] %v1200
        %v1209 = vld [vmem:[%s287 + $0x4] sm:$0xff]
        %v1210 = vld [vmem:[%s287 + $0xc] sm:$0xff]
        %v1211 = vld [vmem:[%s287 + $0x14] sm:$0xff]
        %v1212 = vld [vmem:[%s287 + $0x1c] sm:$0xff]
        %1217 = vrot.lane.b32.xlu0 %v1209, 34
        %v1218 = vpop.permute.xlu0 %1217
        %1219 = vrot.lane.b32.xlu0 %v1210, 34
        %v1220 = vpop.permute.xlu0 %1219
        %1221 = vrot.lane.b32.xlu0 %v1211, 34
        %v1222 = vpop.permute.xlu0 %1221
        %1223 = vrot.lane.b32.xlu0 %v1212, 34
        %v1224 = vpop.permute.xlu0 %1223
        %v1225 = vrot.slane %v1218, 4
        %v1226 = vrot.slane %v1220, 4
        %v1227 = vrot.slane %v1222, 4
        %v1228 = vrot.slane %v1224, 4
        %v1229 = vsel %vm328, %v1225, %v1226
        %vm1230 = vcmask 277504
        %v1231 = vsel %vm1230, %v1218, %v1229
        %v1232 = vsel %vm328, %v1226, %v1227
        %v1233 = vsel %vm1230, %v1220, %v1232
        %v1234 = vsel %vm328, %v1227, %v1228
        %v1235 = vsel %vm1230, %v1222, %v1234
        %v1236 = vsel %vm1230, %v1224, %v1228
        %1241 = vst [vmem:[#allocation2 + $0x2d8] sm:$0xff] %v1231
        %1242 = vst [vmem:[#allocation2 + $0x2e0] sm:$0xff] %v1233
        %1243 = vst [vmem:[#allocation2 + $0x2e8] sm:$0xff] %v1235
        %1244 = vst [vmem:[#allocation2 + $0x2f0] sm:$0xf] %v1236
        %v1245 = vld [vmem:[%s1] sm:$0xff]
        %v1246 = vld [vmem:[%s1 + $0x8] sm:$0xff]
        %v1247 = vld [vmem:[#allocation2] sm:$0xff]
        %v1248 = vld [vmem:[#allocation2 + $0x8] sm:$0xff]
        %v1249 = vld [vmem:[#allocation2 + $0x10] sm:$0xff]
        %v1250 = vld [vmem:[#allocation2 + $0x18] sm:$0xf]
        %v1251 = vld [vmem:[#allocation2 + $0x1c] sm:$0xff]
        %v1252 = vld [vmem:[#allocation2 + $0x24] sm:$0xff]
        %v1253 = vld [vmem:[#allocation2 + $0x2c] sm:$0xff]
        %v1254 = vld [vmem:[#allocation2 + $0x34] sm:$0xf]
        %v1255 = vld [vmem:[#allocation2 + $0x38] sm:$0xff]
        %v1256 = vld [vmem:[#allocation2 + $0x40] sm:$0xff]
        %v1257 = vld [vmem:[#allocation2 + $0x48] sm:$0xff]
        %v1258 = vld [vmem:[#allocation2 + $0x50] sm:$0xf]
        %v1259 = vld [vmem:[#allocation2 + $0x54] sm:$0xff]
        %v1260 = vld [vmem:[#allocation2 + $0x5c] sm:$0xff]
        %v1261 = vld [vmem:[#allocation2 + $0x64] sm:$0xff]
        %v1262 = vld [vmem:[#allocation2 + $0x6c] sm:$0xf]
        %v1263 = vld [vmem:[#allocation2 + $0x70] sm:$0xff]
        %v1264 = vld [vmem:[#allocation2 + $0x78] sm:$0xff]
        %v1265 = vld [vmem:[#allocation2 + $0x80] sm:$0xff]
        %v1266 = vld [vmem:[#allocation2 + $0x88] sm:$0xf]
        %v1267 = vld [vmem:[#allocation2 + $0x8c] sm:$0xff]
        %v1268 = vld [vmem:[#allocation2 + $0x94] sm:$0xff]
        %v1269 = vld [vmem:[#allocation2 + $0x9c] sm:$0xff]
        %v1270 = vld [vmem:[#allocation2 + $0xa4] sm:$0xf]
        %v1271 = vld [vmem:[#allocation2 + $0xa8] sm:$0xff]
        %v1272 = vld [vmem:[#allocation2 + $0xb0] sm:$0xff]
        %v1273 = vld [vmem:[#allocation2 + $0xb8] sm:$0xff]
        %v1274 = vld [vmem:[#allocation2 + $0xc0] sm:$0xf]
        %v1275 = vld [vmem:[#allocation2 + $0xc4] sm:$0xff]
        %v1276 = vld [vmem:[#allocation2 + $0xcc] sm:$0xff]
        %v1277 = vld [vmem:[#allocation2 + $0xd4] sm:$0xff]
        %v1278 = vld [vmem:[#allocation2 + $0xdc] sm:$0xf]
        %v1279 = vld [vmem:[#allocation2 + $0xe0] sm:$0xff]
        %v1280 = vld [vmem:[#allocation2 + $0xe8] sm:$0xff]
        %v1281 = vld [vmem:[#allocation2 + $0xf0] sm:$0xff]
        %v1282 = vld [vmem:[#allocation2 + $0xf8] sm:$0xf]
        %v1283 = vld [vmem:[#allocation2 + $0xfc] sm:$0xff]
        %v1284 = vld [vmem:[#allocation2 + $0x104] sm:$0xff]
        %v1285 = vld [vmem:[#allocation2 + $0x10c] sm:$0xff]
        %v1286 = vld [vmem:[#allocation2 + $0x114] sm:$0xf]
        %v1287 = vld [vmem:[#allocation2 + $0x118] sm:$0xff]
        %v1288 = vld [vmem:[#allocation2 + $0x120] sm:$0xff]
        %v1289 = vld [vmem:[#allocation2 + $0x128] sm:$0xff]
        %v1290 = vld [vmem:[#allocation2 + $0x130] sm:$0xf]
        %v1291 = vld [vmem:[#allocation2 + $0x134] sm:$0xff]
        %v1292 = vld [vmem:[#allocation2 + $0x13c] sm:$0xff]
        %v1293 = vld [vmem:[#allocation2 + $0x144] sm:$0xff]
        %v1294 = vld [vmem:[#allocation2 + $0x14c] sm:$0xf]
        %v1295 = vld [vmem:[#allocation2 + $0x150] sm:$0xff]
        %v1296 = vld [vmem:[#allocation2 + $0x158] sm:$0xff]
        %v1297 = vld [vmem:[#allocation2 + $0x160] sm:$0xff]
        %v1298 = vld [vmem:[#allocation2 + $0x168] sm:$0xf]
        %v1299 = vld [vmem:[#allocation2 + $0x16c] sm:$0xff]
        %v1300 = vld [vmem:[#allocation2 + $0x174] sm:$0xff]
        %v1301 = vld [vmem:[#allocation2 + $0x17c] sm:$0xff]
        %v1302 = vld [vmem:[#allocation2 + $0x184] sm:$0xf]
        %v1303 = vld [vmem:[#allocation2 + $0x188] sm:$0xff]
        %v1304 = vld [vmem:[#allocation2 + $0x190] sm:$0xff]
        %v1305 = vld [vmem:[#allocation2 + $0x198] sm:$0xff]
        %v1306 = vld [vmem:[#allocation2 + $0x1a0] sm:$0xf]
        %v1307 = vld [vmem:[#allocation2 + $0x1a4] sm:$0xff]
        %v1308 = vld [vmem:[#allocation2 + $0x1ac] sm:$0xff]
        %v1309 = vld [vmem:[#allocation2 + $0x1b4] sm:$0xff]
        %v1310 = vld [vmem:[#allocation2 + $0x1bc] sm:$0xf]
        %v1311 = vld [vmem:[#allocation2 + $0x1c0] sm:$0xff]
        %v1312 = vld [vmem:[#allocation2 + $0x1c8] sm:$0xff]
        %v1313 = vld [vmem:[#allocation2 + $0x1d0] sm:$0xff]
        %v1314 = vld [vmem:[#allocation2 + $0x1d8] sm:$0xf]
        %v1315 = vld [vmem:[#allocation2 + $0x1dc] sm:$0xff]
        %v1316 = vld [vmem:[#allocation2 + $0x1e4] sm:$0xff]
        %v1317 = vld [vmem:[#allocation2 + $0x1ec] sm:$0xff]
        %v1318 = vld [vmem:[#allocation2 + $0x1f4] sm:$0xf]
        %v1319 = vld [vmem:[#allocation2 + $0x1f8] sm:$0xff]
        %v1320 = vld [vmem:[#allocation2 + $0x200] sm:$0xff]
        %v1321 = vld [vmem:[#allocation2 + $0x208] sm:$0xff]
        %v1322 = vld [vmem:[#allocation2 + $0x210] sm:$0xf]
        %v1323 = vld [vmem:[#allocation2 + $0x214] sm:$0xff]
        %v1324 = vld [vmem:[#allocation2 + $0x21c] sm:$0xff]
        %v1325 = vld [vmem:[#allocation2 + $0x224] sm:$0xff]
        %v1326 = vld [vmem:[#allocation2 + $0x22c] sm:$0xf]
        %v1327 = vld [vmem:[#allocation2 + $0x230] sm:$0xff]
        %v1328 = vld [vmem:[#allocation2 + $0x238] sm:$0xff]
        %v1329 = vld [vmem:[#allocation2 + $0x240] sm:$0xff]
        %v1330 = vld [vmem:[#allocation2 + $0x248] sm:$0xf]
        %v1331 = vld [vmem:[#allocation2 + $0x24c] sm:$0xff]
        %v1332 = vld [vmem:[#allocation2 + $0x254] sm:$0xff]
        %v1333 = vld [vmem:[#allocation2 + $0x25c] sm:$0xff]
        %v1334 = vld [vmem:[#allocation2 + $0x264] sm:$0xf]
        %v1335 = vld [vmem:[#allocation2 + $0x268] sm:$0xff]
        %v1336 = vld [vmem:[#allocation2 + $0x270] sm:$0xff]
        %v1337 = vld [vmem:[#allocation2 + $0x278] sm:$0xff]
        %v1338 = vld [vmem:[#allocation2 + $0x280] sm:$0xf]
        %v1339 = vld [vmem:[#allocation2 + $0x284] sm:$0xff]
        %v1340 = vld [vmem:[#allocation2 + $0x28c] sm:$0xff]
        %v1341 = vld [vmem:[#allocation2 + $0x294] sm:$0xff]
        %v1342 = vld [vmem:[#allocation2 + $0x29c] sm:$0xf]
        %v1343 = vld [vmem:[#allocation2 + $0x2a0] sm:$0xff]
        %v1344 = vld [vmem:[#allocation2 + $0x2a8] sm:$0xff]
        %v1345 = vld [vmem:[#allocation2 + $0x2b0] sm:$0xff]
        %v1346 = vld [vmem:[#allocation2 + $0x2b8] sm:$0xf]
        %v1347 = vld [vmem:[#allocation2 + $0x2bc] sm:$0xff]
        %v1348 = vld [vmem:[#allocation2 + $0x2c4] sm:$0xff]
        %v1349 = vld [vmem:[#allocation2 + $0x2cc] sm:$0xff]
        %v1350 = vld [vmem:[#allocation2 + $0x2d4] sm:$0xf]
        %v1351 = vld [vmem:[#allocation2 + $0x2d8] sm:$0xff]
        %v1352 = vld [vmem:[#allocation2 + $0x2e0] sm:$0xff]
        %v1353 = vld [vmem:[#allocation2 + $0x2e8] sm:$0xff]
        %v1354 = vld [vmem:[#allocation2 + $0x2f0] sm:$0xf]
        %v1357 = vunpack.c.l.b16 %v1245
        %v1358 = vunpack.c.h.b16 %v1245
        %v1359 = vunpack.c.l.b16 %v1246
        %v1360 = vunpack.c.h.b16 %v1246
        %v1361 = vpack.c.b16 %v1359, %v1357
        %v1362 = vpack.c.b16 %v1360, %v1358
        %v1472 = vunpack.c.l.b16 %v1247
        %v1473 = vunpack.c.h.b16 %v1247
        %v1474 = vunpack.c.l.b16 %v1248
        %v1475 = vunpack.c.h.b16 %v1248
        %v1476 = vunpack.c.l.b16 %v1249
        %v1477 = vunpack.c.h.b16 %v1249
        %v1478 = vunpack.c.l.b16 %v1250
        %v1479 = vunpack.c.l.b16 %v1251
        %v1480 = vunpack.c.h.b16 %v1251
        %v1481 = vunpack.c.l.b16 %v1252
        %v1482 = vunpack.c.h.b16 %v1252
        %v1483 = vunpack.c.l.b16 %v1253
        %v1484 = vunpack.c.h.b16 %v1253
        %v1485 = vunpack.c.l.b16 %v1254
        %v1486 = vunpack.c.l.b16 %v1255
        %v1487 = vunpack.c.h.b16 %v1255
        %v1488 = vunpack.c.l.b16 %v1256
        %v1489 = vunpack.c.h.b16 %v1256
        %v1490 = vunpack.c.l.b16 %v1257
        %v1491 = vunpack.c.h.b16 %v1257
        %v1492 = vunpack.c.l.b16 %v1258
        %v1493 = vunpack.c.l.b16 %v1259
        %v1494 = vunpack.c.h.b16 %v1259
        %v1495 = vunpack.c.l.b16 %v1260
        %v1496 = vunpack.c.h.b16 %v1260
        %v1497 = vunpack.c.l.b16 %v1261
        %v1498 = vunpack.c.h.b16 %v1261
        %v1499 = vunpack.c.l.b16 %v1262
        %v1500 = vunpack.c.l.b16 %v1263
        %v1501 = vunpack.c.h.b16 %v1263
        %v1502 = vunpack.c.l.b16 %v1264
        %v1503 = vunpack.c.h.b16 %v1264
        %v1504 = vunpack.c.l.b16 %v1265
        %v1505 = vunpack.c.h.b16 %v1265
        %v1506 = vunpack.c.l.b16 %v1266
        %v1507 = vunpack.c.l.b16 %v1267
        %v1508 = vunpack.c.h.b16 %v1267
        %v1509 = vunpack.c.l.b16 %v1268
        %v1510 = vunpack.c.h.b16 %v1268
        %v1511 = vunpack.c.l.b16 %v1269
        %v1512 = vunpack.c.h.b16 %v1269
        %v1513 = vunpack.c.l.b16 %v1270
        %v1514 = vunpack.c.l.b16 %v1271
        %v1515 = vunpack.c.h.b16 %v1271
        %v1516 = vunpack.c.l.b16 %v1272
        %v1517 = vunpack.c.h.b16 %v1272
        %v1518 = vunpack.c.l.b16 %v1273
        %v1519 = vunpack.c.h.b16 %v1273
        %v1520 = vunpack.c.l.b16 %v1274
        %v1521 = vunpack.c.l.b16 %v1275
        %v1522 = vunpack.c.h.b16 %v1275
        %v1523 = vunpack.c.l.b16 %v1276
        %v1524 = vunpack.c.h.b16 %v1276
        %v1525 = vunpack.c.l.b16 %v1277
        %v1526 = vunpack.c.h.b16 %v1277
        %v1527 = vunpack.c.l.b16 %v1278
        %v1528 = vunpack.c.l.b16 %v1279
        %v1529 = vunpack.c.h.b16 %v1279
        %v1530 = vunpack.c.l.b16 %v1280
        %v1531 = vunpack.c.h.b16 %v1280
        %v1532 = vunpack.c.l.b16 %v1281
        %v1533 = vunpack.c.h.b16 %v1281
        %v1534 = vunpack.c.l.b16 %v1282
        %v1535 = vunpack.c.l.b16 %v1283
        %v1536 = vunpack.c.h.b16 %v1283
        %v1537 = vunpack.c.l.b16 %v1284
        %v1538 = vunpack.c.h.b16 %v1284
        %v1539 = vunpack.c.l.b16 %v1285
        %v1540 = vunpack.c.h.b16 %v1285
        %v1541 = vunpack.c.l.b16 %v1286
        %v1542 = vunpack.c.l.b16 %v1287
        %v1543 = vunpack.c.h.b16 %v1287
        %v1544 = vunpack.c.l.b16 %v1288
        %v1545 = vunpack.c.h.b16 %v1288
        %v1546 = vunpack.c.l.b16 %v1289
        %v1547 = vunpack.c.h.b16 %v1289
        %v1548 = vunpack.c.l.b16 %v1290
        %v1549 = vunpack.c.l.b16 %v1291
        %v1550 = vunpack.c.h.b16 %v1291
        %v1551 = vunpack.c.l.b16 %v1292
        %v1552 = vunpack.c.h.b16 %v1292
        %v1553 = vunpack.c.l.b16 %v1293
        %v1554 = vunpack.c.h.b16 %v1293
        %v1555 = vunpack.c.l.b16 %v1294
        %v1556 = vunpack.c.l.b16 %v1295
        %v1557 = vunpack.c.h.b16 %v1295
        %v1558 = vunpack.c.l.b16 %v1296
        %v1559 = vunpack.c.h.b16 %v1296
        %v1560 = vunpack.c.l.b16 %v1297
        %v1561 = vunpack.c.h.b16 %v1297
        %v1562 = vunpack.c.l.b16 %v1298
        %v1563 = vunpack.c.l.b16 %v1299
        %v1564 = vunpack.c.h.b16 %v1299
        %v1565 = vunpack.c.l.b16 %v1300
        %v1566 = vunpack.c.h.b16 %v1300
        %v1567 = vunpack.c.l.b16 %v1301
        %v1568 = vunpack.c.h.b16 %v1301
        %v1569 = vunpack.c.l.b16 %v1302
        %v1570 = vunpack.c.l.b16 %v1303
        %v1571 = vunpack.c.h.b16 %v1303
        %v1572 = vunpack.c.l.b16 %v1304
        %v1573 = vunpack.c.h.b16 %v1304
        %v1574 = vunpack.c.l.b16 %v1305
        %v1575 = vunpack.c.h.b16 %v1305
        %v1576 = vunpack.c.l.b16 %v1306
        %v1577 = vunpack.c.l.b16 %v1307
        %v1578 = vunpack.c.h.b16 %v1307
        %v1579 = vunpack.c.l.b16 %v1308
        %v1580 = vunpack.c.h.b16 %v1308
        %v1581 = vunpack.c.l.b16 %v1309
        %v1582 = vunpack.c.h.b16 %v1309
        %v1583 = vunpack.c.l.b16 %v1310
        %v1584 = vunpack.c.l.b16 %v1311
        %v1585 = vunpack.c.h.b16 %v1311
        %v1586 = vunpack.c.l.b16 %v1312
        %v1587 = vunpack.c.h.b16 %v1312
        %v1588 = vunpack.c.l.b16 %v1313
        %v1589 = vunpack.c.h.b16 %v1313
        %v1590 = vunpack.c.l.b16 %v1314
        %v1591 = vunpack.c.l.b16 %v1315
        %v1592 = vunpack.c.h.b16 %v1315
        %v1593 = vunpack.c.l.b16 %v1316
        %v1594 = vunpack.c.h.b16 %v1316
        %v1595 = vunpack.c.l.b16 %v1317
        %v1596 = vunpack.c.h.b16 %v1317
        %v1597 = vunpack.c.l.b16 %v1318
        %v1598 = vunpack.c.l.b16 %v1319
        %v1599 = vunpack.c.h.b16 %v1319
        %v1600 = vunpack.c.l.b16 %v1320
        %v1601 = vunpack.c.h.b16 %v1320
        %v1602 = vunpack.c.l.b16 %v1321
        %v1603 = vunpack.c.h.b16 %v1321
        %v1604 = vunpack.c.l.b16 %v1322
        %v1605 = vunpack.c.l.b16 %v1323
        %v1606 = vunpack.c.h.b16 %v1323
        %v1607 = vunpack.c.l.b16 %v1324
        %v1608 = vunpack.c.h.b16 %v1324
        %v1609 = vunpack.c.l.b16 %v1325
        %v1610 = vunpack.c.h.b16 %v1325
        %v1611 = vunpack.c.l.b16 %v1326
        %v1612 = vunpack.c.l.b16 %v1327
        %v1613 = vunpack.c.h.b16 %v1327
        %v1614 = vunpack.c.l.b16 %v1328
        %v1615 = vunpack.c.h.b16 %v1328
        %v1616 = vunpack.c.l.b16 %v1329
        %v1617 = vunpack.c.h.b16 %v1329
        %v1618 = vunpack.c.l.b16 %v1330
        %v1619 = vunpack.c.l.b16 %v1331
        %v1620 = vunpack.c.h.b16 %v1331
        %v1621 = vunpack.c.l.b16 %v1332
        %v1622 = vunpack.c.h.b16 %v1332
        %v1623 = vunpack.c.l.b16 %v1333
        %v1624 = vunpack.c.h.b16 %v1333
        %v1625 = vunpack.c.l.b16 %v1334
        %v1626 = vunpack.c.l.b16 %v1335
        %v1627 = vunpack.c.h.b16 %v1335
        %v1628 = vunpack.c.l.b16 %v1336
        %v1629 = vunpack.c.h.b16 %v1336
        %v1630 = vunpack.c.l.b16 %v1337
        %v1631 = vunpack.c.h.b16 %v1337
        %v1632 = vunpack.c.l.b16 %v1338
        %v1633 = vunpack.c.l.b16 %v1339
        %v1634 = vunpack.c.h.b16 %v1339
        %v1635 = vunpack.c.l.b16 %v1340
        %v1636 = vunpack.c.h.b16 %v1340
        %v1637 = vunpack.c.l.b16 %v1341
        %v1638 = vunpack.c.h.b16 %v1341
        %v1639 = vunpack.c.l.b16 %v1342
        %v1640 = vunpack.c.l.b16 %v1343
        %v1641 = vunpack.c.h.b16 %v1343
        %v1642 = vunpack.c.l.b16 %v1344
        %v1643 = vunpack.c.h.b16 %v1344
        %v1644 = vunpack.c.l.b16 %v1345
        %v1645 = vunpack.c.h.b16 %v1345
        %v1646 = vunpack.c.l.b16 %v1346
        %v1647 = vunpack.c.l.b16 %v1347
        %v1648 = vunpack.c.h.b16 %v1347
        %v1649 = vunpack.c.l.b16 %v1348
        %v1650 = vunpack.c.h.b16 %v1348
        %v1651 = vunpack.c.l.b16 %v1349
        %v1652 = vunpack.c.h.b16 %v1349
        %v1653 = vunpack.c.l.b16 %v1350
        %v1654 = vunpack.c.l.b16 %v1351
        %v1655 = vunpack.c.h.b16 %v1351
        %v1656 = vunpack.c.l.b16 %v1352
        %v1657 = vunpack.c.h.b16 %v1352
        %v1658 = vunpack.c.l.b16 %v1353
        %v1659 = vunpack.c.h.b16 %v1353
        %v1660 = vunpack.c.l.b16 %v1354
        %v1661 = vpack.c.b16 %v1479, %v1472
        %v1662 = vpack.c.b16 %v1480, %v1473
        %v1663 = vpack.c.b16 %v1481, %v1474
        %v1664 = vpack.c.b16 %v1482, %v1475
        %v1665 = vpack.c.b16 %v1483, %v1476
        %v1666 = vpack.c.b16 %v1484, %v1477
        %v1667 = vpack.c.b16 %v1485, %v1478
        %v1668 = vpack.c.b16 %v1493, %v1486
        %v1669 = vpack.c.b16 %v1494, %v1487
        %v1670 = vpack.c.b16 %v1495, %v1488
        %v1671 = vpack.c.b16 %v1496, %v1489
        %v1672 = vpack.c.b16 %v1497, %v1490
        %v1673 = vpack.c.b16 %v1498, %v1491
        %v1674 = vpack.c.b16 %v1499, %v1492
        %v1675 = vpack.c.b16 %v1507, %v1500
        %v1676 = vpack.c.b16 %v1508, %v1501
        %v1677 = vpack.c.b16 %v1509, %v1502
        %v1678 = vpack.c.b16 %v1510, %v1503
        %v1679 = vpack.c.b16 %v1511, %v1504
        %v1680 = vpack.c.b16 %v1512, %v1505
        %v1681 = vpack.c.b16 %v1513, %v1506
        %v1682 = vpack.c.b16 %v1521, %v1514
        %v1683 = vpack.c.b16 %v1522, %v1515
        %v1684 = vpack.c.b16 %v1523, %v1516
        %v1685 = vpack.c.b16 %v1524, %v1517
        %v1686 = vpack.c.b16 %v1525, %v1518
        %v1687 = vpack.c.b16 %v1526, %v1519
        %v1688 = vpack.c.b16 %v1527, %v1520
        %v1689 = vpack.c.b16 %v1535, %v1528
        %v1690 = vpack.c.b16 %v1536, %v1529
        %v1691 = vpack.c.b16 %v1537, %v1530
        %v1692 = vpack.c.b16 %v1538, %v1531
        %v1693 = vpack.c.b16 %v1539, %v1532
        %v1694 = vpack.c.b16 %v1540, %v1533
        %v1695 = vpack.c.b16 %v1541, %v1534
        %v1696 = vpack.c.b16 %v1549, %v1542
        %v1697 = vpack.c.b16 %v1550, %v1543
        %v1698 = vpack.c.b16 %v1551, %v1544
        %v1699 = vpack.c.b16 %v1552, %v1545
        %v1700 = vpack.c.b16 %v1553, %v1546
        %v1701 = vpack.c.b16 %v1554, %v1547
        %v1702 = vpack.c.b16 %v1555, %v1548
        %v1703 = vpack.c.b16 %v1563, %v1556
        %v1704 = vpack.c.b16 %v1564, %v1557
        %v1705 = vpack.c.b16 %v1565, %v1558
        %v1706 = vpack.c.b16 %v1566, %v1559
        %v1707 = vpack.c.b16 %v1567, %v1560
        %v1708 = vpack.c.b16 %v1568, %v1561
        %v1709 = vpack.c.b16 %v1569, %v1562
        %v1710 = vpack.c.b16 %v1577, %v1570
        %v1711 = vpack.c.b16 %v1578, %v1571
        %v1712 = vpack.c.b16 %v1579, %v1572
        %v1713 = vpack.c.b16 %v1580, %v1573
        %v1714 = vpack.c.b16 %v1581, %v1574
        %v1715 = vpack.c.b16 %v1582, %v1575
        %v1716 = vpack.c.b16 %v1583, %v1576
        %v1717 = vpack.c.b16 %v1591, %v1584
        %v1718 = vpack.c.b16 %v1592, %v1585
        %v1719 = vpack.c.b16 %v1593, %v1586
        %v1720 = vpack.c.b16 %v1594, %v1587
        %v1721 = vpack.c.b16 %v1595, %v1588
        %v1722 = vpack.c.b16 %v1596, %v1589
        %v1723 = vpack.c.b16 %v1597, %v1590
        %v1724 = vpack.c.b16 %v1605, %v1598
        %v1725 = vpack.c.b16 %v1606, %v1599
        %v1726 = vpack.c.b16 %v1607, %v1600
        %v1727 = vpack.c.b16 %v1608, %v1601
        %v1728 = vpack.c.b16 %v1609, %v1602
        %v1729 = vpack.c.b16 %v1610, %v1603
        %v1730 = vpack.c.b16 %v1611, %v1604
        %v1731 = vpack.c.b16 %v1619, %v1612
        %v1732 = vpack.c.b16 %v1620, %v1613
        %v1733 = vpack.c.b16 %v1621, %v1614
        %v1734 = vpack.c.b16 %v1622, %v1615
        %v1735 = vpack.c.b16 %v1623, %v1616
        %v1736 = vpack.c.b16 %v1624, %v1617
        %v1737 = vpack.c.b16 %v1625, %v1618
        %v1738 = vpack.c.b16 %v1633, %v1626
        %v1739 = vpack.c.b16 %v1634, %v1627
        %v1740 = vpack.c.b16 %v1635, %v1628
        %v1741 = vpack.c.b16 %v1636, %v1629
        %v1742 = vpack.c.b16 %v1637, %v1630
        %v1743 = vpack.c.b16 %v1638, %v1631
        %v1744 = vpack.c.b16 %v1639, %v1632
        %v1745 = vpack.c.b16 %v1647, %v1640
        %v1746 = vpack.c.b16 %v1648, %v1641
        %v1747 = vpack.c.b16 %v1649, %v1642
        %v1748 = vpack.c.b16 %v1650, %v1643
        %v1749 = vpack.c.b16 %v1651, %v1644
        %v1750 = vpack.c.b16 %v1652, %v1645
        %v1751 = vpack.c.b16 %v1653, %v1646
        %v1752 = vpack.c.b16 %v1654, %v1654
        %v1753 = vpack.c.b16 %v1655, %v1655
        %v1754 = vpack.c.b16 %v1656, %v1656
        %v1755 = vpack.c.b16 %v1657, %v1657
        %v1756 = vpack.c.b16 %v1658, %v1658
        %v1757 = vpack.c.b16 %v1659, %v1659
        %v1758 = vpack.c.b16 %v1660, %v1660
        %vm1850 = vcmask 719872
        %v1852 = vsel %vm1850, %v1362, 0
        %vm1854 = vcmask 1043456
        %v1856 = vsel %vm1854, %v1752, 0
        %v1859 = vsel %vm1854, %v1753, 0
        %v1862 = vsel %vm1854, %v1754, 0
        %v1865 = vsel %vm1854, %v1755, 0
        %v1868 = vsel %vm1854, %v1756, 0
        %v1871 = vsel %vm1854, %v1757, 0
        %v1874 = vsel %vm1854, %v1758, 0
        %1876 = vmatprep.subr.bf16.mxu0 %v1711
        %1877 = vmatpush1.bf16.msra.mxu0 %v1710
        %1878 = vmatprep.subr.bf16.mxu0 %v1704
        %1879 = vmatpush1.bf16.msra.mxu0 %v1703
        %1880 = vmatprep.subr.bf16.mxu0 %v1697
        %1881 = vmatpush1.bf16.msra.mxu0 %v1696
        %1882 = vmatprep.subr.bf16.mxu0 %v1690
        %1883 = vmatpush1.bf16.msra.mxu0 %v1689
        %1884 = vmatprep.subr.bf16.mxu0 %v1683
        %1885 = vmatpush1.bf16.msra.mxu0 %v1682
        %1886 = vmatprep.subr.bf16.mxu0 %v1676
        %1887 = vmatpush1.bf16.msra.mxu0 %v1675
        %1888 = vmatprep.subr.bf16.mxu0 %v1669
        %1889 = vmatpush1.bf16.msra.mxu0 %v1668
        %1890 = vmatprep.subr.bf16.mxu0 %v1662
        %1891 = vmatpush1.bf16.msra.mxu0 %v1661
        %1892 = vmatprep.subr.bf16.mxu0 0
        %1893 = vmatpush2.bf16.msra.mxu0 0
        %1894 = vmatprep.subr.bf16.mxu0 0
        %1895 = vmatpush2.bf16.msra.mxu0 0
        %1896 = vmatprep.subr.bf16.mxu0 %v1859
        %1897 = vmatpush2.bf16.msra.mxu0 %v1856
        %1898 = vmatprep.subr.bf16.mxu0 %v1746
        %1899 = vmatpush2.bf16.msra.mxu0 %v1745
        %1900 = vmatprep.subr.bf16.mxu0 %v1739
        %1901 = vmatpush2.bf16.msra.mxu0 %v1738
        %1902 = vmatprep.subr.bf16.mxu0 %v1732
        %1903 = vmatpush2.bf16.msra.mxu0 %v1731
        %1904 = vmatprep.subr.bf16.mxu0 %v1725
        %1905 = vmatpush2.bf16.msra.mxu0 %v1724
        %1906 = vmatprep.subr.bf16.mxu0 %v1718
        %1907 = vmatpush2.bf16.msra.mxu0 %v1717
        %1908 = vmatprep.mubr.bf16.mxu0 %v1852
        %1909 = vmatmul.mubr.bf16.gmra.mxu0 %v1361
        %v1910 = vpop.f32.mrf.mxu0
        %v1911 = vadd.f32 0.0, %v1910
        %v1912 = vpop.f32.mrf.mxu0
        %v1913 = vadd.f32 0.0, %v1912
        %v1914 = vpop.f32.mrf.mxu0
        %v1915 = vpop.f32.mrf.mxu0
        %1916 = vdwg.mxu0
        %1917 = vmatprep.subr.bf16.mxu0 %v1713
        %1918 = vmatpush1.bf16.msra.mxu0 %v1712
        %1919 = vmatprep.subr.bf16.mxu0 %v1706
        %1920 = vmatpush1.bf16.msra.mxu0 %v1705
        %1921 = vmatprep.subr.bf16.mxu0 %v1699
        %1922 = vmatpush1.bf16.msra.mxu0 %v1698
        %1923 = vmatprep.subr.bf16.mxu0 %v1692
        %1924 = vmatpush1.bf16.msra.mxu0 %v1691
        %1925 = vmatprep.subr.bf16.mxu0 %v1685
        %1926 = vmatpush1.bf16.msra.mxu0 %v1684
        %1927 = vmatprep.subr.bf16.mxu0 %v1678
        %1928 = vmatpush1.bf16.msra.mxu0 %v1677
        %1929 = vmatprep.subr.bf16.mxu0 %v1671
        %1930 = vmatpush1.bf16.msra.mxu0 %v1670
        %1931 = vmatprep.subr.bf16.mxu0 %v1664
        %1932 = vmatpush1.bf16.msra.mxu0 %v1663
        %1933 = vmatprep.subr.bf16.mxu0 0
        %1934 = vmatpush2.bf16.msra.mxu0 0
        %1935 = vmatprep.subr.bf16.mxu0 0
        %1936 = vmatpush2.bf16.msra.mxu0 0
        %1937 = vmatprep.subr.bf16.mxu0 %v1865
        %1938 = vmatpush2.bf16.msra.mxu0 %v1862
        %1939 = vmatprep.subr.bf16.mxu0 %v1748
        %1940 = vmatpush2.bf16.msra.mxu0 %v1747
        %1941 = vmatprep.subr.bf16.mxu0 %v1741
        %1942 = vmatpush2.bf16.msra.mxu0 %v1740
        %1943 = vmatprep.subr.bf16.mxu0 %v1734
        %1944 = vmatpush2.bf16.msra.mxu0 %v1733
        %1945 = vmatprep.subr.bf16.mxu0 %v1727
        %1946 = vmatpush2.bf16.msra.mxu0 %v1726
        %1947 = vmatprep.subr.bf16.mxu0 %v1720
        %1948 = vmatpush2.bf16.msra.mxu0 %v1719
        %1949 = vmatprep.mubr.bf16.mxu0 %v1852
        %1950 = vmatmul.mubr.bf16.gmra.mxu0 %v1361
        %v1951 = vpop.f32.mrf.mxu0
        %v1952 = vadd.f32 0.0, %v1951
        %v1953 = vpop.f32.mrf.mxu0
        %v1954 = vadd.f32 0.0, %v1953
        %v1955 = vpop.f32.mrf.mxu0
        %v1956 = vpop.f32.mrf.mxu0
        %1957 = vdwg.mxu0
        %1958 = vmatprep.subr.bf16.mxu0 %v1715
        %1959 = vmatpush1.bf16.msra.mxu0 %v1714
        %1960 = vmatprep.subr.bf16.mxu0 %v1708
        %1961 = vmatpush1.bf16.msra.mxu0 %v1707
        %1962 = vmatprep.subr.bf16.mxu0 %v1701
        %1963 = vmatpush1.bf16.msra.mxu0 %v1700
        %1964 = vmatprep.subr.bf16.mxu0 %v1694
        %1965 = vmatpush1.bf16.msra.mxu0 %v1693
        %1966 = vmatprep.subr.bf16.mxu0 %v1687
        %1967 = vmatpush1.bf16.msra.mxu0 %v1686
        %1968 = vmatprep.subr.bf16.mxu0 %v1680
        %1969 = vmatpush1.bf16.msra.mxu0 %v1679
        %1970 = vmatprep.subr.bf16.mxu0 %v1673
        %1971 = vmatpush1.bf16.msra.mxu0 %v1672
        %1972 = vmatprep.subr.bf16.mxu0 %v1666
        %1973 = vmatpush1.bf16.msra.mxu0 %v1665
        %1974 = vmatprep.subr.bf16.mxu0 0
        %1975 = vmatpush2.bf16.msra.mxu0 0
        %1976 = vmatprep.subr.bf16.mxu0 0
        %1977 = vmatpush2.bf16.msra.mxu0 0
        %1978 = vmatprep.subr.bf16.mxu0 %v1871
        %1979 = vmatpush2.bf16.msra.mxu0 %v1868
        %1980 = vmatprep.subr.bf16.mxu0 %v1750
        %1981 = vmatpush2.bf16.msra.mxu0 %v1749
        %1982 = vmatprep.subr.bf16.mxu0 %v1743
        %1983 = vmatpush2.bf16.msra.mxu0 %v1742
        %1984 = vmatprep.subr.bf16.mxu0 %v1736
        %1985 = vmatpush2.bf16.msra.mxu0 %v1735
        %1986 = vmatprep.subr.bf16.mxu0 %v1729
        %1987 = vmatpush2.bf16.msra.mxu0 %v1728
        %1988 = vmatprep.subr.bf16.mxu0 %v1722
        %1989 = vmatpush2.bf16.msra.mxu0 %v1721
        %1990 = vmatprep.mubr.bf16.mxu0 %v1852
        %1991 = vmatmul.mubr.bf16.gmra.mxu0 %v1361
        %v1992 = vpop.f32.mrf.mxu0
        %v1993 = vadd.f32 0.0, %v1992
        %v1994 = vpop.f32.mrf.mxu0
        %v1995 = vadd.f32 0.0, %v1994
        %v1996 = vpop.f32.mrf.mxu0
        %v1997 = vpop.f32.mrf.mxu0
        %1998 = vdwg.mxu0
        %1999 = vmatprep.subr.bf16.mxu0 0
        %2000 = vmatpush1.bf16.msra.mxu0 %v1716
        %2001 = vmatprep.subr.bf16.mxu0 0
        %2002 = vmatpush1.bf16.msra.mxu0 %v1709
        %2003 = vmatprep.subr.bf16.mxu0 0
        %2004 = vmatpush1.bf16.msra.mxu0 %v1702
        %2005 = vmatprep.subr.bf16.mxu0 0
        %2006 = vmatpush1.bf16.msra.mxu0 %v1695
        %2007 = vmatprep.subr.bf16.mxu0 0
        %2008 = vmatpush1.bf16.msra.mxu0 %v1688
        %2009 = vmatprep.subr.bf16.mxu0 0
        %2010 = vmatpush1.bf16.msra.mxu0 %v1681
        %2011 = vmatprep.subr.bf16.mxu0 0
        %2012 = vmatpush1.bf16.msra.mxu0 %v1674
        %2013 = vmatprep.subr.bf16.mxu0 0
        %2014 = vmatpush1.bf16.msra.mxu0 %v1667
        %2015 = vmatprep.subr.bf16.mxu0 0
        %2016 = vmatpush2.bf16.msra.mxu0 0
        %2017 = vmatprep.subr.bf16.mxu0 0
        %2018 = vmatpush2.bf16.msra.mxu0 0
        %2019 = vmatprep.subr.bf16.mxu0 0
        %2020 = vmatpush2.bf16.msra.mxu0 %v1874
        %2021 = vmatprep.subr.bf16.mxu0 0
        %2022 = vmatpush2.bf16.msra.mxu0 %v1751
        %2023 = vmatprep.subr.bf16.mxu0 0
        %2024 = vmatpush2.bf16.msra.mxu0 %v1744
        %2025 = vmatprep.subr.bf16.mxu0 0
        %2026 = vmatpush2.bf16.msra.mxu0 %v1737
        %2027 = vmatprep.subr.bf16.mxu0 0
        %2028 = vmatpush2.bf16.msra.mxu0 %v1730
        %2029 = vmatprep.subr.bf16.mxu0 0
        %2030 = vmatpush2.bf16.msra.mxu0 %v1723
        %2031 = vmatprep.mubr.bf16.mxu0 %v1852
        %2032 = vmatmul.mubr.bf16.gmra.mxu0 %v1361
        %v2033 = vpop.f32.mrf.mxu0
        %v2034 = vadd.f32 0.0, %v2033
        %v2035 = vpop.f32.mrf.mxu0
        %v2036 = vpop.f32.mrf.mxu0
        %v2037 = vpop.f32.mrf.mxu0
        %2038 = vdwg.mxu0
        %s2039 = sld [smem:[#allocation4]]
        %v2041 = vlaneseq
        %v2042 = vshrl.u32 %v2041, 7
        %v2043 = vsub.s32 0, %v2042
        %v2044 = vrot.slane %v299, %v2043
        %v2045 = vlaneseq
        %v2046 = vshrl.u32 %v2045, 7
        %v2047 = vsub.s32 1, %v2046
        %v2048 = vrot.slane %v299, %v2047
        %v2049 = vlaneseq
        %v2050 = vshrl.u32 %v2049, 7
        %v2051 = vsub.s32 2, %v2050
        %v2052 = vrot.slane %v299, %v2051
        %v2053 = vlaneseq
        %v2054 = vshrl.u32 %v2053, 7
        %v2055 = vsub.s32 3, %v2054
        %v2056 = vrot.slane %v299, %v2055
        %v2057 = vlaneseq
        %v2058 = vshrl.u32 %v2057, 7
        %v2059 = vsub.s32 4, %v2058
        %v2060 = vrot.slane %v299, %v2059
        %v2061 = vlaneseq
        %v2062 = vshrl.u32 %v2061, 7
        %v2063 = vsub.s32 5, %v2062
        %v2064 = vrot.slane %v299, %v2063
        %v2065 = vlaneseq
        %v2066 = vshrl.u32 %v2065, 7
        %v2067 = vsub.s32 6, %v2066
        %v2068 = vrot.slane %v299, %v2067
        %v2076 = vmul.f32 %v1911, %v2044
        %v2077 = vmul.f32 %v1913, %v2048
        %v2078 = vmul.f32 %v1952, %v2052
        %v2079 = vmul.f32 %v1954, %v2056
        %v2080 = vmul.f32 %v1993, %v2060
        %v2081 = vmul.f32 %v1995, %v2064
        %v2082 = vmul.f32 %v2034, %v2068
        %v2083 = vadd.f32 %v2076, %v2077
        %v2084 = vadd.f32 %v2083, %v2078
        %v2085 = vadd.f32 %v2084, %v2079
        %v2086 = vadd.f32 %v2085, %v2080
        %v2087 = vadd.f32 %v2086, %v2081
        %v2088 = vadd.f32 %v2087, %v2082
        %2089 = vadd.xlane.f32.xlu0 %v2088
        %v2090 = vpop.xlane.xlu0 %2089
        %v2091 = vmul.f32 %v2090, 0.001953125
        %v2092 = vsub.f32 %v1911, %v2091
        %v2093 = vsub.f32 %v1913, %v2091
        %v2094 = vsub.f32 %v1952, %v2091
        %v2095 = vsub.f32 %v1954, %v2091
        %v2096 = vsub.f32 %v1993, %v2091
        %v2097 = vsub.f32 %v1995, %v2091
        %v2098 = vsub.f32 %v2034, %v2091
        %v2099 = vmul.f32 %v2092, %v2092
        %v2100 = vmul.f32 %v2093, %v2093
        %v2101 = vmul.f32 %v2094, %v2094
        %v2102 = vmul.f32 %v2095, %v2095
        %v2103 = vmul.f32 %v2096, %v2096
        %v2104 = vmul.f32 %v2097, %v2097
        %v2105 = vmul.f32 %v2098, %v2098
        %v2106 = vmul.f32 %v2099, %v2044
        %v2107 = vmul.f32 %v2100, %v2048
        %v2108 = vmul.f32 %v2101, %v2052
        %v2109 = vmul.f32 %v2102, %v2056
        %v2110 = vmul.f32 %v2103, %v2060
        %v2111 = vmul.f32 %v2104, %v2064
        %v2112 = vmul.f32 %v2105, %v2068
        %v2113 = vadd.f32 %v2106, %v2107
        %v2114 = vadd.f32 %v2113, %v2108
        %v2115 = vadd.f32 %v2114, %v2109
        %v2116 = vadd.f32 %v2115, %v2110
        %v2117 = vadd.f32 %v2116, %v2111
        %v2118 = vadd.f32 %v2117, %v2112
        %2119 = vadd.xlane.f32.xlu0 %v2118
        %v2120 = vpop.xlane.xlu0 %2119
        %v2121 = vmul.f32 %v2120, 0.001953125
        %v2122 = vadd.f32 %v2121, 1e-05
        %v2123 = vrsqrt.pop %v2122
        %v2124 = vmul.f32 %v2092, %v2123
        %v2125 = vmul.f32 %v2093, %v2123
        %v2126 = vmul.f32 %v2094, %v2123
        %v2127 = vmul.f32 %v2095, %v2123
        %v2128 = vmul.f32 %v2096, %v2123
        %v2129 = vmul.f32 %v2097, %v2123
        %v2130 = vmul.f32 %v2098, %v2123
        %vm2131 = vcmp.gt.f32.partialorder %v2124, 0.0
        %vm2132 = vcmp.gt.f32.partialorder %v2125, 0.0
        %vm2133 = vcmp.gt.f32.partialorder %v2126, 0.0
        %vm2134 = vcmp.gt.f32.partialorder %v2127, 0.0
        %vm2135 = vcmp.gt.f32.partialorder %v2128, 0.0
        %vm2136 = vcmp.gt.f32.partialorder %v2129, 0.0
        %vm2137 = vcmp.gt.f32.partialorder %v2130, 0.0
        %v2138 = vstv %s2039
        %v2139 = vmul.f32 %v2138, %v2124
        %v2140 = vmul.f32 %v2138, %v2125
        %v2141 = vmul.f32 %v2138, %v2126
        %v2142 = vmul.f32 %v2138, %v2127
        %v2143 = vmul.f32 %v2138, %v2128
        %v2144 = vmul.f32 %v2138, %v2129
        %v2145 = vmul.f32 %v2138, %v2130
        %v2146 = vsel %vm2131, %v2124, %v2139
        %v2147 = vsel %vm2132, %v2125, %v2140
        %v2148 = vsel %vm2133, %v2126, %v2141
        %v2149 = vsel %vm2134, %v2127, %v2142
        %v2150 = vsel %vm2135, %v2128, %v2143
        %v2151 = vsel %vm2136, %v2129, %v2144
        %v2152 = vsel %vm2137, %v2130, %v2145
        %v2153 = vmul.f32 %v2146, %v2044
        %v2154 = vmul.f32 %v2147, %v2048
        %v2155 = vmul.f32 %v2148, %v2052
        %v2156 = vmul.f32 %v2149, %v2056
        %v2157 = vmul.f32 %v2150, %v2060
        %v2158 = vmul.f32 %v2151, %v2064
        %v2159 = vmul.f32 %v2152, %v2068
        %v2160 = vpack.c.bf16 %v2153, %v2153
        %v2161 = vpack.c.bf16 %v2154, %v2154
        %v2162 = vpack.c.bf16 %v2155, %v2155
        %v2163 = vpack.c.bf16 %v2156, %v2156
        %v2164 = vpack.c.bf16 %v2157, %v2157
        %v2165 = vpack.c.bf16 %v2158, %v2158
        %v2166 = vpack.c.bf16 %v2159, %v2159
        %v2174 = vunpack.c.l.b16 %v2160
        %v2175 = vunpack.c.l.b16 %v2161
        %v2176 = vunpack.c.l.b16 %v2162
        %v2177 = vunpack.c.l.b16 %v2163
        %v2178 = vunpack.c.l.b16 %v2164
        %v2179 = vunpack.c.l.b16 %v2165
        %v2180 = vunpack.c.l.b16 %v2166
        %v2181 = vpack.c.b16 %v2175, %v2174
        %v2182 = vpack.c.b16 %v2177, %v2176
        %v2183 = vpack.c.b16 %v2179, %v2178
        %v2184 = vpack.c.b16 %v2180, %v2180
        %2185 = vrot.lane.b32.xlu0 %v2181, 111
        %v2186 = vpop.permute.xlu0 %2185
        %2187 = vrot.lane.b32.xlu0 %v2182, 111
        %v2188 = vpop.permute.xlu0 %2187
        %2189 = vrot.lane.b32.xlu0 %v2183, 111
        %v2190 = vpop.permute.xlu0 %2189
        %2191 = vrot.lane.b32.xlu0 %v2184, 111
        %v2192 = vpop.permute.xlu0 %2191
        %v2193 = vrot.slane %v2186, 4
        %v2194 = vrot.slane %v2188, 4
        %v2195 = vrot.slane %v2190, 4
        %v2196 = vrot.slane %v2192, 4
        %vm2197 = vcmask 908288
        %v2198 = vsel %vm2197, %v2193, %v2186
        %v2199 = vsel %vm328, %v2193, %v2194
        %v2200 = vsel %vm2197, %v2199, %v2188
        %v2201 = vsel %vm328, %v2194, %v2195
        %v2202 = vsel %vm2197, %v2201, %v2190
        %v2203 = vsel %vm328, %v2195, %v2196
        %v2204 = vsel %vm2197, %v2203, %v2192
        %vm2209 = vcmask 1044344
        %vm2210 = vcmask 1047556
        %vm2211 = vmor %vm2210, %vm2209
        %2212 = vst.msk [vmem:[#allocation3] sm:$0xff] %vm2211, %v2198
        %2213 = vst [vmem:[#allocation3 + $0x8] sm:$0xff] %v2200
        %2214 = vst [vmem:[#allocation3 + $0x10] sm:$0xff] %v2202
        %vm2215 = vcmask 908292
        %vm2216 = vmor %vm2215, %vm1854
        %2217 = vst.msk [vmem:[#allocation3 + $0x18] sm:$0xff] %vm2216, %v2204
        %v2218 = vld [vmem:[#allocation3] sm:$0xff]
        %v2219 = vld [vmem:[#allocation3 + $0x8] sm:$0xff]
        %v2220 = vld [vmem:[#allocation3 + $0x10] sm:$0xff]
        %v2221 = vld [vmem:[#allocation3 + $0x18] sm:$0xf]
        %2222 = vst [vmem:[#allocation2] sm:$0xff] %v2218
        %2223 = vst [vmem:[#allocation2 + $0x8] sm:$0xff] %v2219
        %2224 = vst [vmem:[#allocation2 + $0x10] sm:$0xff] %v2220
        %2225 = vst [vmem:[#allocation2 + $0x18] sm:$0xf] %v2221
        %v2226 = vld [vmem:[#allocation3] sm:$0xff]
        %v2227 = vld [vmem:[#allocation3 + $0x8] sm:$0xff]
        %v2228 = vld [vmem:[#allocation3 + $0x10] sm:$0xff]
        %v2229 = vld [vmem:[#allocation3 + $0x18] sm:$0xff]
        %2234 = vrot.lane.b32.xlu0 %v2226, 127
        %v2235 = vpop.permute.xlu0 %2234
        %2236 = vrot.lane.b32.xlu0 %v2227, 127
        %v2237 = vpop.permute.xlu0 %2236
        %2238 = vrot.lane.b32.xlu0 %v2228, 127
        %v2239 = vpop.permute.xlu0 %2238
        %2240 = vrot.lane.b32.xlu0 %v2229, 127
        %v2241 = vpop.permute.xlu0 %2240
        %v2242 = vrot.slane %v2235, 4
        %v2243 = vrot.slane %v2237, 4
        %v2244 = vrot.slane %v2239, 4
        %v2245 = vrot.slane %v2241, 4
        %v2246 = vsel %vm328, %v2242, %v2243
        %v2247 = vsel %vm330, %v2235, %v2246
        %v2248 = vsel %vm328, %v2243, %v2244
        %v2249 = vsel %vm330, %v2237, %v2248
        %v2250 = vsel %vm328, %v2244, %v2245
        %v2251 = vsel %vm330, %v2239, %v2250
        %v2252 = vsel %vm330, %v2241, %v2245
        %2257 = vst [vmem:[#allocation2 + $0x1c] sm:$0xff] %v2247
        %2258 = vst [vmem:[#allocation2 + $0x24] sm:$0xff] %v2249
        %2259 = vst [vmem:[#allocation2 + $0x2c] sm:$0xff] %v2251
        %2260 = vst [vmem:[#allocation2 + $0x34] sm:$0xf] %v2252
        %v2261 = vld [vmem:[#allocation3] sm:$0xff]
        %v2262 = vld [vmem:[#allocation3 + $0x8] sm:$0xff]
        %v2263 = vld [vmem:[#allocation3 + $0x10] sm:$0xff]
        %v2264 = vld [vmem:[#allocation3 + $0x18] sm:$0xff]
        %2269 = vrot.lane.b32.xlu0 %v2261, 126
        %v2270 = vpop.permute.xlu0 %2269
        %2271 = vrot.lane.b32.xlu0 %v2262, 126
        %v2272 = vpop.permute.xlu0 %2271
        %2273 = vrot.lane.b32.xlu0 %v2263, 126
        %v2274 = vpop.permute.xlu0 %2273
        %2275 = vrot.lane.b32.xlu0 %v2264, 126
        %v2276 = vpop.permute.xlu0 %2275
        %v2277 = vrot.slane %v2270, 4
        %v2278 = vrot.slane %v2272, 4
        %v2279 = vrot.slane %v2274, 4
        %v2280 = vrot.slane %v2276, 4
        %v2281 = vsel %vm328, %v2277, %v2278
        %v2282 = vsel %vm366, %v2270, %v2281
        %v2283 = vsel %vm328, %v2278, %v2279
        %v2284 = vsel %vm366, %v2272, %v2283
        %v2285 = vsel %vm328, %v2279, %v2280
        %v2286 = vsel %vm366, %v2274, %v2285
        %v2287 = vsel %vm366, %v2276, %v2280
        %2292 = vst [vmem:[#allocation2 + $0x38] sm:$0xff] %v2282
        %2293 = vst [vmem:[#allocation2 + $0x40] sm:$0xff] %v2284
        %2294 = vst [vmem:[#allocation2 + $0x48] sm:$0xff] %v2286
        %2295 = vst [vmem:[#allocation2 + $0x50] sm:$0xf] %v2287
        %v2296 = vld [vmem:[#allocation3] sm:$0xff]
        %v2297 = vld [vmem:[#allocation3 + $0x8] sm:$0xff]
        %v2298 = vld [vmem:[#allocation3 + $0x10] sm:$0xff]
        %v2299 = vld [vmem:[#allocation3 + $0x18] sm:$0xff]
        %2304 = vrot.lane.b32.xlu0 %v2296, 118
        %v2305 = vpop.permute.xlu0 %2304
        %2306 = vrot.lane.b32.xlu0 %v2297, 118
        %v2307 = vpop.permute.xlu0 %2306
        %2308 = vrot.lane.b32.xlu0 %v2298, 118
        %v2309 = vpop.permute.xlu0 %2308
        %2310 = vrot.lane.b32.xlu0 %v2299, 118
        %v2311 = vpop.permute.xlu0 %2310
        %v2312 = vrot.slane %v2305, 4
        %v2313 = vrot.slane %v2307, 4
        %v2314 = vrot.slane %v2309, 4
        %v2315 = vrot.slane %v2311, 4
        %v2316 = vsel %vm328, %v2312, %v2313
        %v2317 = vsel %vm402, %v2305, %v2316
        %v2318 = vsel %vm328, %v2313, %v2314
        %v2319 = vsel %vm402, %v2307, %v2318
        %v2320 = vsel %vm328, %v2314, %v2315
        %v2321 = vsel %vm402, %v2309, %v2320
        %v2322 = vsel %vm402, %v2311, %v2315
        %2327 = vst [vmem:[#allocation2 + $0x54] sm:$0xff] %v2317
        %2328 = vst [vmem:[#allocation2 + $0x5c] sm:$0xff] %v2319
        %2329 = vst [vmem:[#allocation2 + $0x64] sm:$0xff] %v2321
        %2330 = vst [vmem:[#allocation2 + $0x6c] sm:$0xf] %v2322
        %v2331 = vld [vmem:[#allocation3] sm:$0xff]
        %v2332 = vld [vmem:[#allocation3 + $0x8] sm:$0xff]
        %v2333 = vld [vmem:[#allocation3 + $0x10] sm:$0xff]
        %v2334 = vld [vmem:[#allocation3 + $0x18] sm:$0xff]
        %2339 = vrot.lane.b32.xlu0 %v2331, 117
        %v2340 = vpop.permute.xlu0 %2339
        %2341 = vrot.lane.b32.xlu0 %v2332, 117
        %v2342 = vpop.permute.xlu0 %2341
        %2343 = vrot.lane.b32.xlu0 %v2333, 117
        %v2344 = vpop.permute.xlu0 %2343
        %2345 = vrot.lane.b32.xlu0 %v2334, 117
        %v2346 = vpop.permute.xlu0 %2345
        %v2347 = vrot.slane %v2340, 4
        %v2348 = vrot.slane %v2342, 4
        %v2349 = vrot.slane %v2344, 4
        %v2350 = vrot.slane %v2346, 4
        %v2351 = vsel %vm328, %v2347, %v2348
        %v2352 = vsel %vm438, %v2340, %v2351
        %v2353 = vsel %vm328, %v2348, %v2349
        %v2354 = vsel %vm438, %v2342, %v2353
        %v2355 = vsel %vm328, %v2349, %v2350
        %v2356 = vsel %vm438, %v2344, %v2355
        %v2357 = vsel %vm438, %v2346, %v2350
        %2362 = vst [vmem:[#allocation2 + $0x70] sm:$0xff] %v2352
        %2363 = vst [vmem:[#allocation2 + $0x78] sm:$0xff] %v2354
        %2364 = vst [vmem:[#allocation2 + $0x80] sm:$0xff] %v2356
        %2365 = vst [vmem:[#allocation2 + $0x88] sm:$0xf] %v2357
        %v2366 = vld [vmem:[#allocation3] sm:$0xff]
        %v2367 = vld [vmem:[#allocation3 + $0x8] sm:$0xff]
        %v2368 = vld [vmem:[#allocation3 + $0x10] sm:$0xff]
        %v2369 = vld [vmem:[#allocation3 + $0x18] sm:$0xff]
        %2374 = vrot.lane.b32.xlu0 %v2366, 116
        %v2375 = vpop.permute.xlu0 %2374
        %2376 = vrot.lane.b32.xlu0 %v2367, 116
        %v2377 = vpop.permute.xlu0 %2376
        %2378 = vrot.lane.b32.xlu0 %v2368, 116
        %v2379 = vpop.permute.xlu0 %2378
        %2380 = vrot.lane.b32.xlu0 %v2369, 116
        %v2381 = vpop.permute.xlu0 %2380
        %v2382 = vrot.slane %v2375, 4
        %v2383 = vrot.slane %v2377, 4
        %v2384 = vrot.slane %v2379, 4
        %v2385 = vrot.slane %v2381, 4
        %v2386 = vsel %vm328, %v2382, %v2383
        %v2387 = vsel %vm474, %v2375, %v2386
        %v2388 = vsel %vm328, %v2383, %v2384
        %v2389 = vsel %vm474, %v2377, %v2388
        %v2390 = vsel %vm328, %v2384, %v2385
        %v2391 = vsel %vm474, %v2379, %v2390
        %v2392 = vsel %vm474, %v2381, %v2385
        %2397 = vst [vmem:[#allocation2 + $0x8c] sm:$0xff] %v2387
        %2398 = vst [vmem:[#allocation2 + $0x94] sm:$0xff] %v2389
        %2399 = vst [vmem:[#allocation2 + $0x9c] sm:$0xff] %v2391
        %2400 = vst [vmem:[#allocation2 + $0xa4] sm:$0xf] %v2392
        %v2401 = vld [vmem:[#allocation3] sm:$0xff]
        %v2402 = vld [vmem:[#allocation3 + $0x8] sm:$0xff]
        %v2403 = vld [vmem:[#allocation3 + $0x10] sm:$0xff]
        %v2404 = vld [vmem:[#allocation3 + $0x18] sm:$0xff]
        %2409 = vrot.lane.b32.xlu0 %v2401, 108
        %v2410 = vpop.permute.xlu0 %2409
        %2411 = vrot.lane.b32.xlu0 %v2402, 108
        %v2412 = vpop.permute.xlu0 %2411
        %2413 = vrot.lane.b32.xlu0 %v2403, 108
        %v2414 = vpop.permute.xlu0 %2413
        %2415 = vrot.lane.b32.xlu0 %v2404, 108
        %v2416 = vpop.permute.xlu0 %2415
        %v2417 = vrot.slane %v2410, 4
        %v2418 = vrot.slane %v2412, 4
        %v2419 = vrot.slane %v2414, 4
        %v2420 = vrot.slane %v2416, 4
        %v2421 = vsel %vm328, %v2417, %v2418
        %v2422 = vsel %vm510, %v2410, %v2421
        %v2423 = vsel %vm328, %v2418, %v2419
        %v2424 = vsel %vm510, %v2412, %v2423
        %v2425 = vsel %vm328, %v2419, %v2420
        %v2426 = vsel %vm510, %v2414, %v2425
        %v2427 = vsel %vm510, %v2416, %v2420
        %2432 = vst [vmem:[#allocation2 + $0xa8] sm:$0xff] %v2422
        %2433 = vst [vmem:[#allocation2 + $0xb0] sm:$0xff] %v2424
        %2434 = vst [vmem:[#allocation2 + $0xb8] sm:$0xff] %v2426
        %2435 = vst [vmem:[#allocation2 + $0xc0] sm:$0xf] %v2427
        %v2436 = vld [vmem:[#allocation3] sm:$0xff]
        %v2437 = vld [vmem:[#allocation3 + $0x8] sm:$0xff]
        %v2438 = vld [vmem:[#allocation3 + $0x10] sm:$0xff]
        %v2439 = vld [vmem:[#allocation3 + $0x18] sm:$0xff]
        %2444 = vrot.lane.b32.xlu0 %v2436, 107
        %v2445 = vpop.permute.xlu0 %2444
        %2446 = vrot.lane.b32.xlu0 %v2437, 107
        %v2447 = vpop.permute.xlu0 %2446
        %2448 = vrot.lane.b32.xlu0 %v2438, 107
        %v2449 = vpop.permute.xlu0 %2448
        %2450 = vrot.lane.b32.xlu0 %v2439, 107
        %v2451 = vpop.permute.xlu0 %2450
        %v2452 = vrot.slane %v2445, 4
        %v2453 = vrot.slane %v2447, 4
        %v2454 = vrot.slane %v2449, 4
        %v2455 = vrot.slane %v2451, 4
        %v2456 = vsel %vm328, %v2452, %v2453
        %v2457 = vsel %vm546, %v2445, %v2456
        %v2458 = vsel %vm328, %v2453, %v2454
        %v2459 = vsel %vm546, %v2447, %v2458
        %v2460 = vsel %vm328, %v2454, %v2455
        %v2461 = vsel %vm546, %v2449, %v2460
        %v2462 = vsel %vm546, %v2451, %v2455
        %2467 = vst [vmem:[#allocation2 + $0xc4] sm:$0xff] %v2457
        %2468 = vst [vmem:[#allocation2 + $0xcc] sm:$0xff] %v2459
        %2469 = vst [vmem:[#allocation2 + $0xd4] sm:$0xff] %v2461
        %2470 = vst [vmem:[#allocation2 + $0xdc] sm:$0xf] %v2462
        %v2471 = vld [vmem:[#allocation3] sm:$0xff]
        %v2472 = vld [vmem:[#allocation3 + $0x8] sm:$0xff]
        %v2473 = vld [vmem:[#allocation3 + $0x10] sm:$0xff]
        %v2474 = vld [vmem:[#allocation3 + $0x18] sm:$0xff]
        %2479 = vrot.lane.b32.xlu0 %v2471, 106
        %v2480 = vpop.permute.xlu0 %2479
        %2481 = vrot.lane.b32.xlu0 %v2472, 106
        %v2482 = vpop.permute.xlu0 %2481
        %2483 = vrot.lane.b32.xlu0 %v2473, 106
        %v2484 = vpop.permute.xlu0 %2483
        %2485 = vrot.lane.b32.xlu0 %v2474, 106
        %v2486 = vpop.permute.xlu0 %2485
        %v2487 = vrot.slane %v2480, 4
        %v2488 = vrot.slane %v2482, 4
        %v2489 = vrot.slane %v2484, 4
        %v2490 = vrot.slane %v2486, 4
        %v2491 = vsel %vm328, %v2487, %v2488
        %v2492 = vsel %vm582, %v2480, %v2491
        %v2493 = vsel %vm328, %v2488, %v2489
        %v2494 = vsel %vm582, %v2482, %v2493
        %v2495 = vsel %vm328, %v2489, %v2490
        %v2496 = vsel %vm582, %v2484, %v2495
        %v2497 = vsel %vm582, %v2486, %v2490
        %2502 = vst [vmem:[#allocation2 + $0xe0] sm:$0xff] %v2492
        %2503 = vst [vmem:[#allocation2 + $0xe8] sm:$0xff] %v2494
        %2504 = vst [vmem:[#allocation2 + $0xf0] sm:$0xff] %v2496
        %2505 = vst [vmem:[#allocation2 + $0xf8] sm:$0xf] %v2497
        %v2506 = vld [vmem:[#allocation3] sm:$0xff]
        %v2507 = vld [vmem:[#allocation3 + $0x8] sm:$0xff]
        %v2508 = vld [vmem:[#allocation3 + $0x10] sm:$0xff]
        %v2509 = vld [vmem:[#allocation3 + $0x18] sm:$0xff]
        %2514 = vrot.lane.b32.xlu0 %v2506, 28
        %v2515 = vpop.permute.xlu0 %2514
        %2516 = vrot.lane.b32.xlu0 %v2507, 28
        %v2517 = vpop.permute.xlu0 %2516
        %2518 = vrot.lane.b32.xlu0 %v2508, 28
        %v2519 = vpop.permute.xlu0 %2518
        %2520 = vrot.lane.b32.xlu0 %v2509, 28
        %v2521 = vpop.permute.xlu0 %2520
        %v2522 = vrot.slane %v2515, 4
        %v2523 = vrot.slane %v2517, 4
        %v2524 = vrot.slane %v2519, 4
        %v2525 = vrot.slane %v2521, 4
        %v2526 = vsel %vm328, %v2522, %v2523
        %v2527 = vsel %vm618, %v2515, %v2526
        %v2528 = vsel %vm328, %v2523, %v2524
        %v2529 = vsel %vm618, %v2517, %v2528
        %v2530 = vsel %vm328, %v2524, %v2525
        %v2531 = vsel %vm618, %v2519, %v2530
        %v2532 = vsel %vm618, %v2521, %v2525
        %2537 = vst [vmem:[#allocation2 + $0xfc] sm:$0xff] %v2527
        %2538 = vst [vmem:[#allocation2 + $0x104] sm:$0xff] %v2529
        %2539 = vst [vmem:[#allocation2 + $0x10c] sm:$0xff] %v2531
        %2540 = vst [vmem:[#allocation2 + $0x114] sm:$0xf] %v2532
        %v2541 = vld [vmem:[#allocation3] sm:$0xff]
        %v2542 = vld [vmem:[#allocation3 + $0x8] sm:$0xff]
        %v2543 = vld [vmem:[#allocation3 + $0x10] sm:$0xff]
        %v2544 = vld [vmem:[#allocation3 + $0x18] sm:$0xff]
        %2549 = vrot.lane.b32.xlu0 %v2541, 27
        %v2550 = vpop.permute.xlu0 %2549
        %2551 = vrot.lane.b32.xlu0 %v2542, 27
        %v2552 = vpop.permute.xlu0 %2551
        %2553 = vrot.lane.b32.xlu0 %v2543, 27
        %v2554 = vpop.permute.xlu0 %2553
        %2555 = vrot.lane.b32.xlu0 %v2544, 27
        %v2556 = vpop.permute.xlu0 %2555
        %v2557 = vrot.slane %v2550, 4
        %v2558 = vrot.slane %v2552, 4
        %v2559 = vrot.slane %v2554, 4
        %v2560 = vrot.slane %v2556, 4
        %v2561 = vsel %vm328, %v2557, %v2558
        %v2562 = vsel %vm654, %v2550, %v2561
        %v2563 = vsel %vm328, %v2558, %v2559
        %v2564 = vsel %vm654, %v2552, %v2563
        %v2565 = vsel %vm328, %v2559, %v2560
        %v2566 = vsel %vm654, %v2554, %v2565
        %v2567 = vsel %vm654, %v2556, %v2560
        %2572 = vst [vmem:[#allocation2 + $0x118] sm:$0xff] %v2562
        %2573 = vst [vmem:[#allocation2 + $0x120] sm:$0xff] %v2564
        %2574 = vst [vmem:[#allocation2 + $0x128] sm:$0xff] %v2566
        %2575 = vst [vmem:[#allocation2 + $0x130] sm:$0xf] %v2567
        %v2576 = vld [vmem:[#allocation3] sm:$0xff]
        %v2577 = vld [vmem:[#allocation3 + $0x8] sm:$0xff]
        %v2578 = vld [vmem:[#allocation3 + $0x10] sm:$0xff]
        %v2579 = vld [vmem:[#allocation3 + $0x18] sm:$0xff]
        %2584 = vrot.lane.b32.xlu0 %v2576, 26
        %v2585 = vpop.permute.xlu0 %2584
        %2586 = vrot.lane.b32.xlu0 %v2577, 26
        %v2587 = vpop.permute.xlu0 %2586
        %2588 = vrot.lane.b32.xlu0 %v2578, 26
        %v2589 = vpop.permute.xlu0 %2588
        %2590 = vrot.lane.b32.xlu0 %v2579, 26
        %v2591 = vpop.permute.xlu0 %2590
        %v2592 = vrot.slane %v2585, 4
        %v2593 = vrot.slane %v2587, 4
        %v2594 = vrot.slane %v2589, 4
        %v2595 = vrot.slane %v2591, 4
        %v2596 = vsel %vm328, %v2592, %v2593
        %v2597 = vsel %vm690, %v2585, %v2596
        %v2598 = vsel %vm328, %v2593, %v2594
        %v2599 = vsel %vm690, %v2587, %v2598
        %v2600 = vsel %vm328, %v2594, %v2595
        %v2601 = vsel %vm690, %v2589, %v2600
        %v2602 = vsel %vm690, %v2591, %v2595
        %2607 = vst [vmem:[#allocation2 + $0x134] sm:$0xff] %v2597
        %2608 = vst [vmem:[#allocation2 + $0x13c] sm:$0xff] %v2599
        %2609 = vst [vmem:[#allocation2 + $0x144] sm:$0xff] %v2601
        %2610 = vst [vmem:[#allocation2 + $0x14c] sm:$0xf] %v2602
        %v2611 = vld [vmem:[#allocation3] sm:$0xff]
        %v2612 = vld [vmem:[#allocation3 + $0x8] sm:$0xff]
        %v2613 = vld [vmem:[#allocation3 + $0x10] sm:$0xff]
        %v2614 = vld [vmem:[#allocation3 + $0x18] sm:$0xff]
        %2619 = vrot.lane.b32.xlu0 %v2611, 18
        %v2620 = vpop.permute.xlu0 %2619
        %2621 = vrot.lane.b32.xlu0 %v2612, 18
        %v2622 = vpop.permute.xlu0 %2621
        %2623 = vrot.lane.b32.xlu0 %v2613, 18
        %v2624 = vpop.permute.xlu0 %2623
        %2625 = vrot.lane.b32.xlu0 %v2614, 18
        %v2626 = vpop.permute.xlu0 %2625
        %v2627 = vrot.slane %v2620, 4
        %v2628 = vrot.slane %v2622, 4
        %v2629 = vrot.slane %v2624, 4
        %v2630 = vrot.slane %v2626, 4
        %v2631 = vsel %vm328, %v2627, %v2628
        %v2632 = vsel %vm726, %v2620, %v2631
        %v2633 = vsel %vm328, %v2628, %v2629
        %v2634 = vsel %vm726, %v2622, %v2633
        %v2635 = vsel %vm328, %v2629, %v2630
        %v2636 = vsel %vm726, %v2624, %v2635
        %v2637 = vsel %vm726, %v2626, %v2630
        %2642 = vst [vmem:[#allocation2 + $0x150] sm:$0xff] %v2632
        %2643 = vst [vmem:[#allocation2 + $0x158] sm:$0xff] %v2634
        %2644 = vst [vmem:[#allocation2 + $0x160] sm:$0xff] %v2636
        %2645 = vst [vmem:[#allocation2 + $0x168] sm:$0xf] %v2637
        %v2646 = vld [vmem:[#allocation3] sm:$0xff]
        %v2647 = vld [vmem:[#allocation3 + $0x8] sm:$0xff]
        %v2648 = vld [vmem:[#allocation3 + $0x10] sm:$0xff]
        %v2649 = vld [vmem:[#allocation3 + $0x18] sm:$0xff]
        %2654 = vrot.lane.b32.xlu0 %v2646, 17
        %v2655 = vpop.permute.xlu0 %2654
        %2656 = vrot.lane.b32.xlu0 %v2647, 17
        %v2657 = vpop.permute.xlu0 %2656
        %2658 = vrot.lane.b32.xlu0 %v2648, 17
        %v2659 = vpop.permute.xlu0 %2658
        %2660 = vrot.lane.b32.xlu0 %v2649, 17
        %v2661 = vpop.permute.xlu0 %2660
        %v2662 = vrot.slane %v2655, 4
        %v2663 = vrot.slane %v2657, 4
        %v2664 = vrot.slane %v2659, 4
        %v2665 = vrot.slane %v2661, 4
        %v2666 = vsel %vm328, %v2662, %v2663
        %v2667 = vsel %vm762, %v2655, %v2666
        %v2668 = vsel %vm328, %v2663, %v2664
        %v2669 = vsel %vm762, %v2657, %v2668
        %v2670 = vsel %vm328, %v2664, %v2665
        %v2671 = vsel %vm762, %v2659, %v2670
        %v2672 = vsel %vm762, %v2661, %v2665
        %2677 = vst [vmem:[#allocation2 + $0x16c] sm:$0xff] %v2667
        %2678 = vst [vmem:[#allocation2 + $0x174] sm:$0xff] %v2669
        %2679 = vst [vmem:[#allocation2 + $0x17c] sm:$0xff] %v2671
        %2680 = vst [vmem:[#allocation2 + $0x184] sm:$0xf] %v2672
        %v2681 = vld [vmem:[#allocation3] sm:$0xff]
        %v2682 = vld [vmem:[#allocation3 + $0x8] sm:$0xff]
        %v2683 = vld [vmem:[#allocation3 + $0x10] sm:$0xff]
        %v2684 = vld [vmem:[#allocation3 + $0x18] sm:$0xff]
        %2689 = vrot.lane.b32.xlu0 %v2681, 16
        %v2690 = vpop.permute.xlu0 %2689
        %2691 = vrot.lane.b32.xlu0 %v2682, 16
        %v2692 = vpop.permute.xlu0 %2691
        %2693 = vrot.lane.b32.xlu0 %v2683, 16
        %v2694 = vpop.permute.xlu0 %2693
        %2695 = vrot.lane.b32.xlu0 %v2684, 16
        %v2696 = vpop.permute.xlu0 %2695
        %v2697 = vrot.slane %v2690, 4
        %v2698 = vrot.slane %v2692, 4
        %v2699 = vrot.slane %v2694, 4
        %v2700 = vrot.slane %v2696, 4
        %v2701 = vsel %vm328, %v2697, %v2698
        %v2702 = vsel %vm798, %v2690, %v2701
        %v2703 = vsel %vm328, %v2698, %v2699
        %v2704 = vsel %vm798, %v2692, %v2703
        %v2705 = vsel %vm328, %v2699, %v2700
        %v2706 = vsel %vm798, %v2694, %v2705
        %v2707 = vsel %vm798, %v2696, %v2700
        %2712 = vst [vmem:[#allocation2 + $0x188] sm:$0xff] %v2702
        %2713 = vst [vmem:[#allocation2 + $0x190] sm:$0xff] %v2704
        %2714 = vst [vmem:[#allocation2 + $0x198] sm:$0xff] %v2706
        %2715 = vst [vmem:[#allocation2 + $0x1a0] sm:$0xf] %v2707
        %v2716 = vld [vmem:[#allocation3] sm:$0xff]
        %v2717 = vld [vmem:[#allocation3 + $0x8] sm:$0xff]
        %v2718 = vld [vmem:[#allocation3 + $0x10] sm:$0xff]
        %v2719 = vld [vmem:[#allocation3 + $0x18] sm:$0xff]
        %2724 = vrot.lane.b32.xlu0 %v2716, 8
        %v2725 = vpop.permute.xlu0 %2724
        %2726 = vrot.lane.b32.xlu0 %v2717, 8
        %v2727 = vpop.permute.xlu0 %2726
        %2728 = vrot.lane.b32.xlu0 %v2718, 8
        %v2729 = vpop.permute.xlu0 %2728
        %2730 = vrot.lane.b32.xlu0 %v2719, 8
        %v2731 = vpop.permute.xlu0 %2730
        %v2732 = vrot.slane %v2725, 4
        %v2733 = vrot.slane %v2727, 4
        %v2734 = vrot.slane %v2729, 4
        %v2735 = vrot.slane %v2731, 4
        %v2736 = vsel %vm328, %v2732, %v2733
        %v2737 = vsel %vm834, %v2725, %v2736
        %v2738 = vsel %vm328, %v2733, %v2734
        %v2739 = vsel %vm834, %v2727, %v2738
        %v2740 = vsel %vm328, %v2734, %v2735
        %v2741 = vsel %vm834, %v2729, %v2740
        %v2742 = vsel %vm834, %v2731, %v2735
        %2747 = vst [vmem:[#allocation2 + $0x1a4] sm:$0xff] %v2737
        %2748 = vst [vmem:[#allocation2 + $0x1ac] sm:$0xff] %v2739
        %2749 = vst [vmem:[#allocation2 + $0x1b4] sm:$0xff] %v2741
        %2750 = vst [vmem:[#allocation2 + $0x1bc] sm:$0xf] %v2742
        %v2751 = vld [vmem:[#allocation3] sm:$0xff]
        %v2752 = vld [vmem:[#allocation3 + $0x8] sm:$0xff]
        %v2753 = vld [vmem:[#allocation3 + $0x10] sm:$0xff]
        %v2754 = vld [vmem:[#allocation3 + $0x18] sm:$0xff]
        %2759 = vrot.lane.b32.xlu0 %v2751, 7
        %v2760 = vpop.permute.xlu0 %2759
        %2761 = vrot.lane.b32.xlu0 %v2752, 7
        %v2762 = vpop.permute.xlu0 %2761
        %2763 = vrot.lane.b32.xlu0 %v2753, 7
        %v2764 = vpop.permute.xlu0 %2763
        %2765 = vrot.lane.b32.xlu0 %v2754, 7
        %v2766 = vpop.permute.xlu0 %2765
        %v2767 = vrot.slane %v2760, 4
        %v2768 = vrot.slane %v2762, 4
        %v2769 = vrot.slane %v2764, 4
        %v2770 = vrot.slane %v2766, 4
        %v2771 = vsel %vm328, %v2767, %v2768
        %v2772 = vsel %vm870, %v2760, %v2771
        %v2773 = vsel %vm328, %v2768, %v2769
        %v2774 = vsel %vm870, %v2762, %v2773
        %v2775 = vsel %vm328, %v2769, %v2770
        %v2776 = vsel %vm870, %v2764, %v2775
        %v2777 = vsel %vm870, %v2766, %v2770
        %2782 = vst [vmem:[#allocation2 + $0x1c0] sm:$0xff] %v2772
        %2783 = vst [vmem:[#allocation2 + $0x1c8] sm:$0xff] %v2774
        %2784 = vst [vmem:[#allocation2 + $0x1d0] sm:$0xff] %v2776
        %2785 = vst [vmem:[#allocation2 + $0x1d8] sm:$0xf] %v2777
        %v2786 = vld [vmem:[#allocation3] sm:$0xff]
        %v2787 = vld [vmem:[#allocation3 + $0x8] sm:$0xff]
        %v2788 = vld [vmem:[#allocation3 + $0x10] sm:$0xff]
        %v2789 = vld [vmem:[#allocation3 + $0x18] sm:$0xff]
        %2794 = vrot.lane.b32.xlu0 %v2786, 6
        %v2795 = vpop.permute.xlu0 %2794
        %2796 = vrot.lane.b32.xlu0 %v2787, 6
        %v2797 = vpop.permute.xlu0 %2796
        %2798 = vrot.lane.b32.xlu0 %v2788, 6
        %v2799 = vpop.permute.xlu0 %2798
        %2800 = vrot.lane.b32.xlu0 %v2789, 6
        %v2801 = vpop.permute.xlu0 %2800
        %v2802 = vrot.slane %v2795, 4
        %v2803 = vrot.slane %v2797, 4
        %v2804 = vrot.slane %v2799, 4
        %v2805 = vrot.slane %v2801, 4
        %v2806 = vsel %vm328, %v2802, %v2803
        %v2807 = vsel %vm906, %v2795, %v2806
        %v2808 = vsel %vm328, %v2803, %v2804
        %v2809 = vsel %vm906, %v2797, %v2808
        %v2810 = vsel %vm328, %v2804, %v2805
        %v2811 = vsel %vm906, %v2799, %v2810
        %v2812 = vsel %vm906, %v2801, %v2805
        %2817 = vst [vmem:[#allocation2 + $0x1dc] sm:$0xff] %v2807
        %2818 = vst [vmem:[#allocation2 + $0x1e4] sm:$0xff] %v2809
        %2819 = vst [vmem:[#allocation2 + $0x1ec] sm:$0xff] %v2811
        %2820 = vst [vmem:[#allocation2 + $0x1f4] sm:$0xf] %v2812
        %v2821 = vld [vmem:[#allocation3 + $0x4] sm:$0xff]
        %v2822 = vld [vmem:[#allocation3 + $0xc] sm:$0xff]
        %v2823 = vld [vmem:[#allocation3 + $0x14] sm:$0xff]
        %v2824 = vld [vmem:[#allocation3 + $0x1c] sm:$0xff]
        %2829 = vrot.lane.b32.xlu0 %v2821, 56
        %v2830 = vpop.permute.xlu0 %2829
        %2831 = vrot.lane.b32.xlu0 %v2822, 56
        %v2832 = vpop.permute.xlu0 %2831
        %2833 = vrot.lane.b32.xlu0 %v2823, 56
        %v2834 = vpop.permute.xlu0 %2833
        %2835 = vrot.lane.b32.xlu0 %v2824, 56
        %v2836 = vpop.permute.xlu0 %2835
        %v2837 = vrot.slane %v2830, 4
        %v2838 = vrot.slane %v2832, 4
        %v2839 = vrot.slane %v2834, 4
        %v2840 = vrot.slane %v2836, 4
        %v2841 = vsel %vm328, %v2837, %v2838
        %v2842 = vsel %vm942, %v2830, %v2841
        %v2843 = vsel %vm328, %v2838, %v2839
        %v2844 = vsel %vm942, %v2832, %v2843
        %v2845 = vsel %vm328, %v2839, %v2840
        %v2846 = vsel %vm942, %v2834, %v2845
        %v2847 = vsel %vm942, %v2836, %v2840
        %2852 = vst [vmem:[#allocation2 + $0x1f8] sm:$0xff] %v2842
        %2853 = vst [vmem:[#allocation2 + $0x200] sm:$0xff] %v2844
        %2854 = vst [vmem:[#allocation2 + $0x208] sm:$0xff] %v2846
        %2855 = vst [vmem:[#allocation2 + $0x210] sm:$0xf] %v2847
        %v2856 = vld [vmem:[#allocation3 + $0x4] sm:$0xff]
        %v2857 = vld [vmem:[#allocation3 + $0xc] sm:$0xff]
        %v2858 = vld [vmem:[#allocation3 + $0x14] sm:$0xff]
        %v2859 = vld [vmem:[#allocation3 + $0x1c] sm:$0xff]
        %2864 = vrot.lane.b32.xlu0 %v2856, 55
        %v2865 = vpop.permute.xlu0 %2864
        %2866 = vrot.lane.b32.xlu0 %v2857, 55
        %v2867 = vpop.permute.xlu0 %2866
        %2868 = vrot.lane.b32.xlu0 %v2858, 55
        %v2869 = vpop.permute.xlu0 %2868
        %2870 = vrot.lane.b32.xlu0 %v2859, 55
        %v2871 = vpop.permute.xlu0 %2870
        %v2872 = vrot.slane %v2865, 4
        %v2873 = vrot.slane %v2867, 4
        %v2874 = vrot.slane %v2869, 4
        %v2875 = vrot.slane %v2871, 4
        %v2876 = vsel %vm328, %v2872, %v2873
        %v2877 = vsel %vm978, %v2865, %v2876
        %v2878 = vsel %vm328, %v2873, %v2874
        %v2879 = vsel %vm978, %v2867, %v2878
        %v2880 = vsel %vm328, %v2874, %v2875
        %v2881 = vsel %vm978, %v2869, %v2880
        %v2882 = vsel %vm978, %v2871, %v2875
        %2887 = vst [vmem:[#allocation2 + $0x214] sm:$0xff] %v2877
        %2888 = vst [vmem:[#allocation2 + $0x21c] sm:$0xff] %v2879
        %2889 = vst [vmem:[#allocation2 + $0x224] sm:$0xff] %v2881
        %2890 = vst [vmem:[#allocation2 + $0x22c] sm:$0xf] %v2882
        %v2891 = vld [vmem:[#allocation3 + $0x4] sm:$0xff]
        %v2892 = vld [vmem:[#allocation3 + $0xc] sm:$0xff]
        %v2893 = vld [vmem:[#allocation3 + $0x14] sm:$0xff]
        %v2894 = vld [vmem:[#allocation3 + $0x1c] sm:$0xff]
        %2899 = vrot.lane.b32.xlu0 %v2891, 54
        %v2900 = vpop.permute.xlu0 %2899
        %2901 = vrot.lane.b32.xlu0 %v2892, 54
        %v2902 = vpop.permute.xlu0 %2901
        %2903 = vrot.lane.b32.xlu0 %v2893, 54
        %v2904 = vpop.permute.xlu0 %2903
        %2905 = vrot.lane.b32.xlu0 %v2894, 54
        %v2906 = vpop.permute.xlu0 %2905
        %v2907 = vrot.slane %v2900, 4
        %v2908 = vrot.slane %v2902, 4
        %v2909 = vrot.slane %v2904, 4
        %v2910 = vrot.slane %v2906, 4
        %v2911 = vsel %vm328, %v2907, %v2908
        %v2912 = vsel %vm1014, %v2900, %v2911
        %v2913 = vsel %vm328, %v2908, %v2909
        %v2914 = vsel %vm1014, %v2902, %v2913
        %v2915 = vsel %vm328, %v2909, %v2910
        %v2916 = vsel %vm1014, %v2904, %v2915
        %v2917 = vsel %vm1014, %v2906, %v2910
        %2922 = vst [vmem:[#allocation2 + $0x230] sm:$0xff] %v2912
        %2923 = vst [vmem:[#allocation2 + $0x238] sm:$0xff] %v2914
        %2924 = vst [vmem:[#allocation2 + $0x240] sm:$0xff] %v2916
        %2925 = vst [vmem:[#allocation2 + $0x248] sm:$0xf] %v2917
        %v2926 = vld [vmem:[#allocation3 + $0x4] sm:$0xff]
        %v2927 = vld [vmem:[#allocation3 + $0xc] sm:$0xff]
        %v2928 = vld [vmem:[#allocation3 + $0x14] sm:$0xff]
        %v2929 = vld [vmem:[#allocation3 + $0x1c] sm:$0xff]
        %2934 = vrot.lane.b32.xlu0 %v2926, 46
        %v2935 = vpop.permute.xlu0 %2934
        %2936 = vrot.lane.b32.xlu0 %v2927, 46
        %v2937 = vpop.permute.xlu0 %2936
        %2938 = vrot.lane.b32.xlu0 %v2928, 46
        %v2939 = vpop.permute.xlu0 %2938
        %2940 = vrot.lane.b32.xlu0 %v2929, 46
        %v2941 = vpop.permute.xlu0 %2940
        %v2942 = vrot.slane %v2935, 4
        %v2943 = vrot.slane %v2937, 4
        %v2944 = vrot.slane %v2939, 4
        %v2945 = vrot.slane %v2941, 4
        %v2946 = vsel %vm328, %v2942, %v2943
        %v2947 = vsel %vm1050, %v2935, %v2946
        %v2948 = vsel %vm328, %v2943, %v2944
        %v2949 = vsel %vm1050, %v2937, %v2948
        %v2950 = vsel %vm328, %v2944, %v2945
        %v2951 = vsel %vm1050, %v2939, %v2950
        %v2952 = vsel %vm1050, %v2941, %v2945
        %2957 = vst [vmem:[#allocation2 + $0x24c] sm:$0xff] %v2947
        %2958 = vst [vmem:[#allocation2 + $0x254] sm:$0xff] %v2949
        %2959 = vst [vmem:[#allocation2 + $0x25c] sm:$0xff] %v2951
        %2960 = vst [vmem:[#allocation2 + $0x264] sm:$0xf] %v2952
        %v2961 = vld [vmem:[#allocation3 + $0x4] sm:$0xff]
        %v2962 = vld [vmem:[#allocation3 + $0xc] sm:$0xff]
        %v2963 = vld [vmem:[#allocation3 + $0x14] sm:$0xff]
        %v2964 = vld [vmem:[#allocation3 + $0x1c] sm:$0xff]
        %2969 = vrot.lane.b32.xlu0 %v2961, 45
        %v2970 = vpop.permute.xlu0 %2969
        %2971 = vrot.lane.b32.xlu0 %v2962, 45
        %v2972 = vpop.permute.xlu0 %2971
        %2973 = vrot.lane.b32.xlu0 %v2963, 45
        %v2974 = vpop.permute.xlu0 %2973
        %2975 = vrot.lane.b32.xlu0 %v2964, 45
        %v2976 = vpop.permute.xlu0 %2975
        %v2977 = vrot.slane %v2970, 4
        %v2978 = vrot.slane %v2972, 4
        %v2979 = vrot.slane %v2974, 4
        %v2980 = vrot.slane %v2976, 4
        %v2981 = vsel %vm328, %v2977, %v2978
        %v2982 = vsel %vm1086, %v2970, %v2981
        %v2983 = vsel %vm328, %v2978, %v2979
        %v2984 = vsel %vm1086, %v2972, %v2983
        %v2985 = vsel %vm328, %v2979, %v2980
        %v2986 = vsel %vm1086, %v2974, %v2985
        %v2987 = vsel %vm1086, %v2976, %v2980
        %2992 = vst [vmem:[#allocation2 + $0x268] sm:$0xff] %v2982
        %2993 = vst [vmem:[#allocation2 + $0x270] sm:$0xff] %v2984
        %2994 = vst [vmem:[#allocation2 + $0x278] sm:$0xff] %v2986
        %2995 = vst [vmem:[#allocation2 + $0x280] sm:$0xf] %v2987
        %v2996 = vld [vmem:[#allocation3 + $0x4] sm:$0xff]
        %v2997 = vld [vmem:[#allocation3 + $0xc] sm:$0xff]
        %v2998 = vld [vmem:[#allocation3 + $0x14] sm:$0xff]
        %v2999 = vld [vmem:[#allocation3 + $0x1c] sm:$0xff]
        %3004 = vrot.lane.b32.xlu0 %v2996, 44
        %v3005 = vpop.permute.xlu0 %3004
        %3006 = vrot.lane.b32.xlu0 %v2997, 44
        %v3007 = vpop.permute.xlu0 %3006
        %3008 = vrot.lane.b32.xlu0 %v2998, 44
        %v3009 = vpop.permute.xlu0 %3008
        %3010 = vrot.lane.b32.xlu0 %v2999, 44
        %v3011 = vpop.permute.xlu0 %3010
        %v3012 = vrot.slane %v3005, 4
        %v3013 = vrot.slane %v3007, 4
        %v3014 = vrot.slane %v3009, 4
        %v3015 = vrot.slane %v3011, 4
        %v3016 = vsel %vm328, %v3012, %v3013
        %v3017 = vsel %vm1122, %v3005, %v3016
        %v3018 = vsel %vm328, %v3013, %v3014
        %v3019 = vsel %vm1122, %v3007, %v3018
        %v3020 = vsel %vm328, %v3014, %v3015
        %v3021 = vsel %vm1122, %v3009, %v3020
        %v3022 = vsel %vm1122, %v3011, %v3015
        %3027 = vst [vmem:[#allocation2 + $0x284] sm:$0xff] %v3017
        %3028 = vst [vmem:[#allocation2 + $0x28c] sm:$0xff] %v3019
        %3029 = vst [vmem:[#allocation2 + $0x294] sm:$0xff] %v3021
        %3030 = vst [vmem:[#allocation2 + $0x29c] sm:$0xf] %v3022
        %v3031 = vld [vmem:[#allocation3 + $0x4] sm:$0xff]
        %v3032 = vld [vmem:[#allocation3 + $0xc] sm:$0xff]
        %v3033 = vld [vmem:[#allocation3 + $0x14] sm:$0xff]
        %v3034 = vld [vmem:[#allocation3 + $0x1c] sm:$0xff]
        %3039 = vrot.lane.b32.xlu0 %v3031, 36
        %v3040 = vpop.permute.xlu0 %3039
        %3041 = vrot.lane.b32.xlu0 %v3032, 36
        %v3042 = vpop.permute.xlu0 %3041
        %3043 = vrot.lane.b32.xlu0 %v3033, 36
        %v3044 = vpop.permute.xlu0 %3043
        %3045 = vrot.lane.b32.xlu0 %v3034, 36
        %v3046 = vpop.permute.xlu0 %3045
        %v3047 = vrot.slane %v3040, 4
        %v3048 = vrot.slane %v3042, 4
        %v3049 = vrot.slane %v3044, 4
        %v3050 = vrot.slane %v3046, 4
        %v3051 = vsel %vm328, %v3047, %v3048
        %v3052 = vsel %vm1158, %v3040, %v3051
        %v3053 = vsel %vm328, %v3048, %v3049
        %v3054 = vsel %vm1158, %v3042, %v3053
        %v3055 = vsel %vm328, %v3049, %v3050
        %v3056 = vsel %vm1158, %v3044, %v3055
        %v3057 = vsel %vm1158, %v3046, %v3050
        %3062 = vst [vmem:[#allocation2 + $0x2a0] sm:$0xff] %v3052
        %3063 = vst [vmem:[#allocation2 + $0x2a8] sm:$0xff] %v3054
        %3064 = vst [vmem:[#allocation2 + $0x2b0] sm:$0xff] %v3056
        %3065 = vst [vmem:[#allocation2 + $0x2b8] sm:$0xf] %v3057
        %v3066 = vld [vmem:[#allocation3 + $0x4] sm:$0xff]
        %v3067 = vld [vmem:[#allocation3 + $0xc] sm:$0xff]
        %v3068 = vld [vmem:[#allocation3 + $0x14] sm:$0xff]
        %v3069 = vld [vmem:[#allocation3 + $0x1c] sm:$0xff]
        %3074 = vrot.lane.b32.xlu0 %v3066, 35
        %v3075 = vpop.permute.xlu0 %3074
        %3076 = vrot.lane.b32.xlu0 %v3067, 35
        %v3077 = vpop.permute.xlu0 %3076
        %3078 = vrot.lane.b32.xlu0 %v3068, 35
        %v3079 = vpop.permute.xlu0 %3078
        %3080 = vrot.lane.b32.xlu0 %v3069, 35
        %v3081 = vpop.permute.xlu0 %3080
        %v3082 = vrot.slane %v3075, 4
        %v3083 = vrot.slane %v3077, 4
        %v3084 = vrot.slane %v3079, 4
        %v3085 = vrot.slane %v3081, 4
        %v3086 = vsel %vm328, %v3082, %v3083
        %v3087 = vsel %vm1194, %v3075, %v3086
        %v3088 = vsel %vm328, %v3083, %v3084
        %v3089 = vsel %vm1194, %v3077, %v3088
        %v3090 = vsel %vm328, %v3084, %v3085
        %v3091 = vsel %vm1194, %v3079, %v3090
        %v3092 = vsel %vm1194, %v3081, %v3085
        %3097 = vst [vmem:[#allocation2 + $0x2bc] sm:$0xff] %v3087
        %3098 = vst [vmem:[#allocation2 + $0x2c4] sm:$0xff] %v3089
        %3099 = vst [vmem:[#allocation2 + $0x2cc] sm:$0xff] %v3091
        %3100 = vst [vmem:[#allocation2 + $0x2d4] sm:$0xf] %v3092
        %v3101 = vld [vmem:[#allocation3 + $0x4] sm:$0xff]
        %v3102 = vld [vmem:[#allocation3 + $0xc] sm:$0xff]
        %v3103 = vld [vmem:[#allocation3 + $0x14] sm:$0xff]
        %v3104 = vld [vmem:[#allocation3 + $0x1c] sm:$0xff]
        %3109 = vrot.lane.b32.xlu0 %v3101, 34
        %v3110 = vpop.permute.xlu0 %3109
        %3111 = vrot.lane.b32.xlu0 %v3102, 34
        %v3112 = vpop.permute.xlu0 %3111
        %3113 = vrot.lane.b32.xlu0 %v3103, 34
        %v3114 = vpop.permute.xlu0 %3113
        %3115 = vrot.lane.b32.xlu0 %v3104, 34
        %v3116 = vpop.permute.xlu0 %3115
        %v3117 = vrot.slane %v3110, 4
        %v3118 = vrot.slane %v3112, 4
        %v3119 = vrot.slane %v3114, 4
        %v3120 = vrot.slane %v3116, 4
        %v3121 = vsel %vm328, %v3117, %v3118
        %v3122 = vsel %vm1230, %v3110, %v3121
        %v3123 = vsel %vm328, %v3118, %v3119
        %v3124 = vsel %vm1230, %v3112, %v3123
        %v3125 = vsel %vm328, %v3119, %v3120
        %v3126 = vsel %vm1230, %v3114, %v3125
        %v3127 = vsel %vm1230, %v3116, %v3120
        %3132 = vst [vmem:[#allocation2 + $0x2d8] sm:$0xff] %v3122
        %3133 = vst [vmem:[#allocation2 + $0x2e0] sm:$0xff] %v3124
        %3134 = vst [vmem:[#allocation2 + $0x2e8] sm:$0xff] %v3126
        %3135 = vst [vmem:[#allocation2 + $0x2f0] sm:$0xf] %v3127
        %v3136 = vld [vmem:[%s3] sm:$0xff]
        %v3137 = vld [vmem:[%s3 + $0x8] sm:$0xff]
        %v3138 = vld [vmem:[#allocation2] sm:$0xff]
        %v3139 = vld [vmem:[#allocation2 + $0x8] sm:$0xff]
        %v3140 = vld [vmem:[#allocation2 + $0x10] sm:$0xff]
        %v3141 = vld [vmem:[#allocation2 + $0x18] sm:$0xf]
        %v3142 = vld [vmem:[#allocation2 + $0x1c] sm:$0xff]
        %v3143 = vld [vmem:[#allocation2 + $0x24] sm:$0xff]
        %v3144 = vld [vmem:[#allocation2 + $0x2c] sm:$0xff]
        %v3145 = vld [vmem:[#allocation2 + $0x34] sm:$0xf]
        %v3146 = vld [vmem:[#allocation2 + $0x38] sm:$0xff]
        %v3147 = vld [vmem:[#allocation2 + $0x40] sm:$0xff]
        %v3148 = vld [vmem:[#allocation2 + $0x48] sm:$0xff]
        %v3149 = vld [vmem:[#allocation2 + $0x50] sm:$0xf]
        %v3150 = vld [vmem:[#allocation2 + $0x54] sm:$0xff]
        %v3151 = vld [vmem:[#allocation2 + $0x5c] sm:$0xff]
        %v3152 = vld [vmem:[#allocation2 + $0x64] sm:$0xff]
        %v3153 = vld [vmem:[#allocation2 + $0x6c] sm:$0xf]
        %v3154 = vld [vmem:[#allocation2 + $0x70] sm:$0xff]
        %v3155 = vld [vmem:[#allocation2 + $0x78] sm:$0xff]
        %v3156 = vld [vmem:[#allocation2 + $0x80] sm:$0xff]
        %v3157 = vld [vmem:[#allocation2 + $0x88] sm:$0xf]
        %v3158 = vld [vmem:[#allocation2 + $0x8c] sm:$0xff]
        %v3159 = vld [vmem:[#allocation2 + $0x94] sm:$0xff]
        %v3160 = vld [vmem:[#allocation2 + $0x9c] sm:$0xff]
        %v3161 = vld [vmem:[#allocation2 + $0xa4] sm:$0xf]
        %v3162 = vld [vmem:[#allocation2 + $0xa8] sm:$0xff]
        %v3163 = vld [vmem:[#allocation2 + $0xb0] sm:$0xff]
        %v3164 = vld [vmem:[#allocation2 + $0xb8] sm:$0xff]
        %v3165 = vld [vmem:[#allocation2 + $0xc0] sm:$0xf]
        %v3166 = vld [vmem:[#allocation2 + $0xc4] sm:$0xff]
        %v3167 = vld [vmem:[#allocation2 + $0xcc] sm:$0xff]
        %v3168 = vld [vmem:[#allocation2 + $0xd4] sm:$0xff]
        %v3169 = vld [vmem:[#allocation2 + $0xdc] sm:$0xf]
        %v3170 = vld [vmem:[#allocation2 + $0xe0] sm:$0xff]
        %v3171 = vld [vmem:[#allocation2 + $0xe8] sm:$0xff]
        %v3172 = vld [vmem:[#allocation2 + $0xf0] sm:$0xff]
        %v3173 = vld [vmem:[#allocation2 + $0xf8] sm:$0xf]
        %v3174 = vld [vmem:[#allocation2 + $0xfc] sm:$0xff]
        %v3175 = vld [vmem:[#allocation2 + $0x104] sm:$0xff]
        %v3176 = vld [vmem:[#allocation2 + $0x10c] sm:$0xff]
        %v3177 = vld [vmem:[#allocation2 + $0x114] sm:$0xf]
        %v3178 = vld [vmem:[#allocation2 + $0x118] sm:$0xff]
        %v3179 = vld [vmem:[#allocation2 + $0x120] sm:$0xff]
        %v3180 = vld [vmem:[#allocation2 + $0x128] sm:$0xff]
        %v3181 = vld [vmem:[#allocation2 + $0x130] sm:$0xf]
        %v3182 = vld [vmem:[#allocation2 + $0x134] sm:$0xff]
        %v3183 = vld [vmem:[#allocation2 + $0x13c] sm:$0xff]
        %v3184 = vld [vmem:[#allocation2 + $0x144] sm:$0xff]
        %v3185 = vld [vmem:[#allocation2 + $0x14c] sm:$0xf]
        %v3186 = vld [vmem:[#allocation2 + $0x150] sm:$0xff]
        %v3187 = vld [vmem:[#allocation2 + $0x158] sm:$0xff]
        %v3188 = vld [vmem:[#allocation2 + $0x160] sm:$0xff]
        %v3189 = vld [vmem:[#allocation2 + $0x168] sm:$0xf]
        %v3190 = vld [vmem:[#allocation2 + $0x16c] sm:$0xff]
        %v3191 = vld [vmem:[#allocation2 + $0x174] sm:$0xff]
        %v3192 = vld [vmem:[#allocation2 + $0x17c] sm:$0xff]
        %v3193 = vld [vmem:[#allocation2 + $0x184] sm:$0xf]
        %v3194 = vld [vmem:[#allocation2 + $0x188] sm:$0xff]
        %v3195 = vld [vmem:[#allocation2 + $0x190] sm:$0xff]
        %v3196 = vld [vmem:[#allocation2 + $0x198] sm:$0xff]
        %v3197 = vld [vmem:[#allocation2 + $0x1a0] sm:$0xf]
        %v3198 = vld [vmem:[#allocation2 + $0x1a4] sm:$0xff]
        %v3199 = vld [vmem:[#allocation2 + $0x1ac] sm:$0xff]
        %v3200 = vld [vmem:[#allocation2 + $0x1b4] sm:$0xff]
        %v3201 = vld [vmem:[#allocation2 + $0x1bc] sm:$0xf]
        %v3202 = vld [vmem:[#allocation2 + $0x1c0] sm:$0xff]
        %v3203 = vld [vmem:[#allocation2 + $0x1c8] sm:$0xff]
        %v3204 = vld [vmem:[#allocation2 + $0x1d0] sm:$0xff]
        %v3205 = vld [vmem:[#allocation2 + $0x1d8] sm:$0xf]
        %v3206 = vld [vmem:[#allocation2 + $0x1dc] sm:$0xff]
        %v3207 = vld [vmem:[#allocation2 + $0x1e4] sm:$0xff]
        %v3208 = vld [vmem:[#allocation2 + $0x1ec] sm:$0xff]
        %v3209 = vld [vmem:[#allocation2 + $0x1f4] sm:$0xf]
        %v3210 = vld [vmem:[#allocation2 + $0x1f8] sm:$0xff]
        %v3211 = vld [vmem:[#allocation2 + $0x200] sm:$0xff]
        %v3212 = vld [vmem:[#allocation2 + $0x208] sm:$0xff]
        %v3213 = vld [vmem:[#allocation2 + $0x210] sm:$0xf]
        %v3214 = vld [vmem:[#allocation2 + $0x214] sm:$0xff]
        %v3215 = vld [vmem:[#allocation2 + $0x21c] sm:$0xff]
        %v3216 = vld [vmem:[#allocation2 + $0x224] sm:$0xff]
        %v3217 = vld [vmem:[#allocation2 + $0x22c] sm:$0xf]
        %v3218 = vld [vmem:[#allocation2 + $0x230] sm:$0xff]
        %v3219 = vld [vmem:[#allocation2 + $0x238] sm:$0xff]
        %v3220 = vld [vmem:[#allocation2 + $0x240] sm:$0xff]
        %v3221 = vld [vmem:[#allocation2 + $0x248] sm:$0xf]
        %v3222 = vld [vmem:[#allocation2 + $0x24c] sm:$0xff]
        %v3223 = vld [vmem:[#allocation2 + $0x254] sm:$0xff]
        %v3224 = vld [vmem:[#allocation2 + $0x25c] sm:$0xff]
        %v3225 = vld [vmem:[#allocation2 + $0x264] sm:$0xf]
        %v3226 = vld [vmem:[#allocation2 + $0x268] sm:$0xff]
        %v3227 = vld [vmem:[#allocation2 + $0x270] sm:$0xff]
        %v3228 = vld [vmem:[#allocation2 + $0x278] sm:$0xff]
        %v3229 = vld [vmem:[#allocation2 + $0x280] sm:$0xf]
        %v3230 = vld [vmem:[#allocation2 + $0x284] sm:$0xff]
        %v3231 = vld [vmem:[#allocation2 + $0x28c] sm:$0xff]
        %v3232 = vld [vmem:[#allocation2 + $0x294] sm:$0xff]
        %v3233 = vld [vmem:[#allocation2 + $0x29c] sm:$0xf]
        %v3234 = vld [vmem:[#allocation2 + $0x2a0] sm:$0xff]
        %v3235 = vld [vmem:[#allocation2 + $0x2a8] sm:$0xff]
        %v3236 = vld [vmem:[#allocation2 + $0x2b0] sm:$0xff]
        %v3237 = vld [vmem:[#allocation2 + $0x2b8] sm:$0xf]
        %v3238 = vld [vmem:[#allocation2 + $0x2bc] sm:$0xff]
        %v3239 = vld [vmem:[#allocation2 + $0x2c4] sm:$0xff]
        %v3240 = vld [vmem:[#allocation2 + $0x2cc] sm:$0xff]
        %v3241 = vld [vmem:[#allocation2 + $0x2d4] sm:$0xf]
        %v3242 = vld [vmem:[#allocation2 + $0x2d8] sm:$0xff]
        %v3243 = vld [vmem:[#allocation2 + $0x2e0] sm:$0xff]
        %v3244 = vld [vmem:[#allocation2 + $0x2e8] sm:$0xff]
        %v3245 = vld [vmem:[#allocation2 + $0x2f0] sm:$0xf]
        %v3248 = vunpack.c.l.b16 %v3136
        %v3249 = vunpack.c.h.b16 %v3136
        %v3250 = vunpack.c.l.b16 %v3137
        %v3251 = vunpack.c.h.b16 %v3137
        %v3252 = vpack.c.b16 %v3250, %v3248
        %v3253 = vpack.c.b16 %v3251, %v3249
        %v3363 = vunpack.c.l.b16 %v3138
        %v3364 = vunpack.c.h.b16 %v3138
        %v3365 = vunpack.c.l.b16 %v3139
        %v3366 = vunpack.c.h.b16 %v3139
        %v3367 = vunpack.c.l.b16 %v3140
        %v3368 = vunpack.c.h.b16 %v3140
        %v3369 = vunpack.c.l.b16 %v3141
        %v3370 = vunpack.c.l.b16 %v3142
        %v3371 = vunpack.c.h.b16 %v3142
        %v3372 = vunpack.c.l.b16 %v3143
        %v3373 = vunpack.c.h.b16 %v3143
        %v3374 = vunpack.c.l.b16 %v3144
        %v3375 = vunpack.c.h.b16 %v3144
        %v3376 = vunpack.c.l.b16 %v3145
        %v3377 = vunpack.c.l.b16 %v3146
        %v3378 = vunpack.c.h.b16 %v3146
        %v3379 = vunpack.c.l.b16 %v3147
        %v3380 = vunpack.c.h.b16 %v3147
        %v3381 = vunpack.c.l.b16 %v3148
        %v3382 = vunpack.c.h.b16 %v3148
        %v3383 = vunpack.c.l.b16 %v3149
        %v3384 = vunpack.c.l.b16 %v3150
        %v3385 = vunpack.c.h.b16 %v3150
        %v3386 = vunpack.c.l.b16 %v3151
        %v3387 = vunpack.c.h.b16 %v3151
        %v3388 = vunpack.c.l.b16 %v3152
        %v3389 = vunpack.c.h.b16 %v3152
        %v3390 = vunpack.c.l.b16 %v3153
        %v3391 = vunpack.c.l.b16 %v3154
        %v3392 = vunpack.c.h.b16 %v3154
        %v3393 = vunpack.c.l.b16 %v3155
        %v3394 = vunpack.c.h.b16 %v3155
        %v3395 = vunpack.c.l.b16 %v3156
        %v3396 = vunpack.c.h.b16 %v3156
        %v3397 = vunpack.c.l.b16 %v3157
        %v3398 = vunpack.c.l.b16 %v3158
        %v3399 = vunpack.c.h.b16 %v3158
        %v3400 = vunpack.c.l.b16 %v3159
        %v3401 = vunpack.c.h.b16 %v3159
        %v3402 = vunpack.c.l.b16 %v3160
        %v3403 = vunpack.c.h.b16 %v3160
        %v3404 = vunpack.c.l.b16 %v3161
        %v3405 = vunpack.c.l.b16 %v3162
        %v3406 = vunpack.c.h.b16 %v3162
        %v3407 = vunpack.c.l.b16 %v3163
        %v3408 = vunpack.c.h.b16 %v3163
        %v3409 = vunpack.c.l.b16 %v3164
        %v3410 = vunpack.c.h.b16 %v3164
        %v3411 = vunpack.c.l.b16 %v3165
        %v3412 = vunpack.c.l.b16 %v3166
        %v3413 = vunpack.c.h.b16 %v3166
        %v3414 = vunpack.c.l.b16 %v3167
        %v3415 = vunpack.c.h.b16 %v3167
        %v3416 = vunpack.c.l.b16 %v3168
        %v3417 = vunpack.c.h.b16 %v3168
        %v3418 = vunpack.c.l.b16 %v3169
        %v3419 = vunpack.c.l.b16 %v3170
        %v3420 = vunpack.c.h.b16 %v3170
        %v3421 = vunpack.c.l.b16 %v3171
        %v3422 = vunpack.c.h.b16 %v3171
        %v3423 = vunpack.c.l.b16 %v3172
        %v3424 = vunpack.c.h.b16 %v3172
        %v3425 = vunpack.c.l.b16 %v3173
        %v3426 = vunpack.c.l.b16 %v3174
        %v3427 = vunpack.c.h.b16 %v3174
        %v3428 = vunpack.c.l.b16 %v3175
        %v3429 = vunpack.c.h.b16 %v3175
        %v3430 = vunpack.c.l.b16 %v3176
        %v3431 = vunpack.c.h.b16 %v3176
        %v3432 = vunpack.c.l.b16 %v3177
        %v3433 = vunpack.c.l.b16 %v3178
        %v3434 = vunpack.c.h.b16 %v3178
        %v3435 = vunpack.c.l.b16 %v3179
        %v3436 = vunpack.c.h.b16 %v3179
        %v3437 = vunpack.c.l.b16 %v3180
        %v3438 = vunpack.c.h.b16 %v3180
        %v3439 = vunpack.c.l.b16 %v3181
        %v3440 = vunpack.c.l.b16 %v3182
        %v3441 = vunpack.c.h.b16 %v3182
        %v3442 = vunpack.c.l.b16 %v3183
        %v3443 = vunpack.c.h.b16 %v3183
        %v3444 = vunpack.c.l.b16 %v3184
        %v3445 = vunpack.c.h.b16 %v3184
        %v3446 = vunpack.c.l.b16 %v3185
        %v3447 = vunpack.c.l.b16 %v3186
        %v3448 = vunpack.c.h.b16 %v3186
        %v3449 = vunpack.c.l.b16 %v3187
        %v3450 = vunpack.c.h.b16 %v3187
        %v3451 = vunpack.c.l.b16 %v3188
        %v3452 = vunpack.c.h.b16 %v3188
        %v3453 = vunpack.c.l.b16 %v3189
        %v3454 = vunpack.c.l.b16 %v3190
        %v3455 = vunpack.c.h.b16 %v3190
        %v3456 = vunpack.c.l.b16 %v3191
        %v3457 = vunpack.c.h.b16 %v3191
        %v3458 = vunpack.c.l.b16 %v3192
        %v3459 = vunpack.c.h.b16 %v3192
        %v3460 = vunpack.c.l.b16 %v3193
        %v3461 = vunpack.c.l.b16 %v3194
        %v3462 = vunpack.c.h.b16 %v3194
        %v3463 = vunpack.c.l.b16 %v3195
        %v3464 = vunpack.c.h.b16 %v3195
        %v3465 = vunpack.c.l.b16 %v3196
        %v3466 = vunpack.c.h.b16 %v3196
        %v3467 = vunpack.c.l.b16 %v3197
        %v3468 = vunpack.c.l.b16 %v3198
        %v3469 = vunpack.c.h.b16 %v3198
        %v3470 = vunpack.c.l.b16 %v3199
        %v3471 = vunpack.c.h.b16 %v3199
        %v3472 = vunpack.c.l.b16 %v3200
        %v3473 = vunpack.c.h.b16 %v3200
        %v3474 = vunpack.c.l.b16 %v3201
        %v3475 = vunpack.c.l.b16 %v3202
        %v3476 = vunpack.c.h.b16 %v3202
        %v3477 = vunpack.c.l.b16 %v3203
        %v3478 = vunpack.c.h.b16 %v3203
        %v3479 = vunpack.c.l.b16 %v3204
        %v3480 = vunpack.c.h.b16 %v3204
        %v3481 = vunpack.c.l.b16 %v3205
        %v3482 = vunpack.c.l.b16 %v3206
        %v3483 = vunpack.c.h.b16 %v3206
        %v3484 = vunpack.c.l.b16 %v3207
        %v3485 = vunpack.c.h.b16 %v3207
        %v3486 = vunpack.c.l.b16 %v3208
        %v3487 = vunpack.c.h.b16 %v3208
        %v3488 = vunpack.c.l.b16 %v3209
        %v3489 = vunpack.c.l.b16 %v3210
        %v3490 = vunpack.c.h.b16 %v3210
        %v3491 = vunpack.c.l.b16 %v3211
        %v3492 = vunpack.c.h.b16 %v3211
        %v3493 = vunpack.c.l.b16 %v3212
        %v3494 = vunpack.c.h.b16 %v3212
        %v3495 = vunpack.c.l.b16 %v3213
        %v3496 = vunpack.c.l.b16 %v3214
        %v3497 = vunpack.c.h.b16 %v3214
        %v3498 = vunpack.c.l.b16 %v3215
        %v3499 = vunpack.c.h.b16 %v3215
        %v3500 = vunpack.c.l.b16 %v3216
        %v3501 = vunpack.c.h.b16 %v3216
        %v3502 = vunpack.c.l.b16 %v3217
        %v3503 = vunpack.c.l.b16 %v3218
        %v3504 = vunpack.c.h.b16 %v3218
        %v3505 = vunpack.c.l.b16 %v3219
        %v3506 = vunpack.c.h.b16 %v3219
        %v3507 = vunpack.c.l.b16 %v3220
        %v3508 = vunpack.c.h.b16 %v3220
        %v3509 = vunpack.c.l.b16 %v3221
        %v3510 = vunpack.c.l.b16 %v3222
        %v3511 = vunpack.c.h.b16 %v3222
        %v3512 = vunpack.c.l.b16 %v3223
        %v3513 = vunpack.c.h.b16 %v3223
        %v3514 = vunpack.c.l.b16 %v3224
        %v3515 = vunpack.c.h.b16 %v3224
        %v3516 = vunpack.c.l.b16 %v3225
        %v3517 = vunpack.c.l.b16 %v3226
        %v3518 = vunpack.c.h.b16 %v3226
        %v3519 = vunpack.c.l.b16 %v3227
        %v3520 = vunpack.c.h.b16 %v3227
        %v3521 = vunpack.c.l.b16 %v3228
        %v3522 = vunpack.c.h.b16 %v3228
        %v3523 = vunpack.c.l.b16 %v3229
        %v3524 = vunpack.c.l.b16 %v3230
        %v3525 = vunpack.c.h.b16 %v3230
        %v3526 = vunpack.c.l.b16 %v3231
        %v3527 = vunpack.c.h.b16 %v3231
        %v3528 = vunpack.c.l.b16 %v3232
        %v3529 = vunpack.c.h.b16 %v3232
        %v3530 = vunpack.c.l.b16 %v3233
        %v3531 = vunpack.c.l.b16 %v3234
        %v3532 = vunpack.c.h.b16 %v3234
        %v3533 = vunpack.c.l.b16 %v3235
        %v3534 = vunpack.c.h.b16 %v3235
        %v3535 = vunpack.c.l.b16 %v3236
        %v3536 = vunpack.c.h.b16 %v3236
        %v3537 = vunpack.c.l.b16 %v3237
        %v3538 = vunpack.c.l.b16 %v3238
        %v3539 = vunpack.c.h.b16 %v3238
        %v3540 = vunpack.c.l.b16 %v3239
        %v3541 = vunpack.c.h.b16 %v3239
        %v3542 = vunpack.c.l.b16 %v3240
        %v3543 = vunpack.c.h.b16 %v3240
        %v3544 = vunpack.c.l.b16 %v3241
        %v3545 = vunpack.c.l.b16 %v3242
        %v3546 = vunpack.c.h.b16 %v3242
        %v3547 = vunpack.c.l.b16 %v3243
        %v3548 = vunpack.c.h.b16 %v3243
        %v3549 = vunpack.c.l.b16 %v3244
        %v3550 = vunpack.c.h.b16 %v3244
        %v3551 = vunpack.c.l.b16 %v3245
        %v3552 = vpack.c.b16 %v3370, %v3363
        %v3553 = vpack.c.b16 %v3371, %v3364
        %v3554 = vpack.c.b16 %v3372, %v3365
        %v3555 = vpack.c.b16 %v3373, %v3366
        %v3556 = vpack.c.b16 %v3374, %v3367
        %v3557 = vpack.c.b16 %v3375, %v3368
        %v3558 = vpack.c.b16 %v3376, %v3369
        %v3559 = vpack.c.b16 %v3384, %v3377
        %v3560 = vpack.c.b16 %v3385, %v3378
        %v3561 = vpack.c.b16 %v3386, %v3379
        %v3562 = vpack.c.b16 %v3387, %v3380
        %v3563 = vpack.c.b16 %v3388, %v3381
        %v3564 = vpack.c.b16 %v3389, %v3382
        %v3565 = vpack.c.b16 %v3390, %v3383
        %v3566 = vpack.c.b16 %v3398, %v3391
        %v3567 = vpack.c.b16 %v3399, %v3392
        %v3568 = vpack.c.b16 %v3400, %v3393
        %v3569 = vpack.c.b16 %v3401, %v3394
        %v3570 = vpack.c.b16 %v3402, %v3395
        %v3571 = vpack.c.b16 %v3403, %v3396
        %v3572 = vpack.c.b16 %v3404, %v3397
        %v3573 = vpack.c.b16 %v3412, %v3405
        %v3574 = vpack.c.b16 %v3413, %v3406
        %v3575 = vpack.c.b16 %v3414, %v3407
        %v3576 = vpack.c.b16 %v3415, %v3408
        %v3577 = vpack.c.b16 %v3416, %v3409
        %v3578 = vpack.c.b16 %v3417, %v3410
        %v3579 = vpack.c.b16 %v3418, %v3411
        %v3580 = vpack.c.b16 %v3426, %v3419
        %v3581 = vpack.c.b16 %v3427, %v3420
        %v3582 = vpack.c.b16 %v3428, %v3421
        %v3583 = vpack.c.b16 %v3429, %v3422
        %v3584 = vpack.c.b16 %v3430, %v3423
        %v3585 = vpack.c.b16 %v3431, %v3424
        %v3586 = vpack.c.b16 %v3432, %v3425
        %v3587 = vpack.c.b16 %v3440, %v3433
        %v3588 = vpack.c.b16 %v3441, %v3434
        %v3589 = vpack.c.b16 %v3442, %v3435
        %v3590 = vpack.c.b16 %v3443, %v3436
        %v3591 = vpack.c.b16 %v3444, %v3437
        %v3592 = vpack.c.b16 %v3445, %v3438
        %v3593 = vpack.c.b16 %v3446, %v3439
        %v3594 = vpack.c.b16 %v3454, %v3447
        %v3595 = vpack.c.b16 %v3455, %v3448
        %v3596 = vpack.c.b16 %v3456, %v3449
        %v3597 = vpack.c.b16 %v3457, %v3450
        %v3598 = vpack.c.b16 %v3458, %v3451
        %v3599 = vpack.c.b16 %v3459, %v3452
        %v3600 = vpack.c.b16 %v3460, %v3453
        %v3601 = vpack.c.b16 %v3468, %v3461
        %v3602 = vpack.c.b16 %v3469, %v3462
        %v3603 = vpack.c.b16 %v3470, %v3463
        %v3604 = vpack.c.b16 %v3471, %v3464
        %v3605 = vpack.c.b16 %v3472, %v3465
        %v3606 = vpack.c.b16 %v3473, %v3466
        %v3607 = vpack.c.b16 %v3474, %v3467
        %v3608 = vpack.c.b16 %v3482, %v3475
        %v3609 = vpack.c.b16 %v3483, %v3476
        %v3610 = vpack.c.b16 %v3484, %v3477
        %v3611 = vpack.c.b16 %v3485, %v3478
        %v3612 = vpack.c.b16 %v3486, %v3479
        %v3613 = vpack.c.b16 %v3487, %v3480
        %v3614 = vpack.c.b16 %v3488, %v3481
        %v3615 = vpack.c.b16 %v3496, %v3489
        %v3616 = vpack.c.b16 %v3497, %v3490
        %v3617 = vpack.c.b16 %v3498, %v3491
        %v3618 = vpack.c.b16 %v3499, %v3492
        %v3619 = vpack.c.b16 %v3500, %v3493
        %v3620 = vpack.c.b16 %v3501, %v3494
        %v3621 = vpack.c.b16 %v3502, %v3495
        %v3622 = vpack.c.b16 %v3510, %v3503
        %v3623 = vpack.c.b16 %v3511, %v3504
        %v3624 = vpack.c.b16 %v3512, %v3505
        %v3625 = vpack.c.b16 %v3513, %v3506
        %v3626 = vpack.c.b16 %v3514, %v3507
        %v3627 = vpack.c.b16 %v3515, %v3508
        %v3628 = vpack.c.b16 %v3516, %v3509
        %v3629 = vpack.c.b16 %v3524, %v3517
        %v3630 = vpack.c.b16 %v3525, %v3518
        %v3631 = vpack.c.b16 %v3526, %v3519
        %v3632 = vpack.c.b16 %v3527, %v3520
        %v3633 = vpack.c.b16 %v3528, %v3521
        %v3634 = vpack.c.b16 %v3529, %v3522
        %v3635 = vpack.c.b16 %v3530, %v3523
        %v3636 = vpack.c.b16 %v3538, %v3531
        %v3637 = vpack.c.b16 %v3539, %v3532
        %v3638 = vpack.c.b16 %v3540, %v3533
        %v3639 = vpack.c.b16 %v3541, %v3534
        %v3640 = vpack.c.b16 %v3542, %v3535
        %v3641 = vpack.c.b16 %v3543, %v3536
        %v3642 = vpack.c.b16 %v3544, %v3537
        %v3643 = vpack.c.b16 %v3545, %v3545
        %v3644 = vpack.c.b16 %v3546, %v3546
        %v3645 = vpack.c.b16 %v3547, %v3547
        %v3646 = vpack.c.b16 %v3548, %v3548
        %v3647 = vpack.c.b16 %v3549, %v3549
        %v3648 = vpack.c.b16 %v3550, %v3550
        %v3649 = vpack.c.b16 %v3551, %v3551
        %v3742 = vsel %vm1850, %v3253, 0
        %v3745 = vsel %vm1854, %v3643, 0
        %v3748 = vsel %vm1854, %v3644, 0
        %v3751 = vsel %vm1854, %v3645, 0
        %v3754 = vsel %vm1854, %v3646, 0
        %v3757 = vsel %vm1854, %v3647, 0
        %v3760 = vsel %vm1854, %v3648, 0
        %v3763 = vsel %vm1854, %v3649, 0
        %3765 = vmatprep.subr.bf16.mxu0 %v3602
        %3766 = vmatpush1.bf16.msra.mxu0 %v3601
        %3767 = vmatprep.subr.bf16.mxu0 %v3595
        %3768 = vmatpush1.bf16.msra.mxu0 %v3594
        %3769 = vmatprep.subr.bf16.mxu0 %v3588
        %3770 = vmatpush1.bf16.msra.mxu0 %v3587
        %3771 = vmatprep.subr.bf16.mxu0 %v3581
        %3772 = vmatpush1.bf16.msra.mxu0 %v3580
        %3773 = vmatprep.subr.bf16.mxu0 %v3574
        %3774 = vmatpush1.bf16.msra.mxu0 %v3573
        %3775 = vmatprep.subr.bf16.mxu0 %v3567
        %3776 = vmatpush1.bf16.msra.mxu0 %v3566
        %3777 = vmatprep.subr.bf16.mxu0 %v3560
        %3778 = vmatpush1.bf16.msra.mxu0 %v3559
        %3779 = vmatprep.subr.bf16.mxu0 %v3553
        %3780 = vmatpush1.bf16.msra.mxu0 %v3552
        %3781 = vmatprep.subr.bf16.mxu0 0
        %3782 = vmatpush2.bf16.msra.mxu0 0
        %3783 = vmatprep.subr.bf16.mxu0 0
        %3784 = vmatpush2.bf16.msra.mxu0 0
        %3785 = vmatprep.subr.bf16.mxu0 %v3748
        %3786 = vmatpush2.bf16.msra.mxu0 %v3745
        %3787 = vmatprep.subr.bf16.mxu0 %v3637
        %3788 = vmatpush2.bf16.msra.mxu0 %v3636
        %3789 = vmatprep.subr.bf16.mxu0 %v3630
        %3790 = vmatpush2.bf16.msra.mxu0 %v3629
        %3791 = vmatprep.subr.bf16.mxu0 %v3623
        %3792 = vmatpush2.bf16.msra.mxu0 %v3622
        %3793 = vmatprep.subr.bf16.mxu0 %v3616
        %3794 = vmatpush2.bf16.msra.mxu0 %v3615
        %3795 = vmatprep.subr.bf16.mxu0 %v3609
        %3796 = vmatpush2.bf16.msra.mxu0 %v3608
        %3797 = vmatprep.mubr.bf16.mxu0 %v3742
        %3798 = vmatmul.mubr.bf16.gmra.mxu0 %v3252
        %v3799 = vpop.f32.mrf.mxu0
        %v3800 = vadd.f32 0.0, %v3799
        %v3801 = vpop.f32.mrf.mxu0
        %v3802 = vadd.f32 0.0, %v3801
        %v3803 = vpop.f32.mrf.mxu0
        %v3804 = vpop.f32.mrf.mxu0
        %3805 = vdwg.mxu0
        %3806 = vmatprep.subr.bf16.mxu0 %v3604
        %3807 = vmatpush1.bf16.msra.mxu0 %v3603
        %3808 = vmatprep.subr.bf16.mxu0 %v3597
        %3809 = vmatpush1.bf16.msra.mxu0 %v3596
        %3810 = vmatprep.subr.bf16.mxu0 %v3590
        %3811 = vmatpush1.bf16.msra.mxu0 %v3589
        %3812 = vmatprep.subr.bf16.mxu0 %v3583
        %3813 = vmatpush1.bf16.msra.mxu0 %v3582
        %3814 = vmatprep.subr.bf16.mxu0 %v3576
        %3815 = vmatpush1.bf16.msra.mxu0 %v3575
        %3816 = vmatprep.subr.bf16.mxu0 %v3569
        %3817 = vmatpush1.bf16.msra.mxu0 %v3568
        %3818 = vmatprep.subr.bf16.mxu0 %v3562
        %3819 = vmatpush1.bf16.msra.mxu0 %v3561
        %3820 = vmatprep.subr.bf16.mxu0 %v3555
        %3821 = vmatpush1.bf16.msra.mxu0 %v3554
        %3822 = vmatprep.subr.bf16.mxu0 0
        %3823 = vmatpush2.bf16.msra.mxu0 0
        %3824 = vmatprep.subr.bf16.mxu0 0
        %3825 = vmatpush2.bf16.msra.mxu0 0
        %3826 = vmatprep.subr.bf16.mxu0 %v3754
        %3827 = vmatpush2.bf16.msra.mxu0 %v3751
        %3828 = vmatprep.subr.bf16.mxu0 %v3639
        %3829 = vmatpush2.bf16.msra.mxu0 %v3638
        %3830 = vmatprep.subr.bf16.mxu0 %v3632
        %3831 = vmatpush2.bf16.msra.mxu0 %v3631
        %3832 = vmatprep.subr.bf16.mxu0 %v3625
        %3833 = vmatpush2.bf16.msra.mxu0 %v3624
        %3834 = vmatprep.subr.bf16.mxu0 %v3618
        %3835 = vmatpush2.bf16.msra.mxu0 %v3617
        %3836 = vmatprep.subr.bf16.mxu0 %v3611
        %3837 = vmatpush2.bf16.msra.mxu0 %v3610
        %3838 = vmatprep.mubr.bf16.mxu0 %v3742
        %3839 = vmatmul.mubr.bf16.gmra.mxu0 %v3252
        %v3840 = vpop.f32.mrf.mxu0
        %v3841 = vadd.f32 0.0, %v3840
        %v3842 = vpop.f32.mrf.mxu0
        %v3843 = vadd.f32 0.0, %v3842
        %v3844 = vpop.f32.mrf.mxu0
        %v3845 = vpop.f32.mrf.mxu0
        %3846 = vdwg.mxu0
        %3847 = vmatprep.subr.bf16.mxu0 %v3606
        %3848 = vmatpush1.bf16.msra.mxu0 %v3605
        %3849 = vmatprep.subr.bf16.mxu0 %v3599
        %3850 = vmatpush1.bf16.msra.mxu0 %v3598
        %3851 = vmatprep.subr.bf16.mxu0 %v3592
        %3852 = vmatpush1.bf16.msra.mxu0 %v3591
        %3853 = vmatprep.subr.bf16.mxu0 %v3585
        %3854 = vmatpush1.bf16.msra.mxu0 %v3584
        %3855 = vmatprep.subr.bf16.mxu0 %v3578
        %3856 = vmatpush1.bf16.msra.mxu0 %v3577
        %3857 = vmatprep.subr.bf16.mxu0 %v3571
        %3858 = vmatpush1.bf16.msra.mxu0 %v3570
        %3859 = vmatprep.subr.bf16.mxu0 %v3564
        %3860 = vmatpush1.bf16.msra.mxu0 %v3563
        %3861 = vmatprep.subr.bf16.mxu0 %v3557
        %3862 = vmatpush1.bf16.msra.mxu0 %v3556
        %3863 = vmatprep.subr.bf16.mxu0 0
        %3864 = vmatpush2.bf16.msra.mxu0 0
        %3865 = vmatprep.subr.bf16.mxu0 0
        %3866 = vmatpush2.bf16.msra.mxu0 0
        %3867 = vmatprep.subr.bf16.mxu0 %v3760
        %3868 = vmatpush2.bf16.msra.mxu0 %v3757
        %3869 = vmatprep.subr.bf16.mxu0 %v3641
        %3870 = vmatpush2.bf16.msra.mxu0 %v3640
        %3871 = vmatprep.subr.bf16.mxu0 %v3634
        %3872 = vmatpush2.bf16.msra.mxu0 %v3633
        %3873 = vmatprep.subr.bf16.mxu0 %v3627
        %3874 = vmatpush2.bf16.msra.mxu0 %v3626
        %3875 = vmatprep.subr.bf16.mxu0 %v3620
        %3876 = vmatpush2.bf16.msra.mxu0 %v3619
        %3877 = vmatprep.subr.bf16.mxu0 %v3613
        %3878 = vmatpush2.bf16.msra.mxu0 %v3612
        %3879 = vmatprep.mubr.bf16.mxu0 %v3742
        %3880 = vmatmul.mubr.bf16.gmra.mxu0 %v3252
        %v3881 = vpop.f32.mrf.mxu0
        %v3882 = vadd.f32 0.0, %v3881
        %v3883 = vpop.f32.mrf.mxu0
        %v3884 = vadd.f32 0.0, %v3883
        %v3885 = vpop.f32.mrf.mxu0
        %v3886 = vpop.f32.mrf.mxu0
        %3887 = vdwg.mxu0
        %3888 = vmatprep.subr.bf16.mxu0 0
        %3889 = vmatpush1.bf16.msra.mxu0 %v3607
        %3890 = vmatprep.subr.bf16.mxu0 0
        %3891 = vmatpush1.bf16.msra.mxu0 %v3600
        %3892 = vmatprep.subr.bf16.mxu0 0
        %3893 = vmatpush1.bf16.msra.mxu0 %v3593
        %3894 = vmatprep.subr.bf16.mxu0 0
        %3895 = vmatpush1.bf16.msra.mxu0 %v3586
        %3896 = vmatprep.subr.bf16.mxu0 0
        %3897 = vmatpush1.bf16.msra.mxu0 %v3579
        %3898 = vmatprep.subr.bf16.mxu0 0
        %3899 = vmatpush1.bf16.msra.mxu0 %v3572
        %3900 = vmatprep.subr.bf16.mxu0 0
        %3901 = vmatpush1.bf16.msra.mxu0 %v3565
        %3902 = vmatprep.subr.bf16.mxu0 0
        %3903 = vmatpush1.bf16.msra.mxu0 %v3558
        %3904 = vmatprep.subr.bf16.mxu0 0
        %3905 = vmatpush2.bf16.msra.mxu0 0
        %3906 = vmatprep.subr.bf16.mxu0 0
        %3907 = vmatpush2.bf16.msra.mxu0 0
        %3908 = vmatprep.subr.bf16.mxu0 0
        %3909 = vmatpush2.bf16.msra.mxu0 %v3763
        %3910 = vmatprep.subr.bf16.mxu0 0
        %3911 = vmatpush2.bf16.msra.mxu0 %v3642
        %3912 = vmatprep.subr.bf16.mxu0 0
        %3913 = vmatpush2.bf16.msra.mxu0 %v3635
        %3914 = vmatprep.subr.bf16.mxu0 0
        %3915 = vmatpush2.bf16.msra.mxu0 %v3628
        %3916 = vmatprep.subr.bf16.mxu0 0
        %3917 = vmatpush2.bf16.msra.mxu0 %v3621
        %3918 = vmatprep.subr.bf16.mxu0 0
        %3919 = vmatpush2.bf16.msra.mxu0 %v3614
        %3920 = vmatprep.mubr.bf16.mxu0 %v3742
        %3921 = vmatmul.mubr.bf16.gmra.mxu0 %v3252
        %v3922 = vpop.f32.mrf.mxu0
        %v3923 = vadd.f32 0.0, %v3922
        %v3924 = vpop.f32.mrf.mxu0
        %v3925 = vpop.f32.mrf.mxu0
        %v3926 = vpop.f32.mrf.mxu0
        %3927 = vdwg.mxu0
        %s3928 = sld [smem:[#allocation4 + $0x1]]
        %v3929 = vmul.f32 %v3800, %v2044
        %v3930 = vmul.f32 %v3802, %v2048
        %v3931 = vmul.f32 %v3841, %v2052
        %v3932 = vmul.f32 %v3843, %v2056
        %v3933 = vmul.f32 %v3882, %v2060
        %v3934 = vmul.f32 %v3884, %v2064
        %v3935 = vmul.f32 %v3923, %v2068
        %v3936 = vadd.f32 %v3929, %v3930
        %v3937 = vadd.f32 %v3936, %v3931
        %v3938 = vadd.f32 %v3937, %v3932
        %v3939 = vadd.f32 %v3938, %v3933
        %v3940 = vadd.f32 %v3939, %v3934
        %v3941 = vadd.f32 %v3940, %v3935
        %3942 = vadd.xlane.f32.xlu0 %v3941
        %v3943 = vpop.xlane.xlu0 %3942
        %v3944 = vmul.f32 %v3943, 0.001953125
        %v3945 = vsub.f32 %v3800, %v3944
        %v3946 = vsub.f32 %v3802, %v3944
        %v3947 = vsub.f32 %v3841, %v3944
        %v3948 = vsub.f32 %v3843, %v3944
        %v3949 = vsub.f32 %v3882, %v3944
        %v3950 = vsub.f32 %v3884, %v3944
        %v3951 = vsub.f32 %v3923, %v3944
        %v3952 = vmul.f32 %v3945, %v3945
        %v3953 = vmul.f32 %v3946, %v3946
        %v3954 = vmul.f32 %v3947, %v3947
        %v3955 = vmul.f32 %v3948, %v3948
        %v3956 = vmul.f32 %v3949, %v3949
        %v3957 = vmul.f32 %v3950, %v3950
        %v3958 = vmul.f32 %v3951, %v3951
        %v3959 = vmul.f32 %v3952, %v2044
        %v3960 = vmul.f32 %v3953, %v2048
        %v3961 = vmul.f32 %v3954, %v2052
        %v3962 = vmul.f32 %v3955, %v2056
        %v3963 = vmul.f32 %v3956, %v2060
        %v3964 = vmul.f32 %v3957, %v2064
        %v3965 = vmul.f32 %v3958, %v2068
        %v3966 = vadd.f32 %v3959, %v3960
        %v3967 = vadd.f32 %v3966, %v3961
        %v3968 = vadd.f32 %v3967, %v3962
        %v3969 = vadd.f32 %v3968, %v3963
        %v3970 = vadd.f32 %v3969, %v3964
        %v3971 = vadd.f32 %v3970, %v3965
        %3972 = vadd.xlane.f32.xlu0 %v3971
        %v3973 = vpop.xlane.xlu0 %3972
        %v3974 = vmul.f32 %v3973, 0.001953125
        %v3975 = vadd.f32 %v3974, 1e-05
        %v3976 = vrsqrt.pop %v3975
        %v3977 = vmul.f32 %v3945, %v3976
        %v3978 = vmul.f32 %v3946, %v3976
        %v3979 = vmul.f32 %v3947, %v3976
        %v3980 = vmul.f32 %v3948, %v3976
        %v3981 = vmul.f32 %v3949, %v3976
        %v3982 = vmul.f32 %v3950, %v3976
        %v3983 = vmul.f32 %v3951, %v3976
        %vm3984 = vcmp.gt.f32.partialorder %v3977, 0.0
        %vm3985 = vcmp.gt.f32.partialorder %v3978, 0.0
        %vm3986 = vcmp.gt.f32.partialorder %v3979, 0.0
        %vm3987 = vcmp.gt.f32.partialorder %v3980, 0.0
        %vm3988 = vcmp.gt.f32.partialorder %v3981, 0.0
        %vm3989 = vcmp.gt.f32.partialorder %v3982, 0.0
        %vm3990 = vcmp.gt.f32.partialorder %v3983, 0.0
        %v3991 = vstv %s3928
        %v3992 = vmul.f32 %v3991, %v3977
        %v3993 = vmul.f32 %v3991, %v3978
        %v3994 = vmul.f32 %v3991, %v3979
        %v3995 = vmul.f32 %v3991, %v3980
        %v3996 = vmul.f32 %v3991, %v3981
        %v3997 = vmul.f32 %v3991, %v3982
        %v3998 = vmul.f32 %v3991, %v3983
        %v3999 = vsel %vm3984, %v3977, %v3992
        %v4000 = vsel %vm3985, %v3978, %v3993
        %v4001 = vsel %vm3986, %v3979, %v3994
        %v4002 = vsel %vm3987, %v3980, %v3995
        %v4003 = vsel %vm3988, %v3981, %v3996
        %v4004 = vsel %vm3989, %v3982, %v3997
        %v4005 = vsel %vm3990, %v3983, %v3998
        %4006 = vst [vmem:[%s292] sm:$0xff] %v3999
        %4007 = vst [vmem:[%s292 + $0x8] sm:$0xff] %v4000
        %4008 = vst [vmem:[%s292 + $0x10] sm:$0xff] %v4001
        %4009 = vst [vmem:[%s292 + $0x18] sm:$0xff] %v4002
        %4010 = vst [vmem:[%s292 + $0x20] sm:$0xff] %v4003
        %4011 = vst [vmem:[%s292 + $0x28] sm:$0xff] %v4004
        %4012 = vst [vmem:[%s292 + $0x30] sm:$0xff] %v4005
        %p4013 = scmp.lt.s32.totalorder %s19, 1
        %s4014 = scalar_select %p4013, %s19, 1
        %s4015 = smul.addr %s4014, 7
        %s4016 = smul.addr %s4015, 8
        %s4017 = scalar_lea.vmem %s7, %s4016
        // Predicated region
        $region53: #{conv_block.1} parent=47 // pred_check
          %p4018 = pneg %p189
        $region54: #{conv_block.1} parent=47 // pred_check_branch
          %4020 = sbr.rel (%p4018) target = $region56
        $region55: #{conv_block.1} parent=47 // pred_region
          _
        $region56: #{conv_block.1} parent=47 // pred_fallthru
          _
      $region48: #{conv_block.1} parent=5 // pred_fallthru
        _
      %p4021 = scmp.le.s32.totalorder 2, %s14
      // Predicated region
      $region57: #{conv_block.1} parent=5 // pred_check
        %p4022 = pneg %p4021
      $region58: #{conv_block.1} parent=5 // pred_check_branch
        %4024 = sbr.rel (%p4022) target = $region60
      $region59: #{conv_block.1} parent=5 // pred_region
        %s4025 = ssub.s32 %s14, 2
        // Predicated region
        $region61: #{conv_block.1} parent=59 // pred_check
          %p4026 = pneg %p195
        $region62: #{conv_block.1} parent=59 // pred_check_branch
          %4028 = sbr.rel (%p4026) target = $region64
        $region63: #{conv_block.1} parent=59 // pred_region
          %p4029 = scmp.lt.s32.totalorder %s20, 1
          %s4030 = scalar_select %p4029, %s20, 1
          %s4031 = smul.addr %s4030, 7
          %s4032 = smul.addr %s4031, 8
          %s4033 = scalar_lea.vmem %s7, %s4032
        $region64: #{conv_block.1} parent=59 // pred_fallthru
          _
      $region60: #{conv_block.1} parent=5 // pred_fallthru
        _
    $region6: #{conv_block.1} parent=1 // loop_footer
      %s18 = sadd.s32 1, %s14
    $region7: #{conv_block.1} parent=1 // loop_footer_branch
      %13 = sbr.rel target = $region3
    $region8: #{conv_block.1} parent=1 // loop_exit
      _
    %4034 = vsyncpa [#allocation5], 1
    %s4035 = scalar_lea.sflag [#allocation5], 1
    %4036 = vsyncpa %s4035, 1

</llo_original>
